<compile_context>
chip_gen: v7x
topology: tpu7x:2x2x1
jax: 0.10.0
libtpu: 0.0.40
codegen_flags: <defaults>
</compile_context>

<pallas_src>
import functools

import jax
import jax.numpy as jnp
from jax.experimental import pallas as pl
from jax.experimental.pallas import tpu as pltpu

# Deterministic stand-in for `(random.random() > 0.5) * 2 - 1` in __init__.
# TODO(synk): the original module samples +1/-1 at init; both values are
# implemented (and verified in __main__), the default is pinned to +1.
SHIFT_DIRECTION = 1

_W_OUT = 28           # o axis (output along x's W dim)
_H = 28               # n axis (x's H dim)
_C_IN = 128           # j (input channels)
_C_OUT = 128          # i (output channels)
_TAPS = 3             # k (unfold taps)
_L = 2                # l
_M = _W_OUT * _H      # 784 matmul rows


# ----------------------------- Pallas kernel --------------------------------
def _fused_kernel(xp_ref, w_ref, o_ref, *, shift):
    """xp_ref: (840, 128) padded+flattened x; w_ref: (3, 128, 256); o_ref: (784, 128)."""
    # acc[o*28 + n, l*128 + i] = t_3[0, i, o, l, n]
    # Row identity used for the taps: (o + k)*28 + n == k*28 + (o*28 + n),
    # so tap k is just a 784-row slice of xp starting at row k*28.
    acc = jnp.dot(xp_ref[pl.ds(0, _M), :], w_ref[0],
                  preferred_element_type=jnp.float32)
    for k in range(1, _TAPS):
        acc = acc + jnp.dot(xp_ref[pl.ds(k * _H, _M), :], w_ref[k],
                            preferred_element_type=jnp.float32)

    t0 = acc[:, 0:_C_OUT]            # l = 0 columns
    t1 = acc[:, _C_OUT:2 * _C_OUT]   # l = 1 columns

    # torch epilogue: reshape (o,l)->56, roll by `shift`, reshape back, sum over l.
    #  shift=+1: out[o] = t3[..,o,0,..] + t3[..,(o-1)%28,1,..] -> t0 + roll(t1, +28 rows)
    #  shift=-1: out[o] = t3[..,o,1,..] + t3[..,(o+1)%28,0,..] -> t1 + roll(t0, -28 rows)
    if shift == 1:
        o_ref[...] = t0 + jnp.concatenate([t1[-_H:], t1[:-_H]], axis=0)
    elif shift == -1:
        o_ref[...] = t1 + jnp.concatenate([t0[_H:], t0[:_H]], axis=0)
    else:
        raise NotImplementedError("shift_direction must be +1 or -1")


def _fused_pallas(xp_flat, w_mat, shift):
    kernel = functools.partial(_fused_kernel, shift=shift)
    return pl.pallas_call(
        kernel,
        out_shape=jax.ShapeDtypeStruct((_M, _C_OUT), jnp.float32),
        grid=(1,),  # single step: problem is tiny, step overhead dominated before
        in_specs=[
            pl.BlockSpec(xp_flat.shape, lambda i: (0, 0)),
            pl.BlockSpec(w_mat.shape, lambda i: (0, 0, 0)),
        ],
        out_specs=pl.BlockSpec((_M, _C_OUT), lambda i: (0, 0)),
        compiler_params=pltpu.CompilerParams(
            dimension_semantics=("arbitrary",)),
    )(xp_flat, w_mat)


# ------------------------------ forward pass ---------------------------------
@functools.partial(jax.jit, static_argnames=("shift",))
def kernel_generated_2_forward(x, W, shift=SHIFT_DIRECTION):
    """x: (1, 128, 28, 28) f32 NCHW;  W: (128, 3, 2, 128) f32."""
    # --- prologue (layout only; fused by XLA under this jit) ---
    # xt[w, n, j] = x[0, j, n, w]; zero-pad w by 1 each side; flatten (w, n).
    xt = jnp.transpose(x[0], (2, 1, 0))                      # (28, 28, 128)
    xp = jnp.pad(xt, ((1, 1), (0, 0), (0, 0)))               # (30, 28, 128)
    xp_flat = xp.reshape((_W_OUT + _TAPS - 1) * _H, _C_IN)   # (840, 128)
    # w_mat[k, j, l*128 + i] = W[i, k, l, j]
    w_mat = jnp.transpose(W, (1, 3, 2, 0)).reshape(_TAPS, _C_IN, _L * _C_OUT)

    # --- fused unfold-matmul + rolled l-sum: one MXU kernel invocation ---
    out_rows = _fused_pallas(xp_flat, w_mat, shift)          # (784, 128): [(o,n), i]

    # --- epilogue: roll along n, restore NCHW (1, 128, 28, 28) ---
    y = out_rows.reshape(_W_OUT, _H, _C_OUT)                 # (o, n, i)
    y = jnp.roll(y, shift, axis=1)                           # roll n by shift
    return jnp.transpose(y, (2, 0, 1))[None]                 # (1, 128, 28, 28)


# --------------------- pure-JAX reference (torch semantics) ------------------
def reference_forward(x, W, shift=SHIFT_DIRECTION):
    t_2 = jnp.einsum('ijkl->iljk', x)                        # (1, 28, 128, 28)
    t_2 = t_2.reshape(1, 1, 28, 3584)
    # torch.nn.functional.unfold(t_2, (3, 1), padding=(1, 0))
    t_2p = jnp.pad(t_2, ((0, 0), (0, 0), (1, 1), (0, 0)))
    t_2u = jnp.stack([t_2p[0, 0, k:k + 28, :] for k in range(3)], axis=0)
    t_2u = t_2u.reshape(1, 3, 28, 128, 28)
    t_3 = jnp.einsum('mkojn,iklj->mioln', t_2u, W, precision='highest')
    t_4 = t_3.reshape(1, 128, 56, 28)
    t_4 = jnp.roll(t_4, shift, axis=2)
    t_4 = t_4.reshape(1, 128, 28, 2, 28)
    t_4 = jnp.sum(t_4, axis=3)
    return jnp.roll(t_4, shift, axis=3)


if __name__ == "__main__":
    key = jax.random.PRNGKey(0)
    kx, kw = jax.random.split(key)
    # Shapes are fixed by the module's hard-coded reshapes.
    x = jax.random.normal(kx, (1, 128, 28, 28), dtype=jnp.float32)
    W = jax.random.normal(kw, (128, 3, 2, 128), dtype=jnp.float32)  # torch.randn([128,3,2,128])

    y = kernel_generated_2_forward(x, W, shift=SHIFT_DIRECTION)
    y = jax.block_until_ready(y)
    assert y.shape == (1, 128, 28, 28), y.shape

    # Verify both possible values of the module's random shift_direction.
    for s in (1, -1):
        ys = jax.block_until_ready(kernel_generated_2_forward(x, W, shift=s))
        yr = reference_forward(x, W, shift=s)
        err = float(jnp.max(jnp.abs(ys - yr)))
        assert jnp.allclose(ys, yr, atol=1e-2, rtol=1e-3), (s, err)

    print("KERNEL_OK")
</pallas_src>

<mosaic_0001>
module attributes {stable_mosaic.version = 11 : i64} {
  func.func @_fused_kernel(%arg0: i32, %arg1: memref<840x128xf32, #tpu.memory_space<vmem>>, %arg2: memref<3x128x256xf32, #tpu.memory_space<vmem>>, %arg3: memref<784x128xf32, #tpu.memory_space<vmem>>) attributes {dimension_semantics = [#tpu.dimension_semantics<arbitrary>], iteration_bounds = array<i64: 1>, scalar_prefetch = 0 : i64, scratch_operands = 0 : i64, tpu.core_type = #tpu.core_type<tc>, window_params = [{pipeline_mode = #tpu.pipeline_mode<synchronous>, transform_indices = @transform_0, window_bounds = array<i64: 840, 128>}, {pipeline_mode = #tpu.pipeline_mode<synchronous>, transform_indices = @transform_1, window_bounds = array<i64: 3, 128, 256>}, {pipeline_mode = #tpu.pipeline_mode<synchronous>, transform_indices = @transform_2, window_bounds = array<i64: 784, 128>}]} {
    %c0 = arith.constant 0 : index
    %c0_0 = arith.constant 0 : index
    %0 = vector.load %arg1[%c0, %c0_0] : memref<840x128xf32, #tpu.memory_space<vmem>>, vector<784x128xf32>
    %c0_1 = arith.constant 0 : index
    %c0_2 = arith.constant 0 : index
    %c0_3 = arith.constant 0 : index
    %1 = vector.load %arg2[%c0_1, %c0_2, %c0_3] : memref<3x128x256xf32, #tpu.memory_space<vmem>>, vector<1x128x256xf32>
    %2 = vector.shape_cast %1 : vector<1x128x256xf32> to vector<128x256xf32>
    %cst = arith.constant dense<0.000000e+00> : vector<784x256xf32>
    %3 = tpu.matmul %0, %2, %cst {dimension_numbers = #tpu.dot_dimension_numbers<[1], [0], [0], [1], [0, 0, 1, 1], [], []>} : vector<784x128xf32>, vector<128x256xf32>, vector<784x256xf32> -> vector<784x256xf32>
    %c28 = arith.constant 28 : index
    %c0_4 = arith.constant 0 : index
    %4 = vector.load %arg1[%c28, %c0_4] : memref<840x128xf32, #tpu.memory_space<vmem>>, vector<784x128xf32>
    %c1 = arith.constant 1 : index
    %c0_5 = arith.constant 0 : index
    %c0_6 = arith.constant 0 : index
    %5 = vector.load %arg2[%c1, %c0_5, %c0_6] : memref<3x128x256xf32, #tpu.memory_space<vmem>>, vector<1x128x256xf32>
    %6 = vector.shape_cast %5 : vector<1x128x256xf32> to vector<128x256xf32>
    %cst_7 = arith.constant dense<0.000000e+00> : vector<784x256xf32>
    %7 = tpu.matmul %4, %6, %cst_7 {dimension_numbers = #tpu.dot_dimension_numbers<[1], [0], [0], [1], [0, 0, 1, 1], [], []>} : vector<784x128xf32>, vector<128x256xf32>, vector<784x256xf32> -> vector<784x256xf32>
    %8 = arith.addf %3, %7 : vector<784x256xf32>
    %c56 = arith.constant 56 : index
    %c0_8 = arith.constant 0 : index
    %9 = vector.load %arg1[%c56, %c0_8] : memref<840x128xf32, #tpu.memory_space<vmem>>, vector<784x128xf32>
    %c2 = arith.constant 2 : index
    %c0_9 = arith.constant 0 : index
    %c0_10 = arith.constant 0 : index
    %10 = vector.load %arg2[%c2, %c0_9, %c0_10] : memref<3x128x256xf32, #tpu.memory_space<vmem>>, vector<1x128x256xf32>
    %11 = vector.shape_cast %10 : vector<1x128x256xf32> to vector<128x256xf32>
    %cst_11 = arith.constant dense<0.000000e+00> : vector<784x256xf32>
    %12 = tpu.matmul %9, %11, %cst_11 {dimension_numbers = #tpu.dot_dimension_numbers<[1], [0], [0], [1], [0, 0, 1, 1], [], []>} : vector<784x128xf32>, vector<128x256xf32>, vector<784x256xf32> -> vector<784x256xf32>
    %13 = arith.addf %8, %12 : vector<784x256xf32>
    %14 = vector.extract_strided_slice %13 {offsets = [0, 0], sizes = [784, 128], strides = [1, 1]} : vector<784x256xf32> to vector<784x128xf32>
    %15 = vector.extract_strided_slice %13 {offsets = [0, 128], sizes = [784, 128], strides = [1, 1]} : vector<784x256xf32> to vector<784x128xf32>
    %16 = vector.extract_strided_slice %15 {offsets = [756, 0], sizes = [28, 128], strides = [1, 1]} : vector<784x128xf32> to vector<28x128xf32>
    %17 = vector.extract_strided_slice %15 {offsets = [0, 0], sizes = [756, 128], strides = [1, 1]} : vector<784x128xf32> to vector<756x128xf32>
    %18 = tpu.concatenate %16, %17 in 0 : vector<28x128xf32>, vector<756x128xf32> -> vector<784x128xf32>
    %19 = arith.addf %14, %18 : vector<784x128xf32>
    %c0_12 = arith.constant 0 : index
    %c0_13 = arith.constant 0 : index
    %20 = vector.load %arg3[%c0_12, %c0_13] : memref<784x128xf32, #tpu.memory_space<vmem>>, vector<784x128xf32>
    tpu.vector_store %arg3[%c0_12, %c0_13], %19 {strides = array<i32>} : memref<784x128xf32, #tpu.memory_space<vmem>>, vector<784x128xf32>,
    return
  }
  func.func @transform_0(%arg0: i32) -> (i32, i32) {
    %c0_i32 = arith.constant 0 : i32
    %c0_i32_0 = arith.constant 0 : i32
    %c0_i32_1 = arith.constant 0 : i32
    return %c0_i32, %c0_i32_0 : i32, i32
  }
  func.func @transform_1(%arg0: i32) -> (i32, i32, i32) {
    %c0_i32 = arith.constant 0 : i32
    %c0_i32_0 = arith.constant 0 : i32
    %c0_i32_1 = arith.constant 0 : i32
    %c0_i32_2 = arith.constant 0 : i32
    return %c0_i32, %c0_i32_0, %c0_i32_1 : i32, i32, i32
  }
  func.func @transform_2(%arg0: i32) -> (i32, i32) {
    %c0_i32 = arith.constant 0 : i32
    %c0_i32_0 = arith.constant 0 : i32
    %c0_i32_1 = arith.constant 0 : i32
    return %c0_i32, %c0_i32_0 : i32, i32
  }
}

</mosaic_0001>

<llo_original>
// kernel: kernel_generated_2_forward.1
$region0: #{kernel_generated_2_forward.1}
  #allocation0 [shape = 'u32[]', space=smem, size = 0x4, offset = 0x4, fixed_abs, tag = 'smem constant byte address 0x4 - core index']
  #allocation1 [shape = 'u32[144,128]{1,0:T(1,128)}', space=vmem, size = 0x12000, scoped, tag = 'internal scratch']
  %s0 = inlined_call_operand.vmem [shape: f32[840,128], index: 0, kind: input, shape index: {}]
  %s1 = inlined_call_operand.vmem [shape: f32[3,128,256], index: 1, kind: input, shape index: {}]
  %s2 = inlined_call_operand.vmem [shape: f32[784,128], index: 2, kind: output, shape index: {}]
  %s3 = sld [smem:[#allocation0]]
  $region18: #{kernel_generated_2_forward.1} parent=0
    _
  %s5 = ssub.s32 1, %s3
  %s6 = scalar_select 0, %s5, %s3
  // Predicated region
  $region2: #{kernel_generated_2_forward.1} parent=0 // pred_check
    _
  $region3: #{kernel_generated_2_forward.1} parent=0 // pred_check_branch
    %8 = sbr.rel (0) target = $region5
  $region4: #{kernel_generated_2_forward.1} parent=0 // pred_region
    _
  $region5: #{kernel_generated_2_forward.1} parent=0 // pred_fallthru
    _
  // Predicated region
  $region6: #{kernel_generated_2_forward.1} parent=0 // pred_check
    _
  $region7: #{kernel_generated_2_forward.1} parent=0 // pred_check_branch
    %10 = sbr.rel (0) target = $region9
  $region8: #{kernel_generated_2_forward.1} parent=0 // pred_region
    _
  $region9: #{kernel_generated_2_forward.1} parent=0 // pred_fallthru
    _
  %v11 = vld [vmem:[%s0] sm:$0xff]
  %v12 = vld [vmem:[%s0 + $0x8] sm:$0xff]
  %v13 = vld [vmem:[%s0 + $0x10] sm:$0xff]
  %v14 = vld [vmem:[%s0 + $0x18] sm:$0xff]
  %v15 = vld [vmem:[%s0 + $0x20] sm:$0xff]
  %v16 = vld [vmem:[%s0 + $0x28] sm:$0xff]
  %v17 = vld [vmem:[%s0 + $0x30] sm:$0xff]
  %v18 = vld [vmem:[%s0 + $0x38] sm:$0xff]
  %v19 = vld [vmem:[%s0 + $0x40] sm:$0xff]
  %v20 = vld [vmem:[%s0 + $0x48] sm:$0xff]
  %v21 = vld [vmem:[%s0 + $0x50] sm:$0xff]
  %v22 = vld [vmem:[%s0 + $0x58] sm:$0xff]
  %v23 = vld [vmem:[%s0 + $0x60] sm:$0xff]
  %v24 = vld [vmem:[%s0 + $0x68] sm:$0xff]
  %v25 = vld [vmem:[%s0 + $0x70] sm:$0xff]
  %v26 = vld [vmem:[%s0 + $0x78] sm:$0xff]
  %v27 = vld [vmem:[%s0 + $0x80] sm:$0xff]
  %v28 = vld [vmem:[%s0 + $0x88] sm:$0xff]
  %v29 = vld [vmem:[%s0 + $0x90] sm:$0xff]
  %v30 = vld [vmem:[%s0 + $0x98] sm:$0xff]
  %v31 = vld [vmem:[%s0 + $0xa0] sm:$0xff]
  %v32 = vld [vmem:[%s0 + $0xa8] sm:$0xff]
  %v33 = vld [vmem:[%s0 + $0xb0] sm:$0xff]
  %v34 = vld [vmem:[%s0 + $0xb8] sm:$0xff]
  %v35 = vld [vmem:[%s0 + $0xc0] sm:$0xff]
  %v36 = vld [vmem:[%s0 + $0xc8] sm:$0xff]
  %v37 = vld [vmem:[%s0 + $0xd0] sm:$0xff]
  %v38 = vld [vmem:[%s0 + $0xd8] sm:$0xff]
  %v39 = vld [vmem:[%s0 + $0xe0] sm:$0xff]
  %v40 = vld [vmem:[%s0 + $0xe8] sm:$0xff]
  %v41 = vld [vmem:[%s0 + $0xf0] sm:$0xff]
  %v42 = vld [vmem:[%s0 + $0xf8] sm:$0xff]
  %v43 = vld [vmem:[%s0 + $0x100] sm:$0xff]
  %v44 = vld [vmem:[%s0 + $0x108] sm:$0xff]
  %v45 = vld [vmem:[%s0 + $0x110] sm:$0xff]
  %v46 = vld [vmem:[%s0 + $0x118] sm:$0xff]
  %v47 = vld [vmem:[%s0 + $0x120] sm:$0xff]
  %v48 = vld [vmem:[%s0 + $0x128] sm:$0xff]
  %v49 = vld [vmem:[%s0 + $0x130] sm:$0xff]
  %v50 = vld [vmem:[%s0 + $0x138] sm:$0xff]
  %v51 = vld [vmem:[%s0 + $0x140] sm:$0xff]
  %v52 = vld [vmem:[%s0 + $0x148] sm:$0xff]
  %v53 = vld [vmem:[%s0 + $0x150] sm:$0xff]
  %v54 = vld [vmem:[%s0 + $0x158] sm:$0xff]
  %v55 = vld [vmem:[%s0 + $0x160] sm:$0xff]
  %v56 = vld [vmem:[%s0 + $0x168] sm:$0xff]
  %v57 = vld [vmem:[%s0 + $0x170] sm:$0xff]
  %v58 = vld [vmem:[%s0 + $0x178] sm:$0xff]
  %v59 = vld [vmem:[%s0 + $0x180] sm:$0xff]
  %v60 = vld [vmem:[%s0 + $0x188] sm:$0xff]
  %v61 = vld [vmem:[%s0 + $0x190] sm:$0xff]
  %v62 = vld [vmem:[%s0 + $0x198] sm:$0xff]
  %v63 = vld [vmem:[%s0 + $0x1a0] sm:$0xff]
  %v64 = vld [vmem:[%s0 + $0x1a8] sm:$0xff]
  %v65 = vld [vmem:[%s0 + $0x1b0] sm:$0xff]
  %v66 = vld [vmem:[%s0 + $0x1b8] sm:$0xff]
  %v67 = vld [vmem:[%s0 + $0x1c0] sm:$0xff]
  %v68 = vld [vmem:[%s0 + $0x1c8] sm:$0xff]
  %v69 = vld [vmem:[%s0 + $0x1d0] sm:$0xff]
  %v70 = vld [vmem:[%s0 + $0x1d8] sm:$0xff]
  %v71 = vld [vmem:[%s0 + $0x1e0] sm:$0xff]
  %v72 = vld [vmem:[%s0 + $0x1e8] sm:$0xff]
  %v73 = vld [vmem:[%s0 + $0x1f0] sm:$0xff]
  %v74 = vld [vmem:[%s0 + $0x1f8] sm:$0xff]
  %v75 = vld [vmem:[%s0 + $0x200] sm:$0xff]
  %v76 = vld [vmem:[%s0 + $0x208] sm:$0xff]
  %v77 = vld [vmem:[%s0 + $0x210] sm:$0xff]
  %v78 = vld [vmem:[%s0 + $0x218] sm:$0xff]
  %v79 = vld [vmem:[%s0 + $0x220] sm:$0xff]
  %v80 = vld [vmem:[%s0 + $0x228] sm:$0xff]
  %v81 = vld [vmem:[%s0 + $0x230] sm:$0xff]
  %v82 = vld [vmem:[%s0 + $0x238] sm:$0xff]
  %v83 = vld [vmem:[%s0 + $0x240] sm:$0xff]
  %v84 = vld [vmem:[%s0 + $0x248] sm:$0xff]
  %v85 = vld [vmem:[%s0 + $0x250] sm:$0xff]
  %v86 = vld [vmem:[%s0 + $0x258] sm:$0xff]
  %v87 = vld [vmem:[%s0 + $0x260] sm:$0xff]
  %v88 = vld [vmem:[%s0 + $0x268] sm:$0xff]
  %v89 = vld [vmem:[%s0 + $0x270] sm:$0xff]
  %v90 = vld [vmem:[%s0 + $0x278] sm:$0xff]
  %v91 = vld [vmem:[%s0 + $0x280] sm:$0xff]
  %v92 = vld [vmem:[%s0 + $0x288] sm:$0xff]
  %v93 = vld [vmem:[%s0 + $0x290] sm:$0xff]
  %v94 = vld [vmem:[%s0 + $0x298] sm:$0xff]
  %v95 = vld [vmem:[%s0 + $0x2a0] sm:$0xff]
  %v96 = vld [vmem:[%s0 + $0x2a8] sm:$0xff]
  %v97 = vld [vmem:[%s0 + $0x2b0] sm:$0xff]
  %v98 = vld [vmem:[%s0 + $0x2b8] sm:$0xff]
  %v99 = vld [vmem:[%s0 + $0x2c0] sm:$0xff]
  %v100 = vld [vmem:[%s0 + $0x2c8] sm:$0xff]
  %v101 = vld [vmem:[%s0 + $0x2d0] sm:$0xff]
  %v102 = vld [vmem:[%s0 + $0x2d8] sm:$0xff]
  %v103 = vld [vmem:[%s0 + $0x2e0] sm:$0xff]
  %v104 = vld [vmem:[%s0 + $0x2e8] sm:$0xff]
  %v105 = vld [vmem:[%s0 + $0x2f0] sm:$0xff]
  %v106 = vld [vmem:[%s0 + $0x2f8] sm:$0xff]
  %v107 = vld [vmem:[%s0 + $0x300] sm:$0xff]
  %v108 = vld [vmem:[%s0 + $0x308] sm:$0xff]
  %v109 = vld [vmem:[%s1] sm:$0xff]
  %v110 = vld [vmem:[%s1 + $0x8] sm:$0xff]
  %v111 = vld [vmem:[%s1 + $0x10] sm:$0xff]
  %v112 = vld [vmem:[%s1 + $0x18] sm:$0xff]
  %v113 = vld [vmem:[%s1 + $0x20] sm:$0xff]
  %v114 = vld [vmem:[%s1 + $0x28] sm:$0xff]
  %v115 = vld [vmem:[%s1 + $0x30] sm:$0xff]
  %v116 = vld [vmem:[%s1 + $0x38] sm:$0xff]
  %v117 = vld [vmem:[%s1 + $0x40] sm:$0xff]
  %v118 = vld [vmem:[%s1 + $0x48] sm:$0xff]
  %v119 = vld [vmem:[%s1 + $0x50] sm:$0xff]
  %v120 = vld [vmem:[%s1 + $0x58] sm:$0xff]
  %v121 = vld [vmem:[%s1 + $0x60] sm:$0xff]
  %v122 = vld [vmem:[%s1 + $0x68] sm:$0xff]
  %v123 = vld [vmem:[%s1 + $0x70] sm:$0xff]
  %v124 = vld [vmem:[%s1 + $0x78] sm:$0xff]
  %v125 = vld [vmem:[%s1 + $0x80] sm:$0xff]
  %v126 = vld [vmem:[%s1 + $0x88] sm:$0xff]
  %v127 = vld [vmem:[%s1 + $0x90] sm:$0xff]
  %v128 = vld [vmem:[%s1 + $0x98] sm:$0xff]
  %v129 = vld [vmem:[%s1 + $0xa0] sm:$0xff]
  %v130 = vld [vmem:[%s1 + $0xa8] sm:$0xff]
  %v131 = vld [vmem:[%s1 + $0xb0] sm:$0xff]
  %v132 = vld [vmem:[%s1 + $0xb8] sm:$0xff]
  %v133 = vld [vmem:[%s1 + $0xc0] sm:$0xff]
  %v134 = vld [vmem:[%s1 + $0xc8] sm:$0xff]
  %v135 = vld [vmem:[%s1 + $0xd0] sm:$0xff]
  %v136 = vld [vmem:[%s1 + $0xd8] sm:$0xff]
  %v137 = vld [vmem:[%s1 + $0xe0] sm:$0xff]
  %v138 = vld [vmem:[%s1 + $0xe8] sm:$0xff]
  %v139 = vld [vmem:[%s1 + $0xf0] sm:$0xff]
  %v140 = vld [vmem:[%s1 + $0xf8] sm:$0xff]
  %v141 = vld [vmem:[%s0 + $0x1c] sm:$0xff]
  %v142 = vld [vmem:[%s0 + $0x24] sm:$0xff]
  %v143 = vld [vmem:[%s0 + $0x2c] sm:$0xff]
  %v144 = vld [vmem:[%s0 + $0x34] sm:$0xff]
  %v145 = vld [vmem:[%s0 + $0x3c] sm:$0xff]
  %v146 = vld [vmem:[%s0 + $0x44] sm:$0xff]
  %v147 = vld [vmem:[%s0 + $0x4c] sm:$0xff]
  %v148 = vld [vmem:[%s0 + $0x54] sm:$0xff]
  %v149 = vld [vmem:[%s0 + $0x5c] sm:$0xff]
  %v150 = vld [vmem:[%s0 + $0x64] sm:$0xff]
  %v151 = vld [vmem:[%s0 + $0x6c] sm:$0xff]
  %v152 = vld [vmem:[%s0 + $0x74] sm:$0xff]
  %v153 = vld [vmem:[%s0 + $0x7c] sm:$0xff]
  %v154 = vld [vmem:[%s0 + $0x84] sm:$0xff]
  %v155 = vld [vmem:[%s0 + $0x8c] sm:$0xff]
  %v156 = vld [vmem:[%s0 + $0x94] sm:$0xff]
  %v157 = vld [vmem:[%s0 + $0x9c] sm:$0xff]
  %v158 = vld [vmem:[%s0 + $0xa4] sm:$0xff]
  %v159 = vld [vmem:[%s0 + $0xac] sm:$0xff]
  %v160 = vld [vmem:[%s0 + $0xb4] sm:$0xff]
  %v161 = vld [vmem:[%s0 + $0xbc] sm:$0xff]
  %v162 = vld [vmem:[%s0 + $0xc4] sm:$0xff]
  %v163 = vld [vmem:[%s0 + $0xcc] sm:$0xff]
  %v164 = vld [vmem:[%s0 + $0xd4] sm:$0xff]
  %v165 = vld [vmem:[%s0 + $0xdc] sm:$0xff]
  %v166 = vld [vmem:[%s0 + $0xe4] sm:$0xff]
  %v167 = vld [vmem:[%s0 + $0xec] sm:$0xff]
  %v168 = vld [vmem:[%s0 + $0xf4] sm:$0xff]
  %v169 = vld [vmem:[%s0 + $0xfc] sm:$0xff]
  %v170 = vld [vmem:[%s0 + $0x104] sm:$0xff]
  %v171 = vld [vmem:[%s0 + $0x10c] sm:$0xff]
  %v172 = vld [vmem:[%s0 + $0x114] sm:$0xff]
  %v173 = vld [vmem:[%s0 + $0x11c] sm:$0xff]
  %v174 = vld [vmem:[%s0 + $0x124] sm:$0xff]
  %v175 = vld [vmem:[%s0 + $0x12c] sm:$0xff]
  %v176 = vld [vmem:[%s0 + $0x134] sm:$0xff]
  %v177 = vld [vmem:[%s0 + $0x13c] sm:$0xff]
  %v178 = vld [vmem:[%s0 + $0x144] sm:$0xff]
  %v179 = vld [vmem:[%s0 + $0x14c] sm:$0xff]
  %v180 = vld [vmem:[%s0 + $0x154] sm:$0xff]
  %v181 = vld [vmem:[%s0 + $0x15c] sm:$0xff]
  %v182 = vld [vmem:[%s0 + $0x164] sm:$0xff]
  %v183 = vld [vmem:[%s0 + $0x16c] sm:$0xff]
  %v184 = vld [vmem:[%s0 + $0x174] sm:$0xff]
  %v185 = vld [vmem:[%s0 + $0x17c] sm:$0xff]
  %v186 = vld [vmem:[%s0 + $0x184] sm:$0xff]
  %v187 = vld [vmem:[%s0 + $0x18c] sm:$0xff]
  %v188 = vld [vmem:[%s0 + $0x194] sm:$0xff]
  %v189 = vld [vmem:[%s0 + $0x19c] sm:$0xff]
  %v190 = vld [vmem:[%s0 + $0x1a4] sm:$0xff]
  %v191 = vld [vmem:[%s0 + $0x1ac] sm:$0xff]
  %v192 = vld [vmem:[%s0 + $0x1b4] sm:$0xff]
  %v193 = vld [vmem:[%s0 + $0x1bc] sm:$0xff]
  %v194 = vld [vmem:[%s0 + $0x1c4] sm:$0xff]
  %v195 = vld [vmem:[%s0 + $0x1cc] sm:$0xff]
  %v196 = vld [vmem:[%s0 + $0x1d4] sm:$0xff]
  %v197 = vld [vmem:[%s0 + $0x1dc] sm:$0xff]
  %v198 = vld [vmem:[%s0 + $0x1e4] sm:$0xff]
  %v199 = vld [vmem:[%s0 + $0x1ec] sm:$0xff]
  %v200 = vld [vmem:[%s0 + $0x1f4] sm:$0xff]
  %v201 = vld [vmem:[%s0 + $0x1fc] sm:$0xff]
  %v202 = vld [vmem:[%s0 + $0x204] sm:$0xff]
  %v203 = vld [vmem:[%s0 + $0x20c] sm:$0xff]
  %v204 = vld [vmem:[%s0 + $0x214] sm:$0xff]
  %v205 = vld [vmem:[%s0 + $0x21c] sm:$0xff]
  %v206 = vld [vmem:[%s0 + $0x224] sm:$0xff]
  %v207 = vld [vmem:[%s0 + $0x22c] sm:$0xff]
  %v208 = vld [vmem:[%s0 + $0x234] sm:$0xff]
  %v209 = vld [vmem:[%s0 + $0x23c] sm:$0xff]
  %v210 = vld [vmem:[%s0 + $0x244] sm:$0xff]
  %v211 = vld [vmem:[%s0 + $0x24c] sm:$0xff]
  %v212 = vld [vmem:[%s0 + $0x254] sm:$0xff]
  %v213 = vld [vmem:[%s0 + $0x25c] sm:$0xff]
  %v214 = vld [vmem:[%s0 + $0x264] sm:$0xff]
  %v215 = vld [vmem:[%s0 + $0x26c] sm:$0xff]
  %v216 = vld [vmem:[%s0 + $0x274] sm:$0xff]
  %v217 = vld [vmem:[%s0 + $0x27c] sm:$0xff]
  %v218 = vld [vmem:[%s0 + $0x284] sm:$0xff]
  %v219 = vld [vmem:[%s0 + $0x28c] sm:$0xff]
  %v220 = vld [vmem:[%s0 + $0x294] sm:$0xff]
  %v221 = vld [vmem:[%s0 + $0x29c] sm:$0xff]
  %v222 = vld [vmem:[%s0 + $0x2a4] sm:$0xff]
  %v223 = vld [vmem:[%s0 + $0x2ac] sm:$0xff]
  %v224 = vld [vmem:[%s0 + $0x2b4] sm:$0xff]
  %v225 = vld [vmem:[%s0 + $0x2bc] sm:$0xff]
  %v226 = vld [vmem:[%s0 + $0x2c4] sm:$0xff]
  %v227 = vld [vmem:[%s0 + $0x2cc] sm:$0xff]
  %v228 = vld [vmem:[%s0 + $0x2d4] sm:$0xff]
  %v229 = vld [vmem:[%s0 + $0x2dc] sm:$0xff]
  %v230 = vld [vmem:[%s0 + $0x2e4] sm:$0xff]
  %v231 = vld [vmem:[%s0 + $0x2ec] sm:$0xff]
  %v232 = vld [vmem:[%s0 + $0x2f4] sm:$0xff]
  %v233 = vld [vmem:[%s0 + $0x2fc] sm:$0xff]
  %v234 = vld [vmem:[%s0 + $0x304] sm:$0xff]
  %v235 = vld [vmem:[%s0 + $0x30c] sm:$0xff]
  %v236 = vld [vmem:[%s0 + $0x314] sm:$0xff]
  %v237 = vld [vmem:[%s0 + $0x31c] sm:$0xff]
  %v238 = vld [vmem:[%s0 + $0x324] sm:$0xff]
  %s239 = scalar_lea.vmem %s1, 256
  %v240 = vld [vmem:[%s239] sm:$0xff]
  %v241 = vld [vmem:[%s239 + $0x8] sm:$0xff]
  %v242 = vld [vmem:[%s239 + $0x10] sm:$0xff]
  %v243 = vld [vmem:[%s239 + $0x18] sm:$0xff]
  %v244 = vld [vmem:[%s239 + $0x20] sm:$0xff]
  %v245 = vld [vmem:[%s239 + $0x28] sm:$0xff]
  %v246 = vld [vmem:[%s239 + $0x30] sm:$0xff]
  %v247 = vld [vmem:[%s239 + $0x38] sm:$0xff]
  %v248 = vld [vmem:[%s239 + $0x40] sm:$0xff]
  %v249 = vld [vmem:[%s239 + $0x48] sm:$0xff]
  %v250 = vld [vmem:[%s239 + $0x50] sm:$0xff]
  %v251 = vld [vmem:[%s239 + $0x58] sm:$0xff]
  %v252 = vld [vmem:[%s239 + $0x60] sm:$0xff]
  %v253 = vld [vmem:[%s239 + $0x68] sm:$0xff]
  %v254 = vld [vmem:[%s239 + $0x70] sm:$0xff]
  %v255 = vld [vmem:[%s239 + $0x78] sm:$0xff]
  %v256 = vld [vmem:[%s239 + $0x80] sm:$0xff]
  %v257 = vld [vmem:[%s239 + $0x88] sm:$0xff]
  %v258 = vld [vmem:[%s239 + $0x90] sm:$0xff]
  %v259 = vld [vmem:[%s239 + $0x98] sm:$0xff]
  %v260 = vld [vmem:[%s239 + $0xa0] sm:$0xff]
  %v261 = vld [vmem:[%s239 + $0xa8] sm:$0xff]
  %v262 = vld [vmem:[%s239 + $0xb0] sm:$0xff]
  %v263 = vld [vmem:[%s239 + $0xb8] sm:$0xff]
  %v264 = vld [vmem:[%s239 + $0xc0] sm:$0xff]
  %v265 = vld [vmem:[%s239 + $0xc8] sm:$0xff]
  %v266 = vld [vmem:[%s239 + $0xd0] sm:$0xff]
  %v267 = vld [vmem:[%s239 + $0xd8] sm:$0xff]
  %v268 = vld [vmem:[%s239 + $0xe0] sm:$0xff]
  %v269 = vld [vmem:[%s239 + $0xe8] sm:$0xff]
  %v270 = vld [vmem:[%s239 + $0xf0] sm:$0xff]
  %v271 = vld [vmem:[%s239 + $0xf8] sm:$0xff]
  %272 = vmatprep.subr.mxu0 %v241
  %273 = vmatpush1.msra.mxu0 %v240
  %274 = vmatprep.subr.mxu0 %v243
  %275 = vmatpush1.msra.mxu0 %v242
  %276 = vmatprep.subr.mxu0 %v245
  %277 = vmatpush1.msra.mxu0 %v244
  %278 = vmatprep.subr.mxu0 %v247
  %279 = vmatpush1.msra.mxu0 %v246
  %280 = vmatprep.subr.mxu0 %v249
  %281 = vmatpush1.msra.mxu0 %v248
  %282 = vmatprep.subr.mxu0 %v251
  %283 = vmatpush1.msra.mxu0 %v250
  %284 = vmatprep.subr.mxu0 %v253
  %285 = vmatpush1.msra.mxu0 %v252
  %286 = vmatprep.subr.mxu0 %v255
  %287 = vmatpush1.msra.mxu0 %v254
  %288 = vmatprep.subr.mxu0 %v257
  %289 = vmatpush1.msra.mxu0 %v256
  %290 = vmatprep.subr.mxu0 %v259
  %291 = vmatpush1.msra.mxu0 %v258
  %292 = vmatprep.subr.mxu0 %v261
  %293 = vmatpush1.msra.mxu0 %v260
  %294 = vmatprep.subr.mxu0 %v263
  %295 = vmatpush1.msra.mxu0 %v262
  %296 = vmatprep.subr.mxu0 %v265
  %297 = vmatpush1.msra.mxu0 %v264
  %298 = vmatprep.subr.mxu0 %v267
  %299 = vmatpush1.msra.mxu0 %v266
  %300 = vmatprep.subr.mxu0 %v269
  %301 = vmatpush1.msra.mxu0 %v268
  %302 = vmatprep.subr.mxu0 %v271
  %303 = vmatpush1.msra.mxu0 %v270
  %304 = vmatprep.subr.mxu0 0.0
  %305 = vmatpush1.msra.mxu0 0.0
  %306 = vmatprep.subr.mxu0 0.0
  %307 = vmatpush1.msra.mxu0 0.0
  %308 = vmatprep.subr.mxu0 0.0
  %309 = vmatpush1.msra.mxu0 0.0
  %310 = vmatprep.subr.mxu0 0.0
  %311 = vmatpush1.msra.mxu0 0.0
  %312 = vmatprep.subr.mxu0 0.0
  %313 = vmatpush1.msra.mxu0 0.0
  %314 = vmatprep.subr.mxu0 0.0
  %315 = vmatpush1.msra.mxu0 0.0
  %316 = vmatprep.subr.mxu0 0.0
  %317 = vmatpush1.msra.mxu0 0.0
  %318 = vmatprep.subr.mxu0 0.0
  %319 = vmatpush1.msra.mxu0 0.0
  %320 = vmatprep.subr.mxu0 0.0
  %321 = vmatpush1.msra.mxu0 0.0
  %322 = vmatprep.subr.mxu0 0.0
  %323 = vmatpush1.msra.mxu0 0.0
  %324 = vmatprep.subr.mxu0 0.0
  %325 = vmatpush1.msra.mxu0 0.0
  %326 = vmatprep.subr.mxu0 0.0
  %327 = vmatpush1.msra.mxu0 0.0
  %328 = vmatprep.subr.mxu0 0.0
  %329 = vmatpush1.msra.mxu0 0.0
  %330 = vmatprep.subr.mxu0 0.0
  %331 = vmatpush1.msra.mxu0 0.0
  %332 = vmatprep.subr.mxu0 0.0
  %333 = vmatpush1.msra.mxu0 0.0
  %334 = vmatprep.subr.mxu0 0.0
  %335 = vmatpush1.msra.mxu0 0.0
  %336 = vmatprep.mubr.f32.mxu0 0.0
  %337 = vmatmul.mubr.f32.gmra.mrb[0].mxu0 %v141
  %v338 = vpop.f32.mrb[0].mxu0
  %v339 = vadd.f32 0.0, %v338
  %v340 = vpop.f32.mrb[0].mxu0
  %v341 = vadd.f32 0.0, %v340
  %342 = vmatprep.mubr.f32.mxu0 0.0
  %343 = vmatmul.mubr.f32.gmra.mrb[0].mxu0 %v142
  %v344 = vpop.f32.mrb[0].mxu0
  %v345 = vadd.f32 0.0, %v344
  %v346 = vpop.f32.mrb[0].mxu0
  %v347 = vadd.f32 0.0, %v346
  %348 = vmatprep.mubr.f32.mxu0 0.0
  %349 = vmatmul.mubr.f32.gmra.mrb[0].mxu0 %v143
  %v350 = vpop.f32.mrb[0].mxu0
  %v351 = vadd.f32 0.0, %v350
  %v352 = vpop.f32.mrb[0].mxu0
  %v353 = vadd.f32 0.0, %v352
  %354 = vmatprep.mubr.f32.mxu0 0.0
  %355 = vmatmul.mubr.f32.gmra.mrb[0].mxu0 %v144
  %v356 = vpop.f32.mrb[0].mxu0
  %v357 = vadd.f32 0.0, %v356
  %v358 = vpop.f32.mrb[0].mxu0
  %v359 = vadd.f32 0.0, %v358
  %360 = vmatprep.mubr.f32.mxu0 0.0
  %361 = vmatmul.mubr.f32.gmra.mrb[0].mxu0 %v145
  %v362 = vpop.f32.mrb[0].mxu0
  %v363 = vadd.f32 0.0, %v362
  %v364 = vpop.f32.mrb[0].mxu0
  %v365 = vadd.f32 0.0, %v364
  %366 = vmatprep.mubr.f32.mxu0 0.0
  %367 = vmatmul.mubr.f32.gmra.mrb[0].mxu0 %v146
  %v368 = vpop.f32.mrb[0].mxu0
  %v369 = vadd.f32 0.0, %v368
  %v370 = vpop.f32.mrb[0].mxu0
  %v371 = vadd.f32 0.0, %v370
  %372 = vmatprep.mubr.f32.mxu0 0.0
  %373 = vmatmul.mubr.f32.gmra.mrb[0].mxu0 %v147
  %v374 = vpop.f32.mrb[0].mxu0
  %v375 = vadd.f32 0.0, %v374
  %v376 = vpop.f32.mrb[0].mxu0
  %v377 = vadd.f32 0.0, %v376
  %378 = vmatprep.mubr.f32.mxu0 0.0
  %379 = vmatmul.mubr.f32.gmra.mrb[0].mxu0 %v148
  %v380 = vpop.f32.mrb[0].mxu0
  %v381 = vadd.f32 0.0, %v380
  %v382 = vpop.f32.mrb[0].mxu0
  %v383 = vadd.f32 0.0, %v382
  %384 = vmatprep.mubr.f32.mxu0 0.0
  %385 = vmatmul.mubr.f32.gmra.mrb[0].mxu0 %v149
  %v386 = vpop.f32.mrb[0].mxu0
  %v387 = vadd.f32 0.0, %v386
  %v388 = vpop.f32.mrb[0].mxu0
  %v389 = vadd.f32 0.0, %v388
  %390 = vmatprep.mubr.f32.mxu0 0.0
  %391 = vmatmul.mubr.f32.gmra.mrb[0].mxu0 %v150
  %v392 = vpop.f32.mrb[0].mxu0
  %v393 = vadd.f32 0.0, %v392
  %v394 = vpop.f32.mrb[0].mxu0
  %v395 = vadd.f32 0.0, %v394
  %396 = vmatprep.mubr.f32.mxu0 0.0
  %397 = vmatmul.mubr.f32.gmra.mrb[0].mxu0 %v151
  %v398 = vpop.f32.mrb[0].mxu0
  %v399 = vadd.f32 0.0, %v398
  %v400 = vpop.f32.mrb[0].mxu0
  %v401 = vadd.f32 0.0, %v400
  %402 = vmatprep.mubr.f32.mxu0 0.0
  %403 = vmatmul.mubr.f32.gmra.mrb[0].mxu0 %v152
  %v404 = vpop.f32.mrb[0].mxu0
  %v405 = vadd.f32 0.0, %v404
  %v406 = vpop.f32.mrb[0].mxu0
  %v407 = vadd.f32 0.0, %v406
  %408 = vmatprep.mubr.f32.mxu0 0.0
  %409 = vmatmul.mubr.f32.gmra.mrb[0].mxu0 %v153
  %v410 = vpop.f32.mrb[0].mxu0
  %v411 = vadd.f32 0.0, %v410
  %v412 = vpop.f32.mrb[0].mxu0
  %v413 = vadd.f32 0.0, %v412
  %414 = vmatprep.mubr.f32.mxu0 0.0
  %415 = vmatmul.mubr.f32.gmra.mrb[0].mxu0 %v154
  %v416 = vpop.f32.mrb[0].mxu0
  %v417 = vadd.f32 0.0, %v416
  %v418 = vpop.f32.mrb[0].mxu0
  %v419 = vadd.f32 0.0, %v418
  %420 = vmatprep.mubr.f32.mxu0 0.0
  %421 = vmatmul.mubr.f32.gmra.mrb[0].mxu0 %v155
  %v422 = vpop.f32.mrb[0].mxu0
  %v423 = vadd.f32 0.0, %v422
  %v424 = vpop.f32.mrb[0].mxu0
  %v425 = vadd.f32 0.0, %v424
  %426 = vmatprep.mubr.f32.mxu0 0.0
  %427 = vmatmul.mubr.f32.gmra.mrb[0].mxu0 %v156
  %v428 = vpop.f32.mrb[0].mxu0
  %v429 = vadd.f32 0.0, %v428
  %v430 = vpop.f32.mrb[0].mxu0
  %v431 = vadd.f32 0.0, %v430
  %432 = vmatprep.mubr.f32.mxu0 0.0
  %433 = vmatmul.mubr.f32.gmra.mrb[0].mxu0 %v157
  %v434 = vpop.f32.mrb[0].mxu0
  %v435 = vadd.f32 0.0, %v434
  %v436 = vpop.f32.mrb[0].mxu0
  %v437 = vadd.f32 0.0, %v436
  %438 = vmatprep.mubr.f32.mxu0 0.0
  %439 = vmatmul.mubr.f32.gmra.mrb[0].mxu0 %v158
  %v440 = vpop.f32.mrb[0].mxu0
  %v441 = vadd.f32 0.0, %v440
  %v442 = vpop.f32.mrb[0].mxu0
  %v443 = vadd.f32 0.0, %v442
  %444 = vmatprep.mubr.f32.mxu0 0.0
  %445 = vmatmul.mubr.f32.gmra.mrb[0].mxu0 %v159
  %v446 = vpop.f32.mrb[0].mxu0
  %v447 = vadd.f32 0.0, %v446
  %v448 = vpop.f32.mrb[0].mxu0
  %v449 = vadd.f32 0.0, %v448
  %450 = vmatprep.mubr.f32.mxu0 0.0
  %451 = vmatmul.mubr.f32.gmra.mrb[0].mxu0 %v160
  %v452 = vpop.f32.mrb[0].mxu0
  %v453 = vadd.f32 0.0, %v452
  %v454 = vpop.f32.mrb[0].mxu0
  %v455 = vadd.f32 0.0, %v454
  %456 = vmatprep.mubr.f32.mxu0 0.0
  %457 = vmatmul.mubr.f32.gmra.mrb[0].mxu0 %v161
  %v458 = vpop.f32.mrb[0].mxu0
  %v459 = vadd.f32 0.0, %v458
  %v460 = vpop.f32.mrb[0].mxu0
  %v461 = vadd.f32 0.0, %v460
  %462 = vmatprep.mubr.f32.mxu0 0.0
  %463 = vmatmul.mubr.f32.gmra.mrb[0].mxu0 %v162
  %v464 = vpop.f32.mrb[0].mxu0
  %v465 = vadd.f32 0.0, %v464
  %v466 = vpop.f32.mrb[0].mxu0
  %v467 = vadd.f32 0.0, %v466
  %468 = vmatprep.mubr.f32.mxu0 0.0
  %469 = vmatmul.mubr.f32.gmra.mrb[0].mxu0 %v163
  %v470 = vpop.f32.mrb[0].mxu0
  %v471 = vadd.f32 0.0, %v470
  %v472 = vpop.f32.mrb[0].mxu0
  %v473 = vadd.f32 0.0, %v472
  %474 = vmatprep.mubr.f32.mxu0 0.0
  %475 = vmatmul.mubr.f32.gmra.mrb[0].mxu0 %v164
  %v476 = vpop.f32.mrb[0].mxu0
  %v477 = vadd.f32 0.0, %v476
  %v478 = vpop.f32.mrb[0].mxu0
  %v479 = vadd.f32 0.0, %v478
  %480 = vmatprep.mubr.f32.mxu0 0.0
  %481 = vmatmul.mubr.f32.gmra.mrb[0].mxu0 %v165
  %v482 = vpop.f32.mrb[0].mxu0
  %v483 = vadd.f32 0.0, %v482
  %v484 = vpop.f32.mrb[0].mxu0
  %v485 = vadd.f32 0.0, %v484
  %486 = vmatprep.mubr.f32.mxu0 0.0
  %487 = vmatmul.mubr.f32.gmra.mrb[0].mxu0 %v166
  %v488 = vpop.f32.mrb[0].mxu0
  %v489 = vadd.f32 0.0, %v488
  %v490 = vpop.f32.mrb[0].mxu0
  %v491 = vadd.f32 0.0, %v490
  %492 = vmatprep.mubr.f32.mxu0 0.0
  %493 = vmatmul.mubr.f32.gmra.mrb[0].mxu0 %v167
  %v494 = vpop.f32.mrb[0].mxu0
  %v495 = vadd.f32 0.0, %v494
  %v496 = vpop.f32.mrb[0].mxu0
  %v497 = vadd.f32 0.0, %v496
  %498 = vmatprep.mubr.f32.mxu0 0.0
  %499 = vmatmul.mubr.f32.gmra.mrb[0].mxu0 %v168
  %v500 = vpop.f32.mrb[0].mxu0
  %v501 = vadd.f32 0.0, %v500
  %v502 = vpop.f32.mrb[0].mxu0
  %v503 = vadd.f32 0.0, %v502
  %504 = vmatprep.mubr.f32.mxu0 0.0
  %505 = vmatmul.mubr.f32.gmra.mrb[0].mxu0 %v169
  %v506 = vpop.f32.mrb[0].mxu0
  %v507 = vadd.f32 0.0, %v506
  %v508 = vpop.f32.mrb[0].mxu0
  %v509 = vadd.f32 0.0, %v508
  %510 = vmatprep.mubr.f32.mxu0 0.0
  %511 = vmatmul.mubr.f32.gmra.mrb[0].mxu0 %v170
  %v512 = vpop.f32.mrb[0].mxu0
  %v513 = vadd.f32 0.0, %v512
  %v514 = vpop.f32.mrb[0].mxu0
  %v515 = vadd.f32 0.0, %v514
  %516 = vmatprep.mubr.f32.mxu0 0.0
  %517 = vmatmul.mubr.f32.gmra.mrb[0].mxu0 %v171
  %v518 = vpop.f32.mrb[0].mxu0
  %v519 = vadd.f32 0.0, %v518
  %v520 = vpop.f32.mrb[0].mxu0
  %v521 = vadd.f32 0.0, %v520
  %522 = vmatprep.mubr.f32.mxu0 0.0
  %523 = vmatmul.mubr.f32.gmra.mrb[0].mxu0 %v172
  %v524 = vpop.f32.mrb[0].mxu0
  %v525 = vadd.f32 0.0, %v524
  %v526 = vpop.f32.mrb[0].mxu0
  %v527 = vadd.f32 0.0, %v526
  %528 = vmatprep.mubr.f32.mxu0 0.0
  %529 = vmatmul.mubr.f32.gmra.mrb[0].mxu0 %v173
  %v530 = vpop.f32.mrb[0].mxu0
  %v531 = vadd.f32 0.0, %v530
  %v532 = vpop.f32.mrb[0].mxu0
  %v533 = vadd.f32 0.0, %v532
  %534 = vmatprep.mubr.f32.mxu0 0.0
  %535 = vmatmul.mubr.f32.gmra.mrb[0].mxu0 %v174
  %v536 = vpop.f32.mrb[0].mxu0
  %v537 = vadd.f32 0.0, %v536
  %v538 = vpop.f32.mrb[0].mxu0
  %v539 = vadd.f32 0.0, %v538
  %540 = vmatprep.mubr.f32.mxu0 0.0
  %541 = vmatmul.mubr.f32.gmra.mrb[0].mxu0 %v175
  %v542 = vpop.f32.mrb[0].mxu0
  %v543 = vadd.f32 0.0, %v542
  %v544 = vpop.f32.mrb[0].mxu0
  %v545 = vadd.f32 0.0, %v544
  %546 = vmatprep.mubr.f32.mxu0 0.0
  %547 = vmatmul.mubr.f32.gmra.mrb[0].mxu0 %v176
  %v548 = vpop.f32.mrb[0].mxu0
  %v549 = vadd.f32 0.0, %v548
  %v550 = vpop.f32.mrb[0].mxu0
  %v551 = vadd.f32 0.0, %v550
  %552 = vmatprep.mubr.f32.mxu0 0.0
  %553 = vmatmul.mubr.f32.gmra.mrb[0].mxu0 %v177
  %v554 = vpop.f32.mrb[0].mxu0
  %v555 = vadd.f32 0.0, %v554
  %v556 = vpop.f32.mrb[0].mxu0
  %v557 = vadd.f32 0.0, %v556
  %558 = vmatprep.mubr.f32.mxu0 0.0
  %559 = vmatmul.mubr.f32.gmra.mrb[0].mxu0 %v178
  %v560 = vpop.f32.mrb[0].mxu0
  %v561 = vadd.f32 0.0, %v560
  %v562 = vpop.f32.mrb[0].mxu0
  %v563 = vadd.f32 0.0, %v562
  %564 = vmatprep.mubr.f32.mxu0 0.0
  %565 = vmatmul.mubr.f32.gmra.mrb[0].mxu0 %v179
  %v566 = vpop.f32.mrb[0].mxu0
  %v567 = vadd.f32 0.0, %v566
  %v568 = vpop.f32.mrb[0].mxu0
  %v569 = vadd.f32 0.0, %v568
  %570 = vmatprep.mubr.f32.mxu0 0.0
  %571 = vmatmul.mubr.f32.gmra.mrb[0].mxu0 %v180
  %v572 = vpop.f32.mrb[0].mxu0
  %v573 = vadd.f32 0.0, %v572
  %v574 = vpop.f32.mrb[0].mxu0
  %v575 = vadd.f32 0.0, %v574
  %576 = vmatprep.mubr.f32.mxu0 0.0
  %577 = vmatmul.mubr.f32.gmra.mrb[0].mxu0 %v181
  %v578 = vpop.f32.mrb[0].mxu0
  %v579 = vadd.f32 0.0, %v578
  %v580 = vpop.f32.mrb[0].mxu0
  %v581 = vadd.f32 0.0, %v580
  %582 = vmatprep.mubr.f32.mxu0 0.0
  %583 = vmatmul.mubr.f32.gmra.mrb[0].mxu0 %v182
  %v584 = vpop.f32.mrb[0].mxu0
  %v585 = vadd.f32 0.0, %v584
  %v586 = vpop.f32.mrb[0].mxu0
  %v587 = vadd.f32 0.0, %v586
  %588 = vmatprep.mubr.f32.mxu0 0.0
  %589 = vmatmul.mubr.f32.gmra.mrb[0].mxu0 %v183
  %v590 = vpop.f32.mrb[0].mxu0
  %v591 = vadd.f32 0.0, %v590
  %v592 = vpop.f32.mrb[0].mxu0
  %v593 = vadd.f32 0.0, %v592
  %594 = vmatprep.mubr.f32.mxu0 0.0
  %595 = vmatmul.mubr.f32.gmra.mrb[0].mxu0 %v184
  %v596 = vpop.f32.mrb[0].mxu0
  %v597 = vadd.f32 0.0, %v596
  %v598 = vpop.f32.mrb[0].mxu0
  %v599 = vadd.f32 0.0, %v598
  %600 = vmatprep.mubr.f32.mxu0 0.0
  %601 = vmatmul.mubr.f32.gmra.mrb[0].mxu0 %v185
  %v602 = vpop.f32.mrb[0].mxu0
  %v603 = vadd.f32 0.0, %v602
  %v604 = vpop.f32.mrb[0].mxu0
  %v605 = vadd.f32 0.0, %v604
  %606 = vmatprep.mubr.f32.mxu0 0.0
  %607 = vmatmul.mubr.f32.gmra.mrb[0].mxu0 %v186
  %v608 = vpop.f32.mrb[0].mxu0
  %v609 = vadd.f32 0.0, %v608
  %v610 = vpop.f32.mrb[0].mxu0
  %v611 = vadd.f32 0.0, %v610
  %612 = vmatprep.mubr.f32.mxu0 0.0
  %613 = vmatmul.mubr.f32.gmra.mrb[0].mxu0 %v187
  %v614 = vpop.f32.mrb[0].mxu0
  %v615 = vadd.f32 0.0, %v614
  %v616 = vpop.f32.mrb[0].mxu0
  %v617 = vadd.f32 0.0, %v616
  %618 = vmatprep.mubr.f32.mxu0 0.0
  %619 = vmatmul.mubr.f32.gmra.mrb[0].mxu0 %v188
  %v620 = vpop.f32.mrb[0].mxu0
  %v621 = vadd.f32 0.0, %v620
  %v622 = vpop.f32.mrb[0].mxu0
  %v623 = vadd.f32 0.0, %v622
  %624 = vmatprep.mubr.f32.mxu0 0.0
  %625 = vmatmul.mubr.f32.gmra.mrb[0].mxu0 %v189
  %v626 = vpop.f32.mrb[0].mxu0
  %v627 = vadd.f32 0.0, %v626
  %v628 = vpop.f32.mrb[0].mxu0
  %v629 = vadd.f32 0.0, %v628
  %630 = vmatprep.mubr.f32.mxu0 0.0
  %631 = vmatmul.mubr.f32.gmra.mrb[0].mxu0 %v190
  %v632 = vpop.f32.mrb[0].mxu0
  %v633 = vadd.f32 0.0, %v632
  %v634 = vpop.f32.mrb[0].mxu0
  %v635 = vadd.f32 0.0, %v634
  %636 = vmatprep.mubr.f32.mxu0 0.0
  %637 = vmatmul.mubr.f32.gmra.mrb[0].mxu0 %v191
  %v638 = vpop.f32.mrb[0].mxu0
  %v639 = vadd.f32 0.0, %v638
  %v640 = vpop.f32.mrb[0].mxu0
  %v641 = vadd.f32 0.0, %v640
  %642 = vmatprep.mubr.f32.mxu0 0.0
  %643 = vmatmul.mubr.f32.gmra.mrb[0].mxu0 %v192
  %v644 = vpop.f32.mrb[0].mxu0
  %v645 = vadd.f32 0.0, %v644
  %v646 = vpop.f32.mrb[0].mxu0
  %v647 = vadd.f32 0.0, %v646
  %648 = vmatprep.mubr.f32.mxu0 0.0
  %649 = vmatmul.mubr.f32.gmra.mrb[0].mxu0 %v193
  %v650 = vpop.f32.mrb[0].mxu0
  %v651 = vadd.f32 0.0, %v650
  %v652 = vpop.f32.mrb[0].mxu0
  %v653 = vadd.f32 0.0, %v652
  %654 = vmatprep.mubr.f32.mxu0 0.0
  %655 = vmatmul.mubr.f32.gmra.mrb[0].mxu0 %v194
  %v656 = vpop.f32.mrb[0].mxu0
  %v657 = vadd.f32 0.0, %v656
  %v658 = vpop.f32.mrb[0].mxu0
  %v659 = vadd.f32 0.0, %v658
  %660 = vmatprep.mubr.f32.mxu0 0.0
  %661 = vmatmul.mubr.f32.gmra.mrb[0].mxu0 %v195
  %v662 = vpop.f32.mrb[0].mxu0
  %v663 = vadd.f32 0.0, %v662
  %v664 = vpop.f32.mrb[0].mxu0
  %v665 = vadd.f32 0.0, %v664
  %666 = vmatprep.mubr.f32.mxu0 0.0
  %667 = vmatmul.mubr.f32.gmra.mrb[0].mxu0 %v196
  %v668 = vpop.f32.mrb[0].mxu0
  %v669 = vadd.f32 0.0, %v668
  %v670 = vpop.f32.mrb[0].mxu0
  %v671 = vadd.f32 0.0, %v670
  %672 = vmatprep.mubr.f32.mxu0 0.0
  %673 = vmatmul.mubr.f32.gmra.mrb[0].mxu0 %v197
  %v674 = vpop.f32.mrb[0].mxu0
  %v675 = vadd.f32 0.0, %v674
  %v676 = vpop.f32.mrb[0].mxu0
  %v677 = vadd.f32 0.0, %v676
  %678 = vmatprep.mubr.f32.mxu0 0.0
  %679 = vmatmul.mubr.f32.gmra.mrb[0].mxu0 %v198
  %v680 = vpop.f32.mrb[0].mxu0
  %v681 = vadd.f32 0.0, %v680
  %v682 = vpop.f32.mrb[0].mxu0
  %v683 = vadd.f32 0.0, %v682
  %684 = vmatprep.mubr.f32.mxu0 0.0
  %685 = vmatmul.mubr.f32.gmra.mrb[0].mxu0 %v199
  %v686 = vpop.f32.mrb[0].mxu0
  %v687 = vadd.f32 0.0, %v686
  %v688 = vpop.f32.mrb[0].mxu0
  %v689 = vadd.f32 0.0, %v688
  %690 = vmatprep.mubr.f32.mxu0 0.0
  %691 = vmatmul.mubr.f32.gmra.mrb[0].mxu0 %v200
  %v692 = vpop.f32.mrb[0].mxu0
  %v693 = vadd.f32 0.0, %v692
  %v694 = vpop.f32.mrb[0].mxu0
  %v695 = vadd.f32 0.0, %v694
  %696 = vmatprep.mubr.f32.mxu0 0.0
  %697 = vmatmul.mubr.f32.gmra.mrb[0].mxu0 %v201
  %v698 = vpop.f32.mrb[0].mxu0
  %v699 = vadd.f32 0.0, %v698
  %v700 = vpop.f32.mrb[0].mxu0
  %v701 = vadd.f32 0.0, %v700
  %702 = vmatprep.mubr.f32.mxu0 0.0
  %703 = vmatmul.mubr.f32.gmra.mrb[0].mxu0 %v202
  %v704 = vpop.f32.mrb[0].mxu0
  %v705 = vadd.f32 0.0, %v704
  %v706 = vpop.f32.mrb[0].mxu0
  %v707 = vadd.f32 0.0, %v706
  %708 = vmatprep.mubr.f32.mxu0 0.0
  %709 = vmatmul.mubr.f32.gmra.mrb[0].mxu0 %v203
  %v710 = vpop.f32.mrb[0].mxu0
  %v711 = vadd.f32 0.0, %v710
  %v712 = vpop.f32.mrb[0].mxu0
  %v713 = vadd.f32 0.0, %v712
  %714 = vmatprep.mubr.f32.mxu0 0.0
  %715 = vmatmul.mubr.f32.gmra.mrb[0].mxu0 %v204
  %v716 = vpop.f32.mrb[0].mxu0
  %v717 = vadd.f32 0.0, %v716
  %v718 = vpop.f32.mrb[0].mxu0
  %v719 = vadd.f32 0.0, %v718
  %720 = vmatprep.mubr.f32.mxu0 0.0
  %721 = vmatmul.mubr.f32.gmra.mrb[0].mxu0 %v205
  %v722 = vpop.f32.mrb[0].mxu0
  %v723 = vadd.f32 0.0, %v722
  %v724 = vpop.f32.mrb[0].mxu0
  %v725 = vadd.f32 0.0, %v724
  %726 = vmatprep.mubr.f32.mxu0 0.0
  %727 = vmatmul.mubr.f32.gmra.mrb[0].mxu0 %v206
  %v728 = vpop.f32.mrb[0].mxu0
  %v729 = vadd.f32 0.0, %v728
  %v730 = vpop.f32.mrb[0].mxu0
  %v731 = vadd.f32 0.0, %v730
  %732 = vmatprep.mubr.f32.mxu0 0.0
  %733 = vmatmul.mubr.f32.gmra.mrb[0].mxu0 %v207
  %v734 = vpop.f32.mrb[0].mxu0
  %v735 = vadd.f32 0.0, %v734
  %v736 = vpop.f32.mrb[0].mxu0
  %v737 = vadd.f32 0.0, %v736
  %738 = vmatprep.mubr.f32.mxu0 0.0
  %739 = vmatmul.mubr.f32.gmra.mrb[0].mxu0 %v208
  %v740 = vpop.f32.mrb[0].mxu0
  %v741 = vadd.f32 0.0, %v740
  %v742 = vpop.f32.mrb[0].mxu0
  %v743 = vadd.f32 0.0, %v742
  %744 = vmatprep.mubr.f32.mxu0 0.0
  %745 = vmatmul.mubr.f32.gmra.mrb[0].mxu0 %v209
  %v746 = vpop.f32.mrb[0].mxu0
  %v747 = vadd.f32 0.0, %v746
  %v748 = vpop.f32.mrb[0].mxu0
  %v749 = vadd.f32 0.0, %v748
  %750 = vmatprep.mubr.f32.mxu0 0.0
  %751 = vmatmul.mubr.f32.gmra.mrb[0].mxu0 %v210
  %v752 = vpop.f32.mrb[0].mxu0
  %v753 = vadd.f32 0.0, %v752
  %v754 = vpop.f32.mrb[0].mxu0
  %v755 = vadd.f32 0.0, %v754
  %756 = vmatprep.mubr.f32.mxu0 0.0
  %757 = vmatmul.mubr.f32.gmra.mrb[0].mxu0 %v211
  %v758 = vpop.f32.mrb[0].mxu0
  %v759 = vadd.f32 0.0, %v758
  %v760 = vpop.f32.mrb[0].mxu0
  %v761 = vadd.f32 0.0, %v760
  %762 = vmatprep.mubr.f32.mxu0 0.0
  %763 = vmatmul.mubr.f32.gmra.mrb[0].mxu0 %v212
  %v764 = vpop.f32.mrb[0].mxu0
  %v765 = vadd.f32 0.0, %v764
  %v766 = vpop.f32.mrb[0].mxu0
  %v767 = vadd.f32 0.0, %v766
  %768 = vmatprep.mubr.f32.mxu0 0.0
  %769 = vmatmul.mubr.f32.gmra.mrb[0].mxu0 %v213
  %v770 = vpop.f32.mrb[0].mxu0
  %v771 = vadd.f32 0.0, %v770
  %v772 = vpop.f32.mrb[0].mxu0
  %v773 = vadd.f32 0.0, %v772
  %774 = vmatprep.mubr.f32.mxu0 0.0
  %775 = vmatmul.mubr.f32.gmra.mrb[0].mxu0 %v214
  %v776 = vpop.f32.mrb[0].mxu0
  %v777 = vadd.f32 0.0, %v776
  %v778 = vpop.f32.mrb[0].mxu0
  %v779 = vadd.f32 0.0, %v778
  %780 = vmatprep.mubr.f32.mxu0 0.0
  %781 = vmatmul.mubr.f32.gmra.mrb[0].mxu0 %v215
  %v782 = vpop.f32.mrb[0].mxu0
  %v783 = vadd.f32 0.0, %v782
  %v784 = vpop.f32.mrb[0].mxu0
  %v785 = vadd.f32 0.0, %v784
  %786 = vmatprep.mubr.f32.mxu0 0.0
  %787 = vmatmul.mubr.f32.gmra.mrb[0].mxu0 %v216
  %v788 = vpop.f32.mrb[0].mxu0
  %v789 = vadd.f32 0.0, %v788
  %v790 = vpop.f32.mrb[0].mxu0
  %v791 = vadd.f32 0.0, %v790
  %792 = vmatprep.mubr.f32.mxu0 0.0
  %793 = vmatmul.mubr.f32.gmra.mrb[0].mxu0 %v217
  %v794 = vpop.f32.mrb[0].mxu0
  %v795 = vadd.f32 0.0, %v794
  %v796 = vpop.f32.mrb[0].mxu0
  %v797 = vadd.f32 0.0, %v796
  %798 = vmatprep.mubr.f32.mxu0 0.0
  %799 = vmatmul.mubr.f32.gmra.mrb[0].mxu0 %v218
  %v800 = vpop.f32.mrb[0].mxu0
  %v801 = vadd.f32 0.0, %v800
  %v802 = vpop.f32.mrb[0].mxu0
  %v803 = vadd.f32 0.0, %v802
  %804 = vmatprep.mubr.f32.mxu0 0.0
  %805 = vmatmul.mubr.f32.gmra.mrb[0].mxu0 %v219
  %v806 = vpop.f32.mrb[0].mxu0
  %v807 = vadd.f32 0.0, %v806
  %v808 = vpop.f32.mrb[0].mxu0
  %v809 = vadd.f32 0.0, %v808
  %810 = vmatprep.mubr.f32.mxu0 0.0
  %811 = vmatmul.mubr.f32.gmra.mrb[0].mxu0 %v220
  %v812 = vpop.f32.mrb[0].mxu0
  %v813 = vadd.f32 0.0, %v812
  %v814 = vpop.f32.mrb[0].mxu0
  %v815 = vadd.f32 0.0, %v814
  %816 = vmatprep.mubr.f32.mxu0 0.0
  %817 = vmatmul.mubr.f32.gmra.mrb[0].mxu0 %v221
  %v818 = vpop.f32.mrb[0].mxu0
  %v819 = vadd.f32 0.0, %v818
  %v820 = vpop.f32.mrb[0].mxu0
  %v821 = vadd.f32 0.0, %v820
  %822 = vmatprep.mubr.f32.mxu0 0.0
  %823 = vmatmul.mubr.f32.gmra.mrb[0].mxu0 %v222
  %v824 = vpop.f32.mrb[0].mxu0
  %v825 = vadd.f32 0.0, %v824
  %v826 = vpop.f32.mrb[0].mxu0
  %v827 = vadd.f32 0.0, %v826
  %828 = vmatprep.mubr.f32.mxu0 0.0
  %829 = vmatmul.mubr.f32.gmra.mrb[0].mxu0 %v223
  %v830 = vpop.f32.mrb[0].mxu0
  %v831 = vadd.f32 0.0, %v830
  %v832 = vpop.f32.mrb[0].mxu0
  %v833 = vadd.f32 0.0, %v832
  %834 = vmatprep.mubr.f32.mxu0 0.0
  %835 = vmatmul.mubr.f32.gmra.mrb[0].mxu0 %v224
  %v836 = vpop.f32.mrb[0].mxu0
  %v837 = vadd.f32 0.0, %v836
  %v838 = vpop.f32.mrb[0].mxu0
  %v839 = vadd.f32 0.0, %v838
  %840 = vmatprep.mubr.f32.mxu0 0.0
  %841 = vmatmul.mubr.f32.gmra.mrb[0].mxu0 %v225
  %v842 = vpop.f32.mrb[0].mxu0
  %v843 = vadd.f32 0.0, %v842
  %v844 = vpop.f32.mrb[0].mxu0
  %v845 = vadd.f32 0.0, %v844
  %846 = vmatprep.mubr.f32.mxu0 0.0
  %847 = vmatmul.mubr.f32.gmra.mrb[0].mxu0 %v226
  %v848 = vpop.f32.mrb[0].mxu0
  %v849 = vadd.f32 0.0, %v848
  %v850 = vpop.f32.mrb[0].mxu0
  %v851 = vadd.f32 0.0, %v850
  %852 = vmatprep.mubr.f32.mxu0 0.0
  %853 = vmatmul.mubr.f32.gmra.mrb[0].mxu0 %v227
  %v854 = vpop.f32.mrb[0].mxu0
  %v855 = vadd.f32 0.0, %v854
  %v856 = vpop.f32.mrb[0].mxu0
  %v857 = vadd.f32 0.0, %v856
  %858 = vmatprep.mubr.f32.mxu0 0.0
  %859 = vmatmul.mubr.f32.gmra.mrb[0].mxu0 %v228
  %v860 = vpop.f32.mrb[0].mxu0
  %v861 = vadd.f32 0.0, %v860
  %v862 = vpop.f32.mrb[0].mxu0
  %v863 = vadd.f32 0.0, %v862
  %864 = vmatprep.mubr.f32.mxu0 0.0
  %865 = vmatmul.mubr.f32.gmra.mrb[0].mxu0 %v229
  %v866 = vpop.f32.mrb[0].mxu0
  %v867 = vadd.f32 0.0, %v866
  %v868 = vpop.f32.mrb[0].mxu0
  %v869 = vadd.f32 0.0, %v868
  %870 = vmatprep.mubr.f32.mxu0 0.0
  %871 = vmatmul.mubr.f32.gmra.mrb[0].mxu0 %v230
  %v872 = vpop.f32.mrb[0].mxu0
  %v873 = vadd.f32 0.0, %v872
  %v874 = vpop.f32.mrb[0].mxu0
  %v875 = vadd.f32 0.0, %v874
  %876 = vmatprep.mubr.f32.mxu0 0.0
  %877 = vmatmul.mubr.f32.gmra.mrb[0].mxu0 %v231
  %v878 = vpop.f32.mrb[0].mxu0
  %v879 = vadd.f32 0.0, %v878
  %v880 = vpop.f32.mrb[0].mxu0
  %v881 = vadd.f32 0.0, %v880
  %882 = vmatprep.mubr.f32.mxu0 0.0
  %883 = vmatmul.mubr.f32.gmra.mrb[0].mxu0 %v232
  %v884 = vpop.f32.mrb[0].mxu0
  %v885 = vadd.f32 0.0, %v884
  %v886 = vpop.f32.mrb[0].mxu0
  %v887 = vadd.f32 0.0, %v886
  %888 = vmatprep.mubr.f32.mxu0 0.0
  %889 = vmatmul.mubr.f32.gmra.mrb[0].mxu0 %v233
  %v890 = vpop.f32.mrb[0].mxu0
  %v891 = vadd.f32 0.0, %v890
  %v892 = vpop.f32.mrb[0].mxu0
  %v893 = vadd.f32 0.0, %v892
  %894 = vmatprep.mubr.f32.mxu0 0.0
  %895 = vmatmul.mubr.f32.gmra.mrb[0].mxu0 %v234
  %v896 = vpop.f32.mrb[0].mxu0
  %v897 = vadd.f32 0.0, %v896
  %v898 = vpop.f32.mrb[0].mxu0
  %v899 = vadd.f32 0.0, %v898
  %900 = vmatprep.mubr.f32.mxu0 0.0
  %901 = vmatmul.mubr.f32.gmra.mrb[0].mxu0 %v235
  %v902 = vpop.f32.mrb[0].mxu0
  %v903 = vadd.f32 0.0, %v902
  %v904 = vpop.f32.mrb[0].mxu0
  %v905 = vadd.f32 0.0, %v904
  %906 = vmatprep.mubr.f32.mxu0 0.0
  %907 = vmatmul.mubr.f32.gmra.mrb[0].mxu0 %v236
  %v908 = vpop.f32.mrb[0].mxu0
  %v909 = vadd.f32 0.0, %v908
  %v910 = vpop.f32.mrb[0].mxu0
  %v911 = vadd.f32 0.0, %v910
  %912 = vmatprep.mubr.f32.mxu0 0.0
  %913 = vmatmul.mubr.f32.gmra.mrb[0].mxu0 %v237
  %v914 = vpop.f32.mrb[0].mxu0
  %v915 = vadd.f32 0.0, %v914
  %v916 = vpop.f32.mrb[0].mxu0
  %v917 = vadd.f32 0.0, %v916
  %918 = vmatprep.mubr.f32.mxu0 0.0
  %919 = vmatmul.mubr.f32.gmra.mrb[0].mxu0 %v238
  %v920 = vpop.f32.mrb[0].mxu0
  %v921 = vadd.f32 0.0, %v920
  %v922 = vpop.f32.mrb[0].mxu0
  %v923 = vadd.f32 0.0, %v922
  %924 = vdwg.mxu0
  %925 = vmatprep.subr.mxu0 %v110
  %926 = vmatpush1.msra.mxu0 %v109
  %927 = vmatprep.subr.mxu0 %v112
  %928 = vmatpush1.msra.mxu0 %v111
  %929 = vmatprep.subr.mxu0 %v114
  %930 = vmatpush1.msra.mxu0 %v113
  %931 = vmatprep.subr.mxu0 %v116
  %932 = vmatpush1.msra.mxu0 %v115
  %933 = vmatprep.subr.mxu0 %v118
  %934 = vmatpush1.msra.mxu0 %v117
  %935 = vmatprep.subr.mxu0 %v120
  %936 = vmatpush1.msra.mxu0 %v119
  %937 = vmatprep.subr.mxu0 %v122
  %938 = vmatpush1.msra.mxu0 %v121
  %939 = vmatprep.subr.mxu0 %v124
  %940 = vmatpush1.msra.mxu0 %v123
  %941 = vmatprep.subr.mxu0 %v126
  %942 = vmatpush1.msra.mxu0 %v125
  %943 = vmatprep.subr.mxu0 %v128
  %944 = vmatpush1.msra.mxu0 %v127
  %945 = vmatprep.subr.mxu0 %v130
  %946 = vmatpush1.msra.mxu0 %v129
  %947 = vmatprep.subr.mxu0 %v132
  %948 = vmatpush1.msra.mxu0 %v131
  %949 = vmatprep.subr.mxu0 %v134
  %950 = vmatpush1.msra.mxu0 %v133
  %951 = vmatprep.subr.mxu0 %v136
  %952 = vmatpush1.msra.mxu0 %v135
  %953 = vmatprep.subr.mxu0 %v138
  %954 = vmatpush1.msra.mxu0 %v137
  %955 = vmatprep.subr.mxu0 %v140
  %956 = vmatpush1.msra.mxu0 %v139
  %957 = vmatprep.subr.mxu0 0.0
  %958 = vmatpush1.msra.mxu0 0.0
  %959 = vmatprep.subr.mxu0 0.0
  %960 = vmatpush1.msra.mxu0 0.0
  %961 = vmatprep.subr.mxu0 0.0
  %962 = vmatpush1.msra.mxu0 0.0
  %963 = vmatprep.subr.mxu0 0.0
  %964 = vmatpush1.msra.mxu0 0.0
  %965 = vmatprep.subr.mxu0 0.0
  %966 = vmatpush1.msra.mxu0 0.0
  %967 = vmatprep.subr.mxu0 0.0
  %968 = vmatpush1.msra.mxu0 0.0
  %969 = vmatprep.subr.mxu0 0.0
  %970 = vmatpush1.msra.mxu0 0.0
  %971 = vmatprep.subr.mxu0 0.0
  %972 = vmatpush1.msra.mxu0 0.0
  %973 = vmatprep.subr.mxu0 0.0
  %974 = vmatpush1.msra.mxu0 0.0
  %975 = vmatprep.subr.mxu0 0.0
  %976 = vmatpush1.msra.mxu0 0.0
  %977 = vmatprep.subr.mxu0 0.0
  %978 = vmatpush1.msra.mxu0 0.0
  %979 = vmatprep.subr.mxu0 0.0
  %980 = vmatpush1.msra.mxu0 0.0
  %981 = vmatprep.subr.mxu0 0.0
  %982 = vmatpush1.msra.mxu0 0.0
  %983 = vmatprep.subr.mxu0 0.0
  %984 = vmatpush1.msra.mxu0 0.0
  %985 = vmatprep.subr.mxu0 0.0
  %986 = vmatpush1.msra.mxu0 0.0
  %987 = vmatprep.subr.mxu0 0.0
  %988 = vmatpush1.msra.mxu0 0.0
  %989 = vmatprep.mubr.f32.mxu0 0.0
  %990 = vmatmul.mubr.f32.gmra.mrb[0].mxu0 %v11
  %v991 = vpop.f32.mrb[0].mxu0
  %v992 = vadd.f32 %v339, %v991
  %v993 = vpop.f32.mrb[0].mxu0
  %v994 = vadd.f32 %v341, %v993
  %995 = vmatprep.mubr.f32.mxu0 0.0
  %996 = vmatmul.mubr.f32.gmra.mrb[0].mxu0 %v12
  %v997 = vpop.f32.mrb[0].mxu0
  %v998 = vadd.f32 %v345, %v997
  %v999 = vpop.f32.mrb[0].mxu0
  %v1000 = vadd.f32 %v347, %v999
  %1001 = vmatprep.mubr.f32.mxu0 0.0
  %1002 = vmatmul.mubr.f32.gmra.mrb[0].mxu0 %v13
  %v1003 = vpop.f32.mrb[0].mxu0
  %v1004 = vadd.f32 %v351, %v1003
  %v1005 = vpop.f32.mrb[0].mxu0
  %v1006 = vadd.f32 %v353, %v1005
  %1007 = vmatprep.mubr.f32.mxu0 0.0
  %1008 = vmatmul.mubr.f32.gmra.mrb[0].mxu0 %v14
  %v1009 = vpop.f32.mrb[0].mxu0
  %v1010 = vadd.f32 %v357, %v1009
  %v1011 = vpop.f32.mrb[0].mxu0
  %v1012 = vadd.f32 %v359, %v1011
  %1013 = vmatprep.mubr.f32.mxu0 0.0
  %1014 = vmatmul.mubr.f32.gmra.mrb[0].mxu0 %v15
  %v1015 = vpop.f32.mrb[0].mxu0
  %v1016 = vadd.f32 %v363, %v1015
  %v1017 = vpop.f32.mrb[0].mxu0
  %v1018 = vadd.f32 %v365, %v1017
  %1019 = vmatprep.mubr.f32.mxu0 0.0
  %1020 = vmatmul.mubr.f32.gmra.mrb[0].mxu0 %v16
  %v1021 = vpop.f32.mrb[0].mxu0
  %v1022 = vadd.f32 %v369, %v1021
  %v1023 = vpop.f32.mrb[0].mxu0
  %v1024 = vadd.f32 %v371, %v1023
  %1025 = vmatprep.mubr.f32.mxu0 0.0
  %1026 = vmatmul.mubr.f32.gmra.mrb[0].mxu0 %v17
  %v1027 = vpop.f32.mrb[0].mxu0
  %v1028 = vadd.f32 %v375, %v1027
  %v1029 = vpop.f32.mrb[0].mxu0
  %v1030 = vadd.f32 %v377, %v1029
  %1031 = vmatprep.mubr.f32.mxu0 0.0
  %1032 = vmatmul.mubr.f32.gmra.mrb[0].mxu0 %v18
  %v1033 = vpop.f32.mrb[0].mxu0
  %v1034 = vadd.f32 %v381, %v1033
  %v1035 = vpop.f32.mrb[0].mxu0
  %v1036 = vadd.f32 %v383, %v1035
  %1037 = vmatprep.mubr.f32.mxu0 0.0
  %1038 = vmatmul.mubr.f32.gmra.mrb[0].mxu0 %v19
  %v1039 = vpop.f32.mrb[0].mxu0
  %v1040 = vadd.f32 %v387, %v1039
  %v1041 = vpop.f32.mrb[0].mxu0
  %v1042 = vadd.f32 %v389, %v1041
  %1043 = vmatprep.mubr.f32.mxu0 0.0
  %1044 = vmatmul.mubr.f32.gmra.mrb[0].mxu0 %v20
  %v1045 = vpop.f32.mrb[0].mxu0
  %v1046 = vadd.f32 %v393, %v1045
  %v1047 = vpop.f32.mrb[0].mxu0
  %v1048 = vadd.f32 %v395, %v1047
  %1049 = vmatprep.mubr.f32.mxu0 0.0
  %1050 = vmatmul.mubr.f32.gmra.mrb[0].mxu0 %v21
  %v1051 = vpop.f32.mrb[0].mxu0
  %v1052 = vadd.f32 %v399, %v1051
  %v1053 = vpop.f32.mrb[0].mxu0
  %v1054 = vadd.f32 %v401, %v1053
  %1055 = vmatprep.mubr.f32.mxu0 0.0
  %1056 = vmatmul.mubr.f32.gmra.mrb[0].mxu0 %v22
  %v1057 = vpop.f32.mrb[0].mxu0
  %v1058 = vadd.f32 %v405, %v1057
  %v1059 = vpop.f32.mrb[0].mxu0
  %v1060 = vadd.f32 %v407, %v1059
  %1061 = vmatprep.mubr.f32.mxu0 0.0
  %1062 = vmatmul.mubr.f32.gmra.mrb[0].mxu0 %v23
  %v1063 = vpop.f32.mrb[0].mxu0
  %v1064 = vadd.f32 %v411, %v1063
  %v1065 = vpop.f32.mrb[0].mxu0
  %v1066 = vadd.f32 %v413, %v1065
  %1067 = vmatprep.mubr.f32.mxu0 0.0
  %1068 = vmatmul.mubr.f32.gmra.mrb[0].mxu0 %v24
  %v1069 = vpop.f32.mrb[0].mxu0
  %v1070 = vadd.f32 %v417, %v1069
  %v1071 = vpop.f32.mrb[0].mxu0
  %v1072 = vadd.f32 %v419, %v1071
  %1073 = vmatprep.mubr.f32.mxu0 0.0
  %1074 = vmatmul.mubr.f32.gmra.mrb[0].mxu0 %v25
  %v1075 = vpop.f32.mrb[0].mxu0
  %v1076 = vadd.f32 %v423, %v1075
  %v1077 = vpop.f32.mrb[0].mxu0
  %v1078 = vadd.f32 %v425, %v1077
  %1079 = vmatprep.mubr.f32.mxu0 0.0
  %1080 = vmatmul.mubr.f32.gmra.mrb[0].mxu0 %v26
  %v1081 = vpop.f32.mrb[0].mxu0
  %v1082 = vadd.f32 %v429, %v1081
  %v1083 = vpop.f32.mrb[0].mxu0
  %v1084 = vadd.f32 %v431, %v1083
  %1085 = vmatprep.mubr.f32.mxu0 0.0
  %1086 = vmatmul.mubr.f32.gmra.mrb[0].mxu0 %v27
  %v1087 = vpop.f32.mrb[0].mxu0
  %v1088 = vadd.f32 %v435, %v1087
  %v1089 = vpop.f32.mrb[0].mxu0
  %v1090 = vadd.f32 %v437, %v1089
  %1091 = vmatprep.mubr.f32.mxu0 0.0
  %1092 = vmatmul.mubr.f32.gmra.mrb[0].mxu0 %v28
  %v1093 = vpop.f32.mrb[0].mxu0
  %v1094 = vadd.f32 %v441, %v1093
  %v1095 = vpop.f32.mrb[0].mxu0
  %v1096 = vadd.f32 %v443, %v1095
  %1097 = vmatprep.mubr.f32.mxu0 0.0
  %1098 = vmatmul.mubr.f32.gmra.mrb[0].mxu0 %v29
  %v1099 = vpop.f32.mrb[0].mxu0
  %v1100 = vadd.f32 %v447, %v1099
  %v1101 = vpop.f32.mrb[0].mxu0
  %v1102 = vadd.f32 %v449, %v1101
  %1103 = vmatprep.mubr.f32.mxu0 0.0
  %1104 = vmatmul.mubr.f32.gmra.mrb[0].mxu0 %v30
  %v1105 = vpop.f32.mrb[0].mxu0
  %v1106 = vadd.f32 %v453, %v1105
  %v1107 = vpop.f32.mrb[0].mxu0
  %v1108 = vadd.f32 %v455, %v1107
  %1109 = vmatprep.mubr.f32.mxu0 0.0
  %1110 = vmatmul.mubr.f32.gmra.mrb[0].mxu0 %v31
  %v1111 = vpop.f32.mrb[0].mxu0
  %v1112 = vadd.f32 %v459, %v1111
  %v1113 = vpop.f32.mrb[0].mxu0
  %v1114 = vadd.f32 %v461, %v1113
  %1115 = vmatprep.mubr.f32.mxu0 0.0
  %1116 = vmatmul.mubr.f32.gmra.mrb[0].mxu0 %v32
  %v1117 = vpop.f32.mrb[0].mxu0
  %v1118 = vadd.f32 %v465, %v1117
  %v1119 = vpop.f32.mrb[0].mxu0
  %v1120 = vadd.f32 %v467, %v1119
  %1121 = vmatprep.mubr.f32.mxu0 0.0
  %1122 = vmatmul.mubr.f32.gmra.mrb[0].mxu0 %v33
  %v1123 = vpop.f32.mrb[0].mxu0
  %v1124 = vadd.f32 %v471, %v1123
  %v1125 = vpop.f32.mrb[0].mxu0
  %v1126 = vadd.f32 %v473, %v1125
  %1127 = vmatprep.mubr.f32.mxu0 0.0
  %1128 = vmatmul.mubr.f32.gmra.mrb[0].mxu0 %v34
  %v1129 = vpop.f32.mrb[0].mxu0
  %v1130 = vadd.f32 %v477, %v1129
  %v1131 = vpop.f32.mrb[0].mxu0
  %v1132 = vadd.f32 %v479, %v1131
  %1133 = vmatprep.mubr.f32.mxu0 0.0
  %1134 = vmatmul.mubr.f32.gmra.mrb[0].mxu0 %v35
  %v1135 = vpop.f32.mrb[0].mxu0
  %v1136 = vadd.f32 %v483, %v1135
  %v1137 = vpop.f32.mrb[0].mxu0
  %v1138 = vadd.f32 %v485, %v1137
  %1139 = vmatprep.mubr.f32.mxu0 0.0
  %1140 = vmatmul.mubr.f32.gmra.mrb[0].mxu0 %v36
  %v1141 = vpop.f32.mrb[0].mxu0
  %v1142 = vadd.f32 %v489, %v1141
  %v1143 = vpop.f32.mrb[0].mxu0
  %v1144 = vadd.f32 %v491, %v1143
  %1145 = vmatprep.mubr.f32.mxu0 0.0
  %1146 = vmatmul.mubr.f32.gmra.mrb[0].mxu0 %v37
  %v1147 = vpop.f32.mrb[0].mxu0
  %v1148 = vadd.f32 %v495, %v1147
  %v1149 = vpop.f32.mrb[0].mxu0
  %v1150 = vadd.f32 %v497, %v1149
  %1151 = vmatprep.mubr.f32.mxu0 0.0
  %1152 = vmatmul.mubr.f32.gmra.mrb[0].mxu0 %v38
  %v1153 = vpop.f32.mrb[0].mxu0
  %v1154 = vadd.f32 %v501, %v1153
  %v1155 = vpop.f32.mrb[0].mxu0
  %v1156 = vadd.f32 %v503, %v1155
  %1157 = vmatprep.mubr.f32.mxu0 0.0
  %1158 = vmatmul.mubr.f32.gmra.mrb[0].mxu0 %v39
  %v1159 = vpop.f32.mrb[0].mxu0
  %v1160 = vadd.f32 %v507, %v1159
  %v1161 = vpop.f32.mrb[0].mxu0
  %v1162 = vadd.f32 %v509, %v1161
  %1163 = vmatprep.mubr.f32.mxu0 0.0
  %1164 = vmatmul.mubr.f32.gmra.mrb[0].mxu0 %v40
  %v1165 = vpop.f32.mrb[0].mxu0
  %v1166 = vadd.f32 %v513, %v1165
  %v1167 = vpop.f32.mrb[0].mxu0
  %v1168 = vadd.f32 %v515, %v1167
  %1169 = vmatprep.mubr.f32.mxu0 0.0
  %1170 = vmatmul.mubr.f32.gmra.mrb[0].mxu0 %v41
  %v1171 = vpop.f32.mrb[0].mxu0
  %v1172 = vadd.f32 %v519, %v1171
  %v1173 = vpop.f32.mrb[0].mxu0
  %v1174 = vadd.f32 %v521, %v1173
  %1175 = vmatprep.mubr.f32.mxu0 0.0
  %1176 = vmatmul.mubr.f32.gmra.mrb[0].mxu0 %v42
  %v1177 = vpop.f32.mrb[0].mxu0
  %v1178 = vadd.f32 %v525, %v1177
  %v1179 = vpop.f32.mrb[0].mxu0
  %v1180 = vadd.f32 %v527, %v1179
  %1181 = vmatprep.mubr.f32.mxu0 0.0
  %1182 = vmatmul.mubr.f32.gmra.mrb[0].mxu0 %v43
  %v1183 = vpop.f32.mrb[0].mxu0
  %v1184 = vadd.f32 %v531, %v1183
  %v1185 = vpop.f32.mrb[0].mxu0
  %v1186 = vadd.f32 %v533, %v1185
  %1187 = vmatprep.mubr.f32.mxu0 0.0
  %1188 = vmatmul.mubr.f32.gmra.mrb[0].mxu0 %v44
  %v1189 = vpop.f32.mrb[0].mxu0
  %v1190 = vadd.f32 %v537, %v1189
  %v1191 = vpop.f32.mrb[0].mxu0
  %v1192 = vadd.f32 %v539, %v1191
  %1193 = vmatprep.mubr.f32.mxu0 0.0
  %1194 = vmatmul.mubr.f32.gmra.mrb[0].mxu0 %v45
  %v1195 = vpop.f32.mrb[0].mxu0
  %v1196 = vadd.f32 %v543, %v1195
  %v1197 = vpop.f32.mrb[0].mxu0
  %v1198 = vadd.f32 %v545, %v1197
  %1199 = vmatprep.mubr.f32.mxu0 0.0
  %1200 = vmatmul.mubr.f32.gmra.mrb[0].mxu0 %v46
  %v1201 = vpop.f32.mrb[0].mxu0
  %v1202 = vadd.f32 %v549, %v1201
  %v1203 = vpop.f32.mrb[0].mxu0
  %v1204 = vadd.f32 %v551, %v1203
  %1205 = vmatprep.mubr.f32.mxu0 0.0
  %1206 = vmatmul.mubr.f32.gmra.mrb[0].mxu0 %v47
  %v1207 = vpop.f32.mrb[0].mxu0
  %v1208 = vadd.f32 %v555, %v1207
  %v1209 = vpop.f32.mrb[0].mxu0
  %v1210 = vadd.f32 %v557, %v1209
  %1211 = vmatprep.mubr.f32.mxu0 0.0
  %1212 = vmatmul.mubr.f32.gmra.mrb[0].mxu0 %v48
  %v1213 = vpop.f32.mrb[0].mxu0
  %v1214 = vadd.f32 %v561, %v1213
  %v1215 = vpop.f32.mrb[0].mxu0
  %v1216 = vadd.f32 %v563, %v1215
  %1217 = vmatprep.mubr.f32.mxu0 0.0
  %1218 = vmatmul.mubr.f32.gmra.mrb[0].mxu0 %v49
  %v1219 = vpop.f32.mrb[0].mxu0
  %v1220 = vadd.f32 %v567, %v1219
  %v1221 = vpop.f32.mrb[0].mxu0
  %v1222 = vadd.f32 %v569, %v1221
  %1223 = vmatprep.mubr.f32.mxu0 0.0
  %1224 = vmatmul.mubr.f32.gmra.mrb[0].mxu0 %v50
  %v1225 = vpop.f32.mrb[0].mxu0
  %v1226 = vadd.f32 %v573, %v1225
  %v1227 = vpop.f32.mrb[0].mxu0
  %v1228 = vadd.f32 %v575, %v1227
  %1229 = vmatprep.mubr.f32.mxu0 0.0
  %1230 = vmatmul.mubr.f32.gmra.mrb[0].mxu0 %v51
  %v1231 = vpop.f32.mrb[0].mxu0
  %v1232 = vadd.f32 %v579, %v1231
  %v1233 = vpop.f32.mrb[0].mxu0
  %v1234 = vadd.f32 %v581, %v1233
  %1235 = vmatprep.mubr.f32.mxu0 0.0
  %1236 = vmatmul.mubr.f32.gmra.mrb[0].mxu0 %v52
  %v1237 = vpop.f32.mrb[0].mxu0
  %v1238 = vadd.f32 %v585, %v1237
  %v1239 = vpop.f32.mrb[0].mxu0
  %v1240 = vadd.f32 %v587, %v1239
  %1241 = vmatprep.mubr.f32.mxu0 0.0
  %1242 = vmatmul.mubr.f32.gmra.mrb[0].mxu0 %v53
  %v1243 = vpop.f32.mrb[0].mxu0
  %v1244 = vadd.f32 %v591, %v1243
  %v1245 = vpop.f32.mrb[0].mxu0
  %v1246 = vadd.f32 %v593, %v1245
  %1247 = vmatprep.mubr.f32.mxu0 0.0
  %1248 = vmatmul.mubr.f32.gmra.mrb[0].mxu0 %v54
  %v1249 = vpop.f32.mrb[0].mxu0
  %v1250 = vadd.f32 %v597, %v1249
  %v1251 = vpop.f32.mrb[0].mxu0
  %v1252 = vadd.f32 %v599, %v1251
  %1253 = vmatprep.mubr.f32.mxu0 0.0
  %1254 = vmatmul.mubr.f32.gmra.mrb[0].mxu0 %v55
  %v1255 = vpop.f32.mrb[0].mxu0
  %v1256 = vadd.f32 %v603, %v1255
  %v1257 = vpop.f32.mrb[0].mxu0
  %v1258 = vadd.f32 %v605, %v1257
  %1259 = vmatprep.mubr.f32.mxu0 0.0
  %1260 = vmatmul.mubr.f32.gmra.mrb[0].mxu0 %v56
  %v1261 = vpop.f32.mrb[0].mxu0
  %v1262 = vadd.f32 %v609, %v1261
  %v1263 = vpop.f32.mrb[0].mxu0
  %v1264 = vadd.f32 %v611, %v1263
  %1265 = vmatprep.mubr.f32.mxu0 0.0
  %1266 = vmatmul.mubr.f32.gmra.mrb[0].mxu0 %v57
  %v1267 = vpop.f32.mrb[0].mxu0
  %v1268 = vadd.f32 %v615, %v1267
  %v1269 = vpop.f32.mrb[0].mxu0
  %v1270 = vadd.f32 %v617, %v1269
  %1271 = vmatprep.mubr.f32.mxu0 0.0
  %1272 = vmatmul.mubr.f32.gmra.mrb[0].mxu0 %v58
  %v1273 = vpop.f32.mrb[0].mxu0
  %v1274 = vadd.f32 %v621, %v1273
  %v1275 = vpop.f32.mrb[0].mxu0
  %v1276 = vadd.f32 %v623, %v1275
  %1277 = vmatprep.mubr.f32.mxu0 0.0
  %1278 = vmatmul.mubr.f32.gmra.mrb[0].mxu0 %v59
  %v1279 = vpop.f32.mrb[0].mxu0
  %v1280 = vadd.f32 %v627, %v1279
  %v1281 = vpop.f32.mrb[0].mxu0
  %v1282 = vadd.f32 %v629, %v1281
  %1283 = vmatprep.mubr.f32.mxu0 0.0
  %1284 = vmatmul.mubr.f32.gmra.mrb[0].mxu0 %v60
  %v1285 = vpop.f32.mrb[0].mxu0
  %v1286 = vadd.f32 %v633, %v1285
  %v1287 = vpop.f32.mrb[0].mxu0
  %v1288 = vadd.f32 %v635, %v1287
  %1289 = vmatprep.mubr.f32.mxu0 0.0
  %1290 = vmatmul.mubr.f32.gmra.mrb[0].mxu0 %v61
  %v1291 = vpop.f32.mrb[0].mxu0
  %v1292 = vadd.f32 %v639, %v1291
  %v1293 = vpop.f32.mrb[0].mxu0
  %v1294 = vadd.f32 %v641, %v1293
  %1295 = vmatprep.mubr.f32.mxu0 0.0
  %1296 = vmatmul.mubr.f32.gmra.mrb[0].mxu0 %v62
  %v1297 = vpop.f32.mrb[0].mxu0
  %v1298 = vadd.f32 %v645, %v1297
  %v1299 = vpop.f32.mrb[0].mxu0
  %v1300 = vadd.f32 %v647, %v1299
  %1301 = vmatprep.mubr.f32.mxu0 0.0
  %1302 = vmatmul.mubr.f32.gmra.mrb[0].mxu0 %v63
  %v1303 = vpop.f32.mrb[0].mxu0
  %v1304 = vadd.f32 %v651, %v1303
  %v1305 = vpop.f32.mrb[0].mxu0
  %v1306 = vadd.f32 %v653, %v1305
  %1307 = vmatprep.mubr.f32.mxu0 0.0
  %1308 = vmatmul.mubr.f32.gmra.mrb[0].mxu0 %v64
  %v1309 = vpop.f32.mrb[0].mxu0
  %v1310 = vadd.f32 %v657, %v1309
  %v1311 = vpop.f32.mrb[0].mxu0
  %v1312 = vadd.f32 %v659, %v1311
  %1313 = vmatprep.mubr.f32.mxu0 0.0
  %1314 = vmatmul.mubr.f32.gmra.mrb[0].mxu0 %v65
  %v1315 = vpop.f32.mrb[0].mxu0
  %v1316 = vadd.f32 %v663, %v1315
  %v1317 = vpop.f32.mrb[0].mxu0
  %v1318 = vadd.f32 %v665, %v1317
  %1319 = vmatprep.mubr.f32.mxu0 0.0
  %1320 = vmatmul.mubr.f32.gmra.mrb[0].mxu0 %v66
  %v1321 = vpop.f32.mrb[0].mxu0
  %v1322 = vadd.f32 %v669, %v1321
  %v1323 = vpop.f32.mrb[0].mxu0
  %v1324 = vadd.f32 %v671, %v1323
  %1325 = vmatprep.mubr.f32.mxu0 0.0
  %1326 = vmatmul.mubr.f32.gmra.mrb[0].mxu0 %v67
  %v1327 = vpop.f32.mrb[0].mxu0
  %v1328 = vadd.f32 %v675, %v1327
  %v1329 = vpop.f32.mrb[0].mxu0
  %v1330 = vadd.f32 %v677, %v1329
  %1331 = vmatprep.mubr.f32.mxu0 0.0
  %1332 = vmatmul.mubr.f32.gmra.mrb[0].mxu0 %v68
  %v1333 = vpop.f32.mrb[0].mxu0
  %v1334 = vadd.f32 %v681, %v1333
  %v1335 = vpop.f32.mrb[0].mxu0
  %v1336 = vadd.f32 %v683, %v1335
  %1337 = vmatprep.mubr.f32.mxu0 0.0
  %1338 = vmatmul.mubr.f32.gmra.mrb[0].mxu0 %v69
  %v1339 = vpop.f32.mrb[0].mxu0
  %v1340 = vadd.f32 %v687, %v1339
  %v1341 = vpop.f32.mrb[0].mxu0
  %v1342 = vadd.f32 %v689, %v1341
  %1343 = vmatprep.mubr.f32.mxu0 0.0
  %1344 = vmatmul.mubr.f32.gmra.mrb[0].mxu0 %v70
  %v1345 = vpop.f32.mrb[0].mxu0
  %v1346 = vadd.f32 %v693, %v1345
  %v1347 = vpop.f32.mrb[0].mxu0
  %v1348 = vadd.f32 %v695, %v1347
  %1349 = vmatprep.mubr.f32.mxu0 0.0
  %1350 = vmatmul.mubr.f32.gmra.mrb[0].mxu0 %v71
  %v1351 = vpop.f32.mrb[0].mxu0
  %v1352 = vadd.f32 %v699, %v1351
  %v1353 = vpop.f32.mrb[0].mxu0
  %v1354 = vadd.f32 %v701, %v1353
  %1355 = vmatprep.mubr.f32.mxu0 0.0
  %1356 = vmatmul.mubr.f32.gmra.mrb[0].mxu0 %v72
  %v1357 = vpop.f32.mrb[0].mxu0
  %v1358 = vadd.f32 %v705, %v1357
  %v1359 = vpop.f32.mrb[0].mxu0
  %v1360 = vadd.f32 %v707, %v1359
  %1361 = vmatprep.mubr.f32.mxu0 0.0
  %1362 = vmatmul.mubr.f32.gmra.mrb[0].mxu0 %v73
  %v1363 = vpop.f32.mrb[0].mxu0
  %v1364 = vadd.f32 %v711, %v1363
  %v1365 = vpop.f32.mrb[0].mxu0
  %v1366 = vadd.f32 %v713, %v1365
  %1367 = vmatprep.mubr.f32.mxu0 0.0
  %1368 = vmatmul.mubr.f32.gmra.mrb[0].mxu0 %v74
  %v1369 = vpop.f32.mrb[0].mxu0
  %v1370 = vadd.f32 %v717, %v1369
  %v1371 = vpop.f32.mrb[0].mxu0
  %v1372 = vadd.f32 %v719, %v1371
  %1373 = vmatprep.mubr.f32.mxu0 0.0
  %1374 = vmatmul.mubr.f32.gmra.mrb[0].mxu0 %v75
  %v1375 = vpop.f32.mrb[0].mxu0
  %v1376 = vadd.f32 %v723, %v1375
  %v1377 = vpop.f32.mrb[0].mxu0
  %v1378 = vadd.f32 %v725, %v1377
  %1379 = vmatprep.mubr.f32.mxu0 0.0
  %1380 = vmatmul.mubr.f32.gmra.mrb[0].mxu0 %v76
  %v1381 = vpop.f32.mrb[0].mxu0
  %v1382 = vadd.f32 %v729, %v1381
  %v1383 = vpop.f32.mrb[0].mxu0
  %v1384 = vadd.f32 %v731, %v1383
  %1385 = vmatprep.mubr.f32.mxu0 0.0
  %1386 = vmatmul.mubr.f32.gmra.mrb[0].mxu0 %v77
  %v1387 = vpop.f32.mrb[0].mxu0
  %v1388 = vadd.f32 %v735, %v1387
  %v1389 = vpop.f32.mrb[0].mxu0
  %v1390 = vadd.f32 %v737, %v1389
  %1391 = vmatprep.mubr.f32.mxu0 0.0
  %1392 = vmatmul.mubr.f32.gmra.mrb[0].mxu0 %v78
  %v1393 = vpop.f32.mrb[0].mxu0
  %v1394 = vadd.f32 %v741, %v1393
  %v1395 = vpop.f32.mrb[0].mxu0
  %v1396 = vadd.f32 %v743, %v1395
  %1397 = vmatprep.mubr.f32.mxu0 0.0
  %1398 = vmatmul.mubr.f32.gmra.mrb[0].mxu0 %v79
  %v1399 = vpop.f32.mrb[0].mxu0
  %v1400 = vadd.f32 %v747, %v1399
  %v1401 = vpop.f32.mrb[0].mxu0
  %v1402 = vadd.f32 %v749, %v1401
  %1403 = vmatprep.mubr.f32.mxu0 0.0
  %1404 = vmatmul.mubr.f32.gmra.mrb[0].mxu0 %v80
  %v1405 = vpop.f32.mrb[0].mxu0
  %v1406 = vadd.f32 %v753, %v1405
  %v1407 = vpop.f32.mrb[0].mxu0
  %v1408 = vadd.f32 %v755, %v1407
  %1409 = vmatprep.mubr.f32.mxu0 0.0
  %1410 = vmatmul.mubr.f32.gmra.mrb[0].mxu0 %v81
  %v1411 = vpop.f32.mrb[0].mxu0
  %v1412 = vadd.f32 %v759, %v1411
  %v1413 = vpop.f32.mrb[0].mxu0
  %v1414 = vadd.f32 %v761, %v1413
  %1415 = vmatprep.mubr.f32.mxu0 0.0
  %1416 = vmatmul.mubr.f32.gmra.mrb[0].mxu0 %v82
  %v1417 = vpop.f32.mrb[0].mxu0
  %v1418 = vadd.f32 %v765, %v1417
  %v1419 = vpop.f32.mrb[0].mxu0
  %v1420 = vadd.f32 %v767, %v1419
  %1421 = vmatprep.mubr.f32.mxu0 0.0
  %1422 = vmatmul.mubr.f32.gmra.mrb[0].mxu0 %v83
  %v1423 = vpop.f32.mrb[0].mxu0
  %v1424 = vadd.f32 %v771, %v1423
  %v1425 = vpop.f32.mrb[0].mxu0
  %v1426 = vadd.f32 %v773, %v1425
  %1427 = vmatprep.mubr.f32.mxu0 0.0
  %1428 = vmatmul.mubr.f32.gmra.mrb[0].mxu0 %v84
  %v1429 = vpop.f32.mrb[0].mxu0
  %v1430 = vadd.f32 %v777, %v1429
  %v1431 = vpop.f32.mrb[0].mxu0
  %v1432 = vadd.f32 %v779, %v1431
  %1433 = vmatprep.mubr.f32.mxu0 0.0
  %1434 = vmatmul.mubr.f32.gmra.mrb[0].mxu0 %v85
  %v1435 = vpop.f32.mrb[0].mxu0
  %v1436 = vadd.f32 %v783, %v1435
  %v1437 = vpop.f32.mrb[0].mxu0
  %v1438 = vadd.f32 %v785, %v1437
  %1439 = vmatprep.mubr.f32.mxu0 0.0
  %1440 = vmatmul.mubr.f32.gmra.mrb[0].mxu0 %v86
  %v1441 = vpop.f32.mrb[0].mxu0
  %v1442 = vadd.f32 %v789, %v1441
  %v1443 = vpop.f32.mrb[0].mxu0
  %v1444 = vadd.f32 %v791, %v1443
  %1445 = vmatprep.mubr.f32.mxu0 0.0
  %1446 = vmatmul.mubr.f32.gmra.mrb[0].mxu0 %v87
  %v1447 = vpop.f32.mrb[0].mxu0
  %v1448 = vadd.f32 %v795, %v1447
  %v1449 = vpop.f32.mrb[0].mxu0
  %v1450 = vadd.f32 %v797, %v1449
  %1451 = vmatprep.mubr.f32.mxu0 0.0
  %1452 = vmatmul.mubr.f32.gmra.mrb[0].mxu0 %v88
  %v1453 = vpop.f32.mrb[0].mxu0
  %v1454 = vadd.f32 %v801, %v1453
  %v1455 = vpop.f32.mrb[0].mxu0
  %v1456 = vadd.f32 %v803, %v1455
  %1457 = vmatprep.mubr.f32.mxu0 0.0
  %1458 = vmatmul.mubr.f32.gmra.mrb[0].mxu0 %v89
  %v1459 = vpop.f32.mrb[0].mxu0
  %v1460 = vadd.f32 %v807, %v1459
  %v1461 = vpop.f32.mrb[0].mxu0
  %v1462 = vadd.f32 %v809, %v1461
  %1463 = vmatprep.mubr.f32.mxu0 0.0
  %1464 = vmatmul.mubr.f32.gmra.mrb[0].mxu0 %v90
  %v1465 = vpop.f32.mrb[0].mxu0
  %v1466 = vadd.f32 %v813, %v1465
  %v1467 = vpop.f32.mrb[0].mxu0
  %v1468 = vadd.f32 %v815, %v1467
  %1469 = vmatprep.mubr.f32.mxu0 0.0
  %1470 = vmatmul.mubr.f32.gmra.mrb[0].mxu0 %v91
  %v1471 = vpop.f32.mrb[0].mxu0
  %v1472 = vadd.f32 %v819, %v1471
  %v1473 = vpop.f32.mrb[0].mxu0
  %v1474 = vadd.f32 %v821, %v1473
  %1475 = vmatprep.mubr.f32.mxu0 0.0
  %1476 = vmatmul.mubr.f32.gmra.mrb[0].mxu0 %v92
  %v1477 = vpop.f32.mrb[0].mxu0
  %v1478 = vadd.f32 %v825, %v1477
  %v1479 = vpop.f32.mrb[0].mxu0
  %v1480 = vadd.f32 %v827, %v1479
  %1481 = vmatprep.mubr.f32.mxu0 0.0
  %1482 = vmatmul.mubr.f32.gmra.mrb[0].mxu0 %v93
  %v1483 = vpop.f32.mrb[0].mxu0
  %v1484 = vadd.f32 %v831, %v1483
  %v1485 = vpop.f32.mrb[0].mxu0
  %v1486 = vadd.f32 %v833, %v1485
  %1487 = vmatprep.mubr.f32.mxu0 0.0
  %1488 = vmatmul.mubr.f32.gmra.mrb[0].mxu0 %v94
  %v1489 = vpop.f32.mrb[0].mxu0
  %v1490 = vadd.f32 %v837, %v1489
  %v1491 = vpop.f32.mrb[0].mxu0
  %v1492 = vadd.f32 %v839, %v1491
  %1493 = vmatprep.mubr.f32.mxu0 0.0
  %1494 = vmatmul.mubr.f32.gmra.mrb[0].mxu0 %v95
  %v1495 = vpop.f32.mrb[0].mxu0
  %v1496 = vadd.f32 %v843, %v1495
  %v1497 = vpop.f32.mrb[0].mxu0
  %v1498 = vadd.f32 %v845, %v1497
  %1499 = vmatprep.mubr.f32.mxu0 0.0
  %1500 = vmatmul.mubr.f32.gmra.mrb[0].mxu0 %v96
  %v1501 = vpop.f32.mrb[0].mxu0
  %v1502 = vadd.f32 %v849, %v1501
  %v1503 = vpop.f32.mrb[0].mxu0
  %v1504 = vadd.f32 %v851, %v1503
  %1505 = vmatprep.mubr.f32.mxu0 0.0
  %1506 = vmatmul.mubr.f32.gmra.mrb[0].mxu0 %v97
  %v1507 = vpop.f32.mrb[0].mxu0
  %v1508 = vadd.f32 %v855, %v1507
  %v1509 = vpop.f32.mrb[0].mxu0
  %v1510 = vadd.f32 %v857, %v1509
  %1511 = vmatprep.mubr.f32.mxu0 0.0
  %1512 = vmatmul.mubr.f32.gmra.mrb[0].mxu0 %v98
  %v1513 = vpop.f32.mrb[0].mxu0
  %v1514 = vadd.f32 %v861, %v1513
  %v1515 = vpop.f32.mrb[0].mxu0
  %v1516 = vadd.f32 %v863, %v1515
  %1517 = vmatprep.mubr.f32.mxu0 0.0
  %1518 = vmatmul.mubr.f32.gmra.mrb[0].mxu0 %v99
  %v1519 = vpop.f32.mrb[0].mxu0
  %v1520 = vadd.f32 %v867, %v1519
  %v1521 = vpop.f32.mrb[0].mxu0
  %v1522 = vadd.f32 %v869, %v1521
  %1523 = vmatprep.mubr.f32.mxu0 0.0
  %1524 = vmatmul.mubr.f32.gmra.mrb[0].mxu0 %v100
  %v1525 = vpop.f32.mrb[0].mxu0
  %v1526 = vadd.f32 %v873, %v1525
  %v1527 = vpop.f32.mrb[0].mxu0
  %v1528 = vadd.f32 %v875, %v1527
  %1529 = vmatprep.mubr.f32.mxu0 0.0
  %1530 = vmatmul.mubr.f32.gmra.mrb[0].mxu0 %v101
  %v1531 = vpop.f32.mrb[0].mxu0
  %v1532 = vadd.f32 %v879, %v1531
  %v1533 = vpop.f32.mrb[0].mxu0
  %v1534 = vadd.f32 %v881, %v1533
  %1535 = vmatprep.mubr.f32.mxu0 0.0
  %1536 = vmatmul.mubr.f32.gmra.mrb[0].mxu0 %v102
  %v1537 = vpop.f32.mrb[0].mxu0
  %v1538 = vadd.f32 %v885, %v1537
  %v1539 = vpop.f32.mrb[0].mxu0
  %v1540 = vadd.f32 %v887, %v1539
  %1541 = vmatprep.mubr.f32.mxu0 0.0
  %1542 = vmatmul.mubr.f32.gmra.mrb[0].mxu0 %v103
  %v1543 = vpop.f32.mrb[0].mxu0
  %v1544 = vadd.f32 %v891, %v1543
  %v1545 = vpop.f32.mrb[0].mxu0
  %v1546 = vadd.f32 %v893, %v1545
  %1547 = vmatprep.mubr.f32.mxu0 0.0
  %1548 = vmatmul.mubr.f32.gmra.mrb[0].mxu0 %v104
  %v1549 = vpop.f32.mrb[0].mxu0
  %v1550 = vadd.f32 %v897, %v1549
  %v1551 = vpop.f32.mrb[0].mxu0
  %v1552 = vadd.f32 %v899, %v1551
  %1553 = vmatprep.mubr.f32.mxu0 0.0
  %1554 = vmatmul.mubr.f32.gmra.mrb[0].mxu0 %v105
  %v1555 = vpop.f32.mrb[0].mxu0
  %v1556 = vadd.f32 %v903, %v1555
  %v1557 = vpop.f32.mrb[0].mxu0
  %v1558 = vadd.f32 %v905, %v1557
  %1559 = vmatprep.mubr.f32.mxu0 0.0
  %1560 = vmatmul.mubr.f32.gmra.mrb[0].mxu0 %v106
  %v1561 = vpop.f32.mrb[0].mxu0
  %v1562 = vadd.f32 %v909, %v1561
  %v1563 = vpop.f32.mrb[0].mxu0
  %v1564 = vadd.f32 %v911, %v1563
  %1565 = vmatprep.mubr.f32.mxu0 0.0
  %1566 = vmatmul.mubr.f32.gmra.mrb[0].mxu0 %v107
  %v1567 = vpop.f32.mrb[0].mxu0
  %v1568 = vadd.f32 %v915, %v1567
  %v1569 = vpop.f32.mrb[0].mxu0
  %v1570 = vadd.f32 %v917, %v1569
  %1571 = vmatprep.mubr.f32.mxu0 0.0
  %1572 = vmatmul.mubr.f32.gmra.mrb[0].mxu0 %v108
  %v1573 = vpop.f32.mrb[0].mxu0
  %v1574 = vadd.f32 %v921, %v1573
  %v1575 = vpop.f32.mrb[0].mxu0
  %v1576 = vadd.f32 %v923, %v1575
  %1577 = vdwg.mxu0
  %v1578 = vld [vmem:[%s0 + $0x38] sm:$0xff]
  %v1579 = vld [vmem:[%s0 + $0x40] sm:$0xff]
  %v1580 = vld [vmem:[%s0 + $0x48] sm:$0xff]
  %v1581 = vld [vmem:[%s0 + $0x50] sm:$0xff]
  %v1582 = vld [vmem:[%s0 + $0x58] sm:$0xff]
  %v1583 = vld [vmem:[%s0 + $0x60] sm:$0xff]
  %v1584 = vld [vmem:[%s0 + $0x68] sm:$0xff]
  %v1585 = vld [vmem:[%s0 + $0x70] sm:$0xff]
  %v1586 = vld [vmem:[%s0 + $0x78] sm:$0xff]
  %v1587 = vld [vmem:[%s0 + $0x80] sm:$0xff]
  %v1588 = vld [vmem:[%s0 + $0x88] sm:$0xff]
  %v1589 = vld [vmem:[%s0 + $0x90] sm:$0xff]
  %v1590 = vld [vmem:[%s0 + $0x98] sm:$0xff]
  %v1591 = vld [vmem:[%s0 + $0xa0] sm:$0xff]
  %v1592 = vld [vmem:[%s0 + $0xa8] sm:$0xff]
  %v1593 = vld [vmem:[%s0 + $0xb0] sm:$0xff]
  %v1594 = vld [vmem:[%s0 + $0xb8] sm:$0xff]
  %v1595 = vld [vmem:[%s0 + $0xc0] sm:$0xff]
  %v1596 = vld [vmem:[%s0 + $0xc8] sm:$0xff]
  %v1597 = vld [vmem:[%s0 + $0xd0] sm:$0xff]
  %v1598 = vld [vmem:[%s0 + $0xd8] sm:$0xff]
  %v1599 = vld [vmem:[%s0 + $0xe0] sm:$0xff]
  %v1600 = vld [vmem:[%s0 + $0xe8] sm:$0xff]
  %v1601 = vld [vmem:[%s0 + $0xf0] sm:$0xff]
  %v1602 = vld [vmem:[%s0 + $0xf8] sm:$0xff]
  %v1603 = vld [vmem:[%s0 + $0x100] sm:$0xff]
  %v1604 = vld [vmem:[%s0 + $0x108] sm:$0xff]
  %v1605 = vld [vmem:[%s0 + $0x110] sm:$0xff]
  %v1606 = vld [vmem:[%s0 + $0x118] sm:$0xff]
  %v1607 = vld [vmem:[%s0 + $0x120] sm:$0xff]
  %v1608 = vld [vmem:[%s0 + $0x128] sm:$0xff]
  %v1609 = vld [vmem:[%s0 + $0x130] sm:$0xff]
  %v1610 = vld [vmem:[%s0 + $0x138] sm:$0xff]
  %v1611 = vld [vmem:[%s0 + $0x140] sm:$0xff]
  %v1612 = vld [vmem:[%s0 + $0x148] sm:$0xff]
  %v1613 = vld [vmem:[%s0 + $0x150] sm:$0xff]
  %v1614 = vld [vmem:[%s0 + $0x158] sm:$0xff]
  %v1615 = vld [vmem:[%s0 + $0x160] sm:$0xff]
  %v1616 = vld [vmem:[%s0 + $0x168] sm:$0xff]
  %v1617 = vld [vmem:[%s0 + $0x170] sm:$0xff]
  %v1618 = vld [vmem:[%s0 + $0x178] sm:$0xff]
  %v1619 = vld [vmem:[%s0 + $0x180] sm:$0xff]
  %v1620 = vld [vmem:[%s0 + $0x188] sm:$0xff]
  %v1621 = vld [vmem:[%s0 + $0x190] sm:$0xff]
  %v1622 = vld [vmem:[%s0 + $0x198] sm:$0xff]
  %v1623 = vld [vmem:[%s0 + $0x1a0] sm:$0xff]
  %v1624 = vld [vmem:[%s0 + $0x1a8] sm:$0xff]
  %v1625 = vld [vmem:[%s0 + $0x1b0] sm:$0xff]
  %v1626 = vld [vmem:[%s0 + $0x1b8] sm:$0xff]
  %v1627 = vld [vmem:[%s0 + $0x1c0] sm:$0xff]
  %v1628 = vld [vmem:[%s0 + $0x1c8] sm:$0xff]
  %v1629 = vld [vmem:[%s0 + $0x1d0] sm:$0xff]
  %v1630 = vld [vmem:[%s0 + $0x1d8] sm:$0xff]
  %v1631 = vld [vmem:[%s0 + $0x1e0] sm:$0xff]
  %v1632 = vld [vmem:[%s0 + $0x1e8] sm:$0xff]
  %v1633 = vld [vmem:[%s0 + $0x1f0] sm:$0xff]
  %v1634 = vld [vmem:[%s0 + $0x1f8] sm:$0xff]
  %v1635 = vld [vmem:[%s0 + $0x200] sm:$0xff]
  %v1636 = vld [vmem:[%s0 + $0x208] sm:$0xff]
  %v1637 = vld [vmem:[%s0 + $0x210] sm:$0xff]
  %v1638 = vld [vmem:[%s0 + $0x218] sm:$0xff]
  %v1639 = vld [vmem:[%s0 + $0x220] sm:$0xff]
  %v1640 = vld [vmem:[%s0 + $0x228] sm:$0xff]
  %v1641 = vld [vmem:[%s0 + $0x230] sm:$0xff]
  %v1642 = vld [vmem:[%s0 + $0x238] sm:$0xff]
  %v1643 = vld [vmem:[%s0 + $0x240] sm:$0xff]
  %v1644 = vld [vmem:[%s0 + $0x248] sm:$0xff]
  %v1645 = vld [vmem:[%s0 + $0x250] sm:$0xff]
  %v1646 = vld [vmem:[%s0 + $0x258] sm:$0xff]
  %v1647 = vld [vmem:[%s0 + $0x260] sm:$0xff]
  %v1648 = vld [vmem:[%s0 + $0x268] sm:$0xff]
  %v1649 = vld [vmem:[%s0 + $0x270] sm:$0xff]
  %v1650 = vld [vmem:[%s0 + $0x278] sm:$0xff]
  %v1651 = vld [vmem:[%s0 + $0x280] sm:$0xff]
  %v1652 = vld [vmem:[%s0 + $0x288] sm:$0xff]
  %v1653 = vld [vmem:[%s0 + $0x290] sm:$0xff]
  %v1654 = vld [vmem:[%s0 + $0x298] sm:$0xff]
  %v1655 = vld [vmem:[%s0 + $0x2a0] sm:$0xff]
  %v1656 = vld [vmem:[%s0 + $0x2a8] sm:$0xff]
  %v1657 = vld [vmem:[%s0 + $0x2b0] sm:$0xff]
  %v1658 = vld [vmem:[%s0 + $0x2b8] sm:$0xff]
  %v1659 = vld [vmem:[%s0 + $0x2c0] sm:$0xff]
  %v1660 = vld [vmem:[%s0 + $0x2c8] sm:$0xff]
  %v1661 = vld [vmem:[%s0 + $0x2d0] sm:$0xff]
  %v1662 = vld [vmem:[%s0 + $0x2d8] sm:$0xff]
  %v1663 = vld [vmem:[%s0 + $0x2e0] sm:$0xff]
  %v1664 = vld [vmem:[%s0 + $0x2e8] sm:$0xff]
  %v1665 = vld [vmem:[%s0 + $0x2f0] sm:$0xff]
  %v1666 = vld [vmem:[%s0 + $0x2f8] sm:$0xff]
  %v1667 = vld [vmem:[%s0 + $0x300] sm:$0xff]
  %v1668 = vld [vmem:[%s0 + $0x308] sm:$0xff]
  %v1669 = vld [vmem:[%s0 + $0x310] sm:$0xff]
  %v1670 = vld [vmem:[%s0 + $0x318] sm:$0xff]
  %v1671 = vld [vmem:[%s0 + $0x320] sm:$0xff]
  %v1672 = vld [vmem:[%s0 + $0x328] sm:$0xff]
  %v1673 = vld [vmem:[%s0 + $0x330] sm:$0xff]
  %v1674 = vld [vmem:[%s0 + $0x338] sm:$0xff]
  %v1675 = vld [vmem:[%s0 + $0x340] sm:$0xff]
  %s1676 = scalar_lea.vmem %s1, 512
  %v1677 = vld [vmem:[%s1676] sm:$0xff]
  %v1678 = vld [vmem:[%s1676 + $0x8] sm:$0xff]
  %v1679 = vld [vmem:[%s1676 + $0x10] sm:$0xff]
  %v1680 = vld [vmem:[%s1676 + $0x18] sm:$0xff]
  %v1681 = vld [vmem:[%s1676 + $0x20] sm:$0xff]
  %v1682 = vld [vmem:[%s1676 + $0x28] sm:$0xff]
  %v1683 = vld [vmem:[%s1676 + $0x30] sm:$0xff]
  %v1684 = vld [vmem:[%s1676 + $0x38] sm:$0xff]
  %v1685 = vld [vmem:[%s1676 + $0x40] sm:$0xff]
  %v1686 = vld [vmem:[%s1676 + $0x48] sm:$0xff]
  %v1687 = vld [vmem:[%s1676 + $0x50] sm:$0xff]
  %v1688 = vld [vmem:[%s1676 + $0x58] sm:$0xff]
  %v1689 = vld [vmem:[%s1676 + $0x60] sm:$0xff]
  %v1690 = vld [vmem:[%s1676 + $0x68] sm:$0xff]
  %v1691 = vld [vmem:[%s1676 + $0x70] sm:$0xff]
  %v1692 = vld [vmem:[%s1676 + $0x78] sm:$0xff]
  %v1693 = vld [vmem:[%s1676 + $0x80] sm:$0xff]
  %v1694 = vld [vmem:[%s1676 + $0x88] sm:$0xff]
  %v1695 = vld [vmem:[%s1676 + $0x90] sm:$0xff]
  %v1696 = vld [vmem:[%s1676 + $0x98] sm:$0xff]
  %v1697 = vld [vmem:[%s1676 + $0xa0] sm:$0xff]
  %v1698 = vld [vmem:[%s1676 + $0xa8] sm:$0xff]
  %v1699 = vld [vmem:[%s1676 + $0xb0] sm:$0xff]
  %v1700 = vld [vmem:[%s1676 + $0xb8] sm:$0xff]
  %v1701 = vld [vmem:[%s1676 + $0xc0] sm:$0xff]
  %v1702 = vld [vmem:[%s1676 + $0xc8] sm:$0xff]
  %v1703 = vld [vmem:[%s1676 + $0xd0] sm:$0xff]
  %v1704 = vld [vmem:[%s1676 + $0xd8] sm:$0xff]
  %v1705 = vld [vmem:[%s1676 + $0xe0] sm:$0xff]
  %v1706 = vld [vmem:[%s1676 + $0xe8] sm:$0xff]
  %v1707 = vld [vmem:[%s1676 + $0xf0] sm:$0xff]
  %v1708 = vld [vmem:[%s1676 + $0xf8] sm:$0xff]
  %1709 = vmatprep.subr.mxu0 %v1678
  %1710 = vmatpush1.msra.mxu0 %v1677
  %1711 = vmatprep.subr.mxu0 %v1680
  %1712 = vmatpush1.msra.mxu0 %v1679
  %1713 = vmatprep.subr.mxu0 %v1682
  %1714 = vmatpush1.msra.mxu0 %v1681
  %1715 = vmatprep.subr.mxu0 %v1684
  %1716 = vmatpush1.msra.mxu0 %v1683
  %1717 = vmatprep.subr.mxu0 %v1686
  %1718 = vmatpush1.msra.mxu0 %v1685
  %1719 = vmatprep.subr.mxu0 %v1688
  %1720 = vmatpush1.msra.mxu0 %v1687
  %1721 = vmatprep.subr.mxu0 %v1690
  %1722 = vmatpush1.msra.mxu0 %v1689
  %1723 = vmatprep.subr.mxu0 %v1692
  %1724 = vmatpush1.msra.mxu0 %v1691
  %1725 = vmatprep.subr.mxu0 %v1694
  %1726 = vmatpush1.msra.mxu0 %v1693
  %1727 = vmatprep.subr.mxu0 %v1696
  %1728 = vmatpush1.msra.mxu0 %v1695
  %1729 = vmatprep.subr.mxu0 %v1698
  %1730 = vmatpush1.msra.mxu0 %v1697
  %1731 = vmatprep.subr.mxu0 %v1700
  %1732 = vmatpush1.msra.mxu0 %v1699
  %1733 = vmatprep.subr.mxu0 %v1702
  %1734 = vmatpush1.msra.mxu0 %v1701
  %1735 = vmatprep.subr.mxu0 %v1704
  %1736 = vmatpush1.msra.mxu0 %v1703
  %1737 = vmatprep.subr.mxu0 %v1706
  %1738 = vmatpush1.msra.mxu0 %v1705
  %1739 = vmatprep.subr.mxu0 %v1708
  %1740 = vmatpush1.msra.mxu0 %v1707
  %1741 = vmatprep.subr.mxu0 0.0
  %1742 = vmatpush1.msra.mxu0 0.0
  %1743 = vmatprep.subr.mxu0 0.0
  %1744 = vmatpush1.msra.mxu0 0.0
  %1745 = vmatprep.subr.mxu0 0.0
  %1746 = vmatpush1.msra.mxu0 0.0
  %1747 = vmatprep.subr.mxu0 0.0
  %1748 = vmatpush1.msra.mxu0 0.0
  %1749 = vmatprep.subr.mxu0 0.0
  %1750 = vmatpush1.msra.mxu0 0.0
  %1751 = vmatprep.subr.mxu0 0.0
  %1752 = vmatpush1.msra.mxu0 0.0
  %1753 = vmatprep.subr.mxu0 0.0
  %1754 = vmatpush1.msra.mxu0 0.0
  %1755 = vmatprep.subr.mxu0 0.0
  %1756 = vmatpush1.msra.mxu0 0.0
  %1757 = vmatprep.subr.mxu0 0.0
  %1758 = vmatpush1.msra.mxu0 0.0
  %1759 = vmatprep.subr.mxu0 0.0
  %1760 = vmatpush1.msra.mxu0 0.0
  %1761 = vmatprep.subr.mxu0 0.0
  %1762 = vmatpush1.msra.mxu0 0.0
  %1763 = vmatprep.subr.mxu0 0.0
  %1764 = vmatpush1.msra.mxu0 0.0
  %1765 = vmatprep.subr.mxu0 0.0
  %1766 = vmatpush1.msra.mxu0 0.0
  %1767 = vmatprep.subr.mxu0 0.0
  %1768 = vmatpush1.msra.mxu0 0.0
  %1769 = vmatprep.subr.mxu0 0.0
  %1770 = vmatpush1.msra.mxu0 0.0
  %1771 = vmatprep.subr.mxu0 0.0
  %1772 = vmatpush1.msra.mxu0 0.0
  %1773 = vmatprep.mubr.f32.mxu0 0.0
  %1774 = vmatmul.mubr.f32.gmra.mrb[0].mxu0 %v1578
  %v1775 = vpop.f32.mrb[0].mxu0
  %v1776 = vadd.f32 0.0, %v1775
  %v1777 = vpop.f32.mrb[0].mxu0
  %v1778 = vadd.f32 0.0, %v1777
  %1779 = vmatprep.mubr.f32.mxu0 0.0
  %1780 = vmatmul.mubr.f32.gmra.mrb[0].mxu0 %v1579
  %v1781 = vpop.f32.mrb[0].mxu0
  %v1782 = vadd.f32 0.0, %v1781
  %v1783 = vpop.f32.mrb[0].mxu0
  %v1784 = vadd.f32 0.0, %v1783
  %1785 = vmatprep.mubr.f32.mxu0 0.0
  %1786 = vmatmul.mubr.f32.gmra.mrb[0].mxu0 %v1580
  %v1787 = vpop.f32.mrb[0].mxu0
  %v1788 = vadd.f32 0.0, %v1787
  %v1789 = vpop.f32.mrb[0].mxu0
  %v1790 = vadd.f32 0.0, %v1789
  %1791 = vmatprep.mubr.f32.mxu0 0.0
  %1792 = vmatmul.mubr.f32.gmra.mrb[0].mxu0 %v1581
  %v1793 = vpop.f32.mrb[0].mxu0
  %v1794 = vadd.f32 0.0, %v1793
  %v1795 = vpop.f32.mrb[0].mxu0
  %v1796 = vadd.f32 0.0, %v1795
  %1797 = vmatprep.mubr.f32.mxu0 0.0
  %1798 = vmatmul.mubr.f32.gmra.mrb[0].mxu0 %v1582
  %v1799 = vpop.f32.mrb[0].mxu0
  %v1800 = vadd.f32 0.0, %v1799
  %v1801 = vpop.f32.mrb[0].mxu0
  %v1802 = vadd.f32 0.0, %v1801
  %1803 = vmatprep.mubr.f32.mxu0 0.0
  %1804 = vmatmul.mubr.f32.gmra.mrb[0].mxu0 %v1583
  %v1805 = vpop.f32.mrb[0].mxu0
  %v1806 = vadd.f32 0.0, %v1805
  %v1807 = vpop.f32.mrb[0].mxu0
  %v1808 = vadd.f32 0.0, %v1807
  %1809 = vmatprep.mubr.f32.mxu0 0.0
  %1810 = vmatmul.mubr.f32.gmra.mrb[0].mxu0 %v1584
  %v1811 = vpop.f32.mrb[0].mxu0
  %v1812 = vadd.f32 0.0, %v1811
  %v1813 = vpop.f32.mrb[0].mxu0
  %v1814 = vadd.f32 0.0, %v1813
  %1815 = vmatprep.mubr.f32.mxu0 0.0
  %1816 = vmatmul.mubr.f32.gmra.mrb[0].mxu0 %v1585
  %v1817 = vpop.f32.mrb[0].mxu0
  %v1818 = vadd.f32 0.0, %v1817
  %v1819 = vpop.f32.mrb[0].mxu0
  %v1820 = vadd.f32 0.0, %v1819
  %1821 = vmatprep.mubr.f32.mxu0 0.0
  %1822 = vmatmul.mubr.f32.gmra.mrb[0].mxu0 %v1586
  %v1823 = vpop.f32.mrb[0].mxu0
  %v1824 = vadd.f32 0.0, %v1823
  %v1825 = vpop.f32.mrb[0].mxu0
  %v1826 = vadd.f32 0.0, %v1825
  %1827 = vmatprep.mubr.f32.mxu0 0.0
  %1828 = vmatmul.mubr.f32.gmra.mrb[0].mxu0 %v1587
  %v1829 = vpop.f32.mrb[0].mxu0
  %v1830 = vadd.f32 0.0, %v1829
  %v1831 = vpop.f32.mrb[0].mxu0
  %v1832 = vadd.f32 0.0, %v1831
  %1833 = vmatprep.mubr.f32.mxu0 0.0
  %1834 = vmatmul.mubr.f32.gmra.mrb[0].mxu0 %v1588
  %v1835 = vpop.f32.mrb[0].mxu0
  %v1836 = vadd.f32 0.0, %v1835
  %v1837 = vpop.f32.mrb[0].mxu0
  %v1838 = vadd.f32 0.0, %v1837
  %1839 = vmatprep.mubr.f32.mxu0 0.0
  %1840 = vmatmul.mubr.f32.gmra.mrb[0].mxu0 %v1589
  %v1841 = vpop.f32.mrb[0].mxu0
  %v1842 = vadd.f32 0.0, %v1841
  %v1843 = vpop.f32.mrb[0].mxu0
  %v1844 = vadd.f32 0.0, %v1843
  %1845 = vmatprep.mubr.f32.mxu0 0.0
  %1846 = vmatmul.mubr.f32.gmra.mrb[0].mxu0 %v1590
  %v1847 = vpop.f32.mrb[0].mxu0
  %v1848 = vadd.f32 0.0, %v1847
  %v1849 = vpop.f32.mrb[0].mxu0
  %v1850 = vadd.f32 0.0, %v1849
  %1851 = vmatprep.mubr.f32.mxu0 0.0
  %1852 = vmatmul.mubr.f32.gmra.mrb[0].mxu0 %v1591
  %v1853 = vpop.f32.mrb[0].mxu0
  %v1854 = vadd.f32 0.0, %v1853
  %v1855 = vpop.f32.mrb[0].mxu0
  %v1856 = vadd.f32 0.0, %v1855
  %1857 = vmatprep.mubr.f32.mxu0 0.0
  %1858 = vmatmul.mubr.f32.gmra.mrb[0].mxu0 %v1592
  %v1859 = vpop.f32.mrb[0].mxu0
  %v1860 = vadd.f32 0.0, %v1859
  %v1861 = vpop.f32.mrb[0].mxu0
  %v1862 = vadd.f32 0.0, %v1861
  %1863 = vmatprep.mubr.f32.mxu0 0.0
  %1864 = vmatmul.mubr.f32.gmra.mrb[0].mxu0 %v1593
  %v1865 = vpop.f32.mrb[0].mxu0
  %v1866 = vadd.f32 0.0, %v1865
  %v1867 = vpop.f32.mrb[0].mxu0
  %v1868 = vadd.f32 0.0, %v1867
  %1869 = vmatprep.mubr.f32.mxu0 0.0
  %1870 = vmatmul.mubr.f32.gmra.mrb[0].mxu0 %v1594
  %v1871 = vpop.f32.mrb[0].mxu0
  %v1872 = vadd.f32 0.0, %v1871
  %v1873 = vpop.f32.mrb[0].mxu0
  %v1874 = vadd.f32 0.0, %v1873
  %1875 = vmatprep.mubr.f32.mxu0 0.0
  %1876 = vmatmul.mubr.f32.gmra.mrb[0].mxu0 %v1595
  %v1877 = vpop.f32.mrb[0].mxu0
  %v1878 = vadd.f32 0.0, %v1877
  %v1879 = vpop.f32.mrb[0].mxu0
  %v1880 = vadd.f32 0.0, %v1879
  %1881 = vmatprep.mubr.f32.mxu0 0.0
  %1882 = vmatmul.mubr.f32.gmra.mrb[0].mxu0 %v1596
  %v1883 = vpop.f32.mrb[0].mxu0
  %v1884 = vadd.f32 0.0, %v1883
  %v1885 = vpop.f32.mrb[0].mxu0
  %v1886 = vadd.f32 0.0, %v1885
  %1887 = vmatprep.mubr.f32.mxu0 0.0
  %1888 = vmatmul.mubr.f32.gmra.mrb[0].mxu0 %v1597
  %v1889 = vpop.f32.mrb[0].mxu0
  %v1890 = vadd.f32 0.0, %v1889
  %v1891 = vpop.f32.mrb[0].mxu0
  %v1892 = vadd.f32 0.0, %v1891
  %1893 = vmatprep.mubr.f32.mxu0 0.0
  %1894 = vmatmul.mubr.f32.gmra.mrb[0].mxu0 %v1598
  %v1895 = vpop.f32.mrb[0].mxu0
  %v1896 = vadd.f32 0.0, %v1895
  %v1897 = vpop.f32.mrb[0].mxu0
  %v1898 = vadd.f32 0.0, %v1897
  %1899 = vmatprep.mubr.f32.mxu0 0.0
  %1900 = vmatmul.mubr.f32.gmra.mrb[0].mxu0 %v1599
  %v1901 = vpop.f32.mrb[0].mxu0
  %v1902 = vadd.f32 0.0, %v1901
  %v1903 = vpop.f32.mrb[0].mxu0
  %v1904 = vadd.f32 0.0, %v1903
  %1905 = vmatprep.mubr.f32.mxu0 0.0
  %1906 = vmatmul.mubr.f32.gmra.mrb[0].mxu0 %v1600
  %v1907 = vpop.f32.mrb[0].mxu0
  %v1908 = vadd.f32 0.0, %v1907
  %v1909 = vpop.f32.mrb[0].mxu0
  %v1910 = vadd.f32 0.0, %v1909
  %1911 = vmatprep.mubr.f32.mxu0 0.0
  %1912 = vmatmul.mubr.f32.gmra.mrb[0].mxu0 %v1601
  %v1913 = vpop.f32.mrb[0].mxu0
  %v1914 = vadd.f32 0.0, %v1913
  %v1915 = vpop.f32.mrb[0].mxu0
  %v1916 = vadd.f32 0.0, %v1915
  %1917 = vmatprep.mubr.f32.mxu0 0.0
  %1918 = vmatmul.mubr.f32.gmra.mrb[0].mxu0 %v1602
  %v1919 = vpop.f32.mrb[0].mxu0
  %v1920 = vadd.f32 0.0, %v1919
  %v1921 = vpop.f32.mrb[0].mxu0
  %v1922 = vadd.f32 0.0, %v1921
  %1923 = vmatprep.mubr.f32.mxu0 0.0
  %1924 = vmatmul.mubr.f32.gmra.mrb[0].mxu0 %v1603
  %v1925 = vpop.f32.mrb[0].mxu0
  %v1926 = vadd.f32 0.0, %v1925
  %v1927 = vpop.f32.mrb[0].mxu0
  %v1928 = vadd.f32 0.0, %v1927
  %1929 = vmatprep.mubr.f32.mxu0 0.0
  %1930 = vmatmul.mubr.f32.gmra.mrb[0].mxu0 %v1604
  %v1931 = vpop.f32.mrb[0].mxu0
  %v1932 = vadd.f32 0.0, %v1931
  %v1933 = vpop.f32.mrb[0].mxu0
  %v1934 = vadd.f32 0.0, %v1933
  %1935 = vmatprep.mubr.f32.mxu0 0.0
  %1936 = vmatmul.mubr.f32.gmra.mrb[0].mxu0 %v1605
  %v1937 = vpop.f32.mrb[0].mxu0
  %v1938 = vadd.f32 0.0, %v1937
  %v1939 = vpop.f32.mrb[0].mxu0
  %v1940 = vadd.f32 0.0, %v1939
  %1941 = vmatprep.mubr.f32.mxu0 0.0
  %1942 = vmatmul.mubr.f32.gmra.mrb[0].mxu0 %v1606
  %v1943 = vpop.f32.mrb[0].mxu0
  %v1944 = vadd.f32 0.0, %v1943
  %v1945 = vpop.f32.mrb[0].mxu0
  %v1946 = vadd.f32 0.0, %v1945
  %1947 = vmatprep.mubr.f32.mxu0 0.0
  %1948 = vmatmul.mubr.f32.gmra.mrb[0].mxu0 %v1607
  %v1949 = vpop.f32.mrb[0].mxu0
  %v1950 = vadd.f32 0.0, %v1949
  %v1951 = vpop.f32.mrb[0].mxu0
  %v1952 = vadd.f32 0.0, %v1951
  %1953 = vmatprep.mubr.f32.mxu0 0.0
  %1954 = vmatmul.mubr.f32.gmra.mrb[0].mxu0 %v1608
  %v1955 = vpop.f32.mrb[0].mxu0
  %v1956 = vadd.f32 0.0, %v1955
  %v1957 = vpop.f32.mrb[0].mxu0
  %v1958 = vadd.f32 0.0, %v1957
  %1959 = vmatprep.mubr.f32.mxu0 0.0
  %1960 = vmatmul.mubr.f32.gmra.mrb[0].mxu0 %v1609
  %v1961 = vpop.f32.mrb[0].mxu0
  %v1962 = vadd.f32 0.0, %v1961
  %v1963 = vpop.f32.mrb[0].mxu0
  %v1964 = vadd.f32 0.0, %v1963
  %1965 = vmatprep.mubr.f32.mxu0 0.0
  %1966 = vmatmul.mubr.f32.gmra.mrb[0].mxu0 %v1610
  %v1967 = vpop.f32.mrb[0].mxu0
  %v1968 = vadd.f32 0.0, %v1967
  %v1969 = vpop.f32.mrb[0].mxu0
  %v1970 = vadd.f32 0.0, %v1969
  %1971 = vmatprep.mubr.f32.mxu0 0.0
  %1972 = vmatmul.mubr.f32.gmra.mrb[0].mxu0 %v1611
  %v1973 = vpop.f32.mrb[0].mxu0
  %v1974 = vadd.f32 0.0, %v1973
  %v1975 = vpop.f32.mrb[0].mxu0
  %v1976 = vadd.f32 0.0, %v1975
  %1977 = vmatprep.mubr.f32.mxu0 0.0
  %1978 = vmatmul.mubr.f32.gmra.mrb[0].mxu0 %v1612
  %v1979 = vpop.f32.mrb[0].mxu0
  %v1980 = vadd.f32 0.0, %v1979
  %v1981 = vpop.f32.mrb[0].mxu0
  %v1982 = vadd.f32 0.0, %v1981
  %1983 = vmatprep.mubr.f32.mxu0 0.0
  %1984 = vmatmul.mubr.f32.gmra.mrb[0].mxu0 %v1613
  %v1985 = vpop.f32.mrb[0].mxu0
  %v1986 = vadd.f32 0.0, %v1985
  %v1987 = vpop.f32.mrb[0].mxu0
  %v1988 = vadd.f32 0.0, %v1987
  %1989 = vmatprep.mubr.f32.mxu0 0.0
  %1990 = vmatmul.mubr.f32.gmra.mrb[0].mxu0 %v1614
  %v1991 = vpop.f32.mrb[0].mxu0
  %v1992 = vadd.f32 0.0, %v1991
  %v1993 = vpop.f32.mrb[0].mxu0
  %v1994 = vadd.f32 0.0, %v1993
  %1995 = vmatprep.mubr.f32.mxu0 0.0
  %1996 = vmatmul.mubr.f32.gmra.mrb[0].mxu0 %v1615
  %v1997 = vpop.f32.mrb[0].mxu0
  %v1998 = vadd.f32 0.0, %v1997
  %v1999 = vpop.f32.mrb[0].mxu0
  %v2000 = vadd.f32 0.0, %v1999
  %2001 = vmatprep.mubr.f32.mxu0 0.0
  %2002 = vmatmul.mubr.f32.gmra.mrb[0].mxu0 %v1616
  %v2003 = vpop.f32.mrb[0].mxu0
  %v2004 = vadd.f32 0.0, %v2003
  %v2005 = vpop.f32.mrb[0].mxu0
  %v2006 = vadd.f32 0.0, %v2005
  %2007 = vmatprep.mubr.f32.mxu0 0.0
  %2008 = vmatmul.mubr.f32.gmra.mrb[0].mxu0 %v1617
  %v2009 = vpop.f32.mrb[0].mxu0
  %v2010 = vadd.f32 0.0, %v2009
  %v2011 = vpop.f32.mrb[0].mxu0
  %v2012 = vadd.f32 0.0, %v2011
  %2013 = vmatprep.mubr.f32.mxu0 0.0
  %2014 = vmatmul.mubr.f32.gmra.mrb[0].mxu0 %v1618
  %v2015 = vpop.f32.mrb[0].mxu0
  %v2016 = vadd.f32 0.0, %v2015
  %v2017 = vpop.f32.mrb[0].mxu0
  %v2018 = vadd.f32 0.0, %v2017
  %2019 = vmatprep.mubr.f32.mxu0 0.0
  %2020 = vmatmul.mubr.f32.gmra.mrb[0].mxu0 %v1619
  %v2021 = vpop.f32.mrb[0].mxu0
  %v2022 = vadd.f32 0.0, %v2021
  %v2023 = vpop.f32.mrb[0].mxu0
  %v2024 = vadd.f32 0.0, %v2023
  %2025 = vmatprep.mubr.f32.mxu0 0.0
  %2026 = vmatmul.mubr.f32.gmra.mrb[0].mxu0 %v1620
  %v2027 = vpop.f32.mrb[0].mxu0
  %v2028 = vadd.f32 0.0, %v2027
  %v2029 = vpop.f32.mrb[0].mxu0
  %v2030 = vadd.f32 0.0, %v2029
  %2031 = vmatprep.mubr.f32.mxu0 0.0
  %2032 = vmatmul.mubr.f32.gmra.mrb[0].mxu0 %v1621
  %v2033 = vpop.f32.mrb[0].mxu0
  %v2034 = vadd.f32 0.0, %v2033
  %v2035 = vpop.f32.mrb[0].mxu0
  %v2036 = vadd.f32 0.0, %v2035
  %2037 = vmatprep.mubr.f32.mxu0 0.0
  %2038 = vmatmul.mubr.f32.gmra.mrb[0].mxu0 %v1622
  %v2039 = vpop.f32.mrb[0].mxu0
  %v2040 = vadd.f32 0.0, %v2039
  %v2041 = vpop.f32.mrb[0].mxu0
  %v2042 = vadd.f32 0.0, %v2041
  %2043 = vmatprep.mubr.f32.mxu0 0.0
  %2044 = vmatmul.mubr.f32.gmra.mrb[0].mxu0 %v1623
  %v2045 = vpop.f32.mrb[0].mxu0
  %v2046 = vadd.f32 0.0, %v2045
  %v2047 = vpop.f32.mrb[0].mxu0
  %v2048 = vadd.f32 0.0, %v2047
  %2049 = vmatprep.mubr.f32.mxu0 0.0
  %2050 = vmatmul.mubr.f32.gmra.mrb[0].mxu0 %v1624
  %v2051 = vpop.f32.mrb[0].mxu0
  %v2052 = vadd.f32 0.0, %v2051
  %v2053 = vpop.f32.mrb[0].mxu0
  %v2054 = vadd.f32 0.0, %v2053
  %2055 = vmatprep.mubr.f32.mxu0 0.0
  %2056 = vmatmul.mubr.f32.gmra.mrb[0].mxu0 %v1625
  %v2057 = vpop.f32.mrb[0].mxu0
  %v2058 = vadd.f32 0.0, %v2057
  %v2059 = vpop.f32.mrb[0].mxu0
  %v2060 = vadd.f32 0.0, %v2059
  %2061 = vmatprep.mubr.f32.mxu0 0.0
  %2062 = vmatmul.mubr.f32.gmra.mrb[0].mxu0 %v1626
  %v2063 = vpop.f32.mrb[0].mxu0
  %v2064 = vadd.f32 0.0, %v2063
  %v2065 = vpop.f32.mrb[0].mxu0
  %v2066 = vadd.f32 0.0, %v2065
  %2067 = vmatprep.mubr.f32.mxu0 0.0
  %2068 = vmatmul.mubr.f32.gmra.mrb[0].mxu0 %v1627
  %v2069 = vpop.f32.mrb[0].mxu0
  %v2070 = vadd.f32 0.0, %v2069
  %v2071 = vpop.f32.mrb[0].mxu0
  %v2072 = vadd.f32 0.0, %v2071
  %2073 = vmatprep.mubr.f32.mxu0 0.0
  %2074 = vmatmul.mubr.f32.gmra.mrb[0].mxu0 %v1628
  %v2075 = vpop.f32.mrb[0].mxu0
  %v2076 = vadd.f32 0.0, %v2075
  %v2077 = vpop.f32.mrb[0].mxu0
  %v2078 = vadd.f32 0.0, %v2077
  %2079 = vmatprep.mubr.f32.mxu0 0.0
  %2080 = vmatmul.mubr.f32.gmra.mrb[0].mxu0 %v1629
  %v2081 = vpop.f32.mrb[0].mxu0
  %v2082 = vadd.f32 0.0, %v2081
  %v2083 = vpop.f32.mrb[0].mxu0
  %v2084 = vadd.f32 0.0, %v2083
  %2085 = vmatprep.mubr.f32.mxu0 0.0
  %2086 = vmatmul.mubr.f32.gmra.mrb[0].mxu0 %v1630
  %v2087 = vpop.f32.mrb[0].mxu0
  %v2088 = vadd.f32 0.0, %v2087
  %v2089 = vpop.f32.mrb[0].mxu0
  %v2090 = vadd.f32 0.0, %v2089
  %2091 = vmatprep.mubr.f32.mxu0 0.0
  %2092 = vmatmul.mubr.f32.gmra.mrb[0].mxu0 %v1631
  %v2093 = vpop.f32.mrb[0].mxu0
  %v2094 = vadd.f32 0.0, %v2093
  %v2095 = vpop.f32.mrb[0].mxu0
  %v2096 = vadd.f32 0.0, %v2095
  %2097 = vmatprep.mubr.f32.mxu0 0.0
  %2098 = vmatmul.mubr.f32.gmra.mrb[0].mxu0 %v1632
  %v2099 = vpop.f32.mrb[0].mxu0
  %v2100 = vadd.f32 0.0, %v2099
  %v2101 = vpop.f32.mrb[0].mxu0
  %v2102 = vadd.f32 0.0, %v2101
  %2103 = vmatprep.mubr.f32.mxu0 0.0
  %2104 = vmatmul.mubr.f32.gmra.mrb[0].mxu0 %v1633
  %v2105 = vpop.f32.mrb[0].mxu0
  %v2106 = vadd.f32 0.0, %v2105
  %v2107 = vpop.f32.mrb[0].mxu0
  %v2108 = vadd.f32 0.0, %v2107
  %2109 = vmatprep.mubr.f32.mxu0 0.0
  %2110 = vmatmul.mubr.f32.gmra.mrb[0].mxu0 %v1634
  %v2111 = vpop.f32.mrb[0].mxu0
  %v2112 = vadd.f32 0.0, %v2111
  %v2113 = vpop.f32.mrb[0].mxu0
  %v2114 = vadd.f32 0.0, %v2113
  %2115 = vmatprep.mubr.f32.mxu0 0.0
  %2116 = vmatmul.mubr.f32.gmra.mrb[0].mxu0 %v1635
  %v2117 = vpop.f32.mrb[0].mxu0
  %v2118 = vadd.f32 0.0, %v2117
  %v2119 = vpop.f32.mrb[0].mxu0
  %v2120 = vadd.f32 0.0, %v2119
  %2121 = vmatprep.mubr.f32.mxu0 0.0
  %2122 = vmatmul.mubr.f32.gmra.mrb[0].mxu0 %v1636
  %v2123 = vpop.f32.mrb[0].mxu0
  %v2124 = vadd.f32 0.0, %v2123
  %v2125 = vpop.f32.mrb[0].mxu0
  %v2126 = vadd.f32 0.0, %v2125
  %2127 = vmatprep.mubr.f32.mxu0 0.0
  %2128 = vmatmul.mubr.f32.gmra.mrb[0].mxu0 %v1637
  %v2129 = vpop.f32.mrb[0].mxu0
  %v2130 = vadd.f32 0.0, %v2129
  %v2131 = vpop.f32.mrb[0].mxu0
  %v2132 = vadd.f32 0.0, %v2131
  %2133 = vmatprep.mubr.f32.mxu0 0.0
  %2134 = vmatmul.mubr.f32.gmra.mrb[0].mxu0 %v1638
  %v2135 = vpop.f32.mrb[0].mxu0
  %v2136 = vadd.f32 0.0, %v2135
  %v2137 = vpop.f32.mrb[0].mxu0
  %v2138 = vadd.f32 0.0, %v2137
  %2139 = vmatprep.mubr.f32.mxu0 0.0
  %2140 = vmatmul.mubr.f32.gmra.mrb[0].mxu0 %v1639
  %v2141 = vpop.f32.mrb[0].mxu0
  %v2142 = vadd.f32 0.0, %v2141
  %v2143 = vpop.f32.mrb[0].mxu0
  %v2144 = vadd.f32 0.0, %v2143
  %2145 = vmatprep.mubr.f32.mxu0 0.0
  %2146 = vmatmul.mubr.f32.gmra.mrb[0].mxu0 %v1640
  %v2147 = vpop.f32.mrb[0].mxu0
  %v2148 = vadd.f32 0.0, %v2147
  %v2149 = vpop.f32.mrb[0].mxu0
  %v2150 = vadd.f32 0.0, %v2149
  %2151 = vmatprep.mubr.f32.mxu0 0.0
  %2152 = vmatmul.mubr.f32.gmra.mrb[0].mxu0 %v1641
  %v2153 = vpop.f32.mrb[0].mxu0
  %v2154 = vadd.f32 0.0, %v2153
  %v2155 = vpop.f32.mrb[0].mxu0
  %v2156 = vadd.f32 0.0, %v2155
  %2157 = vmatprep.mubr.f32.mxu0 0.0
  %2158 = vmatmul.mubr.f32.gmra.mrb[0].mxu0 %v1642
  %v2159 = vpop.f32.mrb[0].mxu0
  %v2160 = vadd.f32 0.0, %v2159
  %v2161 = vpop.f32.mrb[0].mxu0
  %v2162 = vadd.f32 0.0, %v2161
  %2163 = vmatprep.mubr.f32.mxu0 0.0
  %2164 = vmatmul.mubr.f32.gmra.mrb[0].mxu0 %v1643
  %v2165 = vpop.f32.mrb[0].mxu0
  %v2166 = vadd.f32 0.0, %v2165
  %v2167 = vpop.f32.mrb[0].mxu0
  %v2168 = vadd.f32 0.0, %v2167
  %2169 = vmatprep.mubr.f32.mxu0 0.0
  %2170 = vmatmul.mubr.f32.gmra.mrb[0].mxu0 %v1644
  %v2171 = vpop.f32.mrb[0].mxu0
  %v2172 = vadd.f32 0.0, %v2171
  %v2173 = vpop.f32.mrb[0].mxu0
  %v2174 = vadd.f32 0.0, %v2173
  %2175 = vmatprep.mubr.f32.mxu0 0.0
  %2176 = vmatmul.mubr.f32.gmra.mrb[0].mxu0 %v1645
  %v2177 = vpop.f32.mrb[0].mxu0
  %v2178 = vadd.f32 0.0, %v2177
  %v2179 = vpop.f32.mrb[0].mxu0
  %v2180 = vadd.f32 0.0, %v2179
  %2181 = vmatprep.mubr.f32.mxu0 0.0
  %2182 = vmatmul.mubr.f32.gmra.mrb[0].mxu0 %v1646
  %v2183 = vpop.f32.mrb[0].mxu0
  %v2184 = vadd.f32 0.0, %v2183
  %v2185 = vpop.f32.mrb[0].mxu0
  %v2186 = vadd.f32 0.0, %v2185
  %2187 = vmatprep.mubr.f32.mxu0 0.0
  %2188 = vmatmul.mubr.f32.gmra.mrb[0].mxu0 %v1647
  %v2189 = vpop.f32.mrb[0].mxu0
  %v2190 = vadd.f32 0.0, %v2189
  %v2191 = vpop.f32.mrb[0].mxu0
  %v2192 = vadd.f32 0.0, %v2191
  %2193 = vmatprep.mubr.f32.mxu0 0.0
  %2194 = vmatmul.mubr.f32.gmra.mrb[0].mxu0 %v1648
  %v2195 = vpop.f32.mrb[0].mxu0
  %v2196 = vadd.f32 0.0, %v2195
  %v2197 = vpop.f32.mrb[0].mxu0
  %v2198 = vadd.f32 0.0, %v2197
  %2199 = vmatprep.mubr.f32.mxu0 0.0
  %2200 = vmatmul.mubr.f32.gmra.mrb[0].mxu0 %v1649
  %v2201 = vpop.f32.mrb[0].mxu0
  %v2202 = vadd.f32 0.0, %v2201
  %v2203 = vpop.f32.mrb[0].mxu0
  %v2204 = vadd.f32 0.0, %v2203
  %2205 = vmatprep.mubr.f32.mxu0 0.0
  %2206 = vmatmul.mubr.f32.gmra.mrb[0].mxu0 %v1650
  %v2207 = vpop.f32.mrb[0].mxu0
  %v2208 = vadd.f32 0.0, %v2207
  %v2209 = vpop.f32.mrb[0].mxu0
  %v2210 = vadd.f32 0.0, %v2209
  %2211 = vmatprep.mubr.f32.mxu0 0.0
  %2212 = vmatmul.mubr.f32.gmra.mrb[0].mxu0 %v1651
  %v2213 = vpop.f32.mrb[0].mxu0
  %v2214 = vadd.f32 0.0, %v2213
  %v2215 = vpop.f32.mrb[0].mxu0
  %v2216 = vadd.f32 0.0, %v2215
  %2217 = vmatprep.mubr.f32.mxu0 0.0
  %2218 = vmatmul.mubr.f32.gmra.mrb[0].mxu0 %v1652
  %v2219 = vpop.f32.mrb[0].mxu0
  %v2220 = vadd.f32 0.0, %v2219
  %v2221 = vpop.f32.mrb[0].mxu0
  %v2222 = vadd.f32 0.0, %v2221
  %2223 = vmatprep.mubr.f32.mxu0 0.0
  %2224 = vmatmul.mubr.f32.gmra.mrb[0].mxu0 %v1653
  %v2225 = vpop.f32.mrb[0].mxu0
  %v2226 = vadd.f32 0.0, %v2225
  %v2227 = vpop.f32.mrb[0].mxu0
  %v2228 = vadd.f32 0.0, %v2227
  %2229 = vmatprep.mubr.f32.mxu0 0.0
  %2230 = vmatmul.mubr.f32.gmra.mrb[0].mxu0 %v1654
  %v2231 = vpop.f32.mrb[0].mxu0
  %v2232 = vadd.f32 0.0, %v2231
  %v2233 = vpop.f32.mrb[0].mxu0
  %v2234 = vadd.f32 0.0, %v2233
  %2235 = vmatprep.mubr.f32.mxu0 0.0
  %2236 = vmatmul.mubr.f32.gmra.mrb[0].mxu0 %v1655
  %v2237 = vpop.f32.mrb[0].mxu0
  %v2238 = vadd.f32 0.0, %v2237
  %v2239 = vpop.f32.mrb[0].mxu0
  %v2240 = vadd.f32 0.0, %v2239
  %2241 = vmatprep.mubr.f32.mxu0 0.0
  %2242 = vmatmul.mubr.f32.gmra.mrb[0].mxu0 %v1656
  %v2243 = vpop.f32.mrb[0].mxu0
  %v2244 = vadd.f32 0.0, %v2243
  %v2245 = vpop.f32.mrb[0].mxu0
  %v2246 = vadd.f32 0.0, %v2245
  %2247 = vmatprep.mubr.f32.mxu0 0.0
  %2248 = vmatmul.mubr.f32.gmra.mrb[0].mxu0 %v1657
  %v2249 = vpop.f32.mrb[0].mxu0
  %v2250 = vadd.f32 0.0, %v2249
  %v2251 = vpop.f32.mrb[0].mxu0
  %v2252 = vadd.f32 0.0, %v2251
  %2253 = vmatprep.mubr.f32.mxu0 0.0
  %2254 = vmatmul.mubr.f32.gmra.mrb[0].mxu0 %v1658
  %v2255 = vpop.f32.mrb[0].mxu0
  %v2256 = vadd.f32 0.0, %v2255
  %v2257 = vpop.f32.mrb[0].mxu0
  %v2258 = vadd.f32 0.0, %v2257
  %2259 = vmatprep.mubr.f32.mxu0 0.0
  %2260 = vmatmul.mubr.f32.gmra.mrb[0].mxu0 %v1659
  %v2261 = vpop.f32.mrb[0].mxu0
  %v2262 = vadd.f32 0.0, %v2261
  %v2263 = vpop.f32.mrb[0].mxu0
  %v2264 = vadd.f32 0.0, %v2263
  %2265 = vmatprep.mubr.f32.mxu0 0.0
  %2266 = vmatmul.mubr.f32.gmra.mrb[0].mxu0 %v1660
  %v2267 = vpop.f32.mrb[0].mxu0
  %v2268 = vadd.f32 0.0, %v2267
  %v2269 = vpop.f32.mrb[0].mxu0
  %v2270 = vadd.f32 0.0, %v2269
  %2271 = vmatprep.mubr.f32.mxu0 0.0
  %2272 = vmatmul.mubr.f32.gmra.mrb[0].mxu0 %v1661
  %v2273 = vpop.f32.mrb[0].mxu0
  %v2274 = vadd.f32 0.0, %v2273
  %v2275 = vpop.f32.mrb[0].mxu0
  %v2276 = vadd.f32 0.0, %v2275
  %2277 = vmatprep.mubr.f32.mxu0 0.0
  %2278 = vmatmul.mubr.f32.gmra.mrb[0].mxu0 %v1662
  %v2279 = vpop.f32.mrb[0].mxu0
  %v2280 = vadd.f32 0.0, %v2279
  %v2281 = vpop.f32.mrb[0].mxu0
  %v2282 = vadd.f32 0.0, %v2281
  %2283 = vmatprep.mubr.f32.mxu0 0.0
  %2284 = vmatmul.mubr.f32.gmra.mrb[0].mxu0 %v1663
  %v2285 = vpop.f32.mrb[0].mxu0
  %v2286 = vadd.f32 0.0, %v2285
  %v2287 = vpop.f32.mrb[0].mxu0
  %v2288 = vadd.f32 0.0, %v2287
  %2289 = vmatprep.mubr.f32.mxu0 0.0
  %2290 = vmatmul.mubr.f32.gmra.mrb[0].mxu0 %v1664
  %v2291 = vpop.f32.mrb[0].mxu0
  %v2292 = vadd.f32 0.0, %v2291
  %v2293 = vpop.f32.mrb[0].mxu0
  %v2294 = vadd.f32 0.0, %v2293
  %2295 = vmatprep.mubr.f32.mxu0 0.0
  %2296 = vmatmul.mubr.f32.gmra.mrb[0].mxu0 %v1665
  %v2297 = vpop.f32.mrb[0].mxu0
  %v2298 = vadd.f32 0.0, %v2297
  %v2299 = vpop.f32.mrb[0].mxu0
  %v2300 = vadd.f32 0.0, %v2299
  %2301 = vmatprep.mubr.f32.mxu0 0.0
  %2302 = vmatmul.mubr.f32.gmra.mrb[0].mxu0 %v1666
  %v2303 = vpop.f32.mrb[0].mxu0
  %v2304 = vadd.f32 0.0, %v2303
  %v2305 = vpop.f32.mrb[0].mxu0
  %v2306 = vadd.f32 0.0, %v2305
  %2307 = vmatprep.mubr.f32.mxu0 0.0
  %2308 = vmatmul.mubr.f32.gmra.mrb[0].mxu0 %v1667
  %v2309 = vpop.f32.mrb[0].mxu0
  %v2310 = vadd.f32 0.0, %v2309
  %v2311 = vpop.f32.mrb[0].mxu0
  %v2312 = vadd.f32 0.0, %v2311
  %2313 = vmatprep.mubr.f32.mxu0 0.0
  %2314 = vmatmul.mubr.f32.gmra.mrb[0].mxu0 %v1668
  %v2315 = vpop.f32.mrb[0].mxu0
  %v2316 = vadd.f32 0.0, %v2315
  %v2317 = vpop.f32.mrb[0].mxu0
  %v2318 = vadd.f32 0.0, %v2317
  %2319 = vmatprep.mubr.f32.mxu0 0.0
  %2320 = vmatmul.mubr.f32.gmra.mrb[0].mxu0 %v1669
  %v2321 = vpop.f32.mrb[0].mxu0
  %v2322 = vadd.f32 0.0, %v2321
  %v2323 = vpop.f32.mrb[0].mxu0
  %v2324 = vadd.f32 0.0, %v2323
  %2325 = vmatprep.mubr.f32.mxu0 0.0
  %2326 = vmatmul.mubr.f32.gmra.mrb[0].mxu0 %v1670
  %v2327 = vpop.f32.mrb[0].mxu0
  %v2328 = vadd.f32 0.0, %v2327
  %v2329 = vpop.f32.mrb[0].mxu0
  %v2330 = vadd.f32 0.0, %v2329
  %2331 = vmatprep.mubr.f32.mxu0 0.0
  %2332 = vmatmul.mubr.f32.gmra.mrb[0].mxu0 %v1671
  %v2333 = vpop.f32.mrb[0].mxu0
  %v2334 = vadd.f32 0.0, %v2333
  %v2335 = vpop.f32.mrb[0].mxu0
  %v2336 = vadd.f32 0.0, %v2335
  %2337 = vmatprep.mubr.f32.mxu0 0.0
  %2338 = vmatmul.mubr.f32.gmra.mrb[0].mxu0 %v1672
  %v2339 = vpop.f32.mrb[0].mxu0
  %v2340 = vadd.f32 0.0, %v2339
  %v2341 = vpop.f32.mrb[0].mxu0
  %v2342 = vadd.f32 0.0, %v2341
  %2343 = vmatprep.mubr.f32.mxu0 0.0
  %2344 = vmatmul.mubr.f32.gmra.mrb[0].mxu0 %v1673
  %v2345 = vpop.f32.mrb[0].mxu0
  %v2346 = vadd.f32 0.0, %v2345
  %v2347 = vpop.f32.mrb[0].mxu0
  %v2348 = vadd.f32 0.0, %v2347
  %2349 = vmatprep.mubr.f32.mxu0 0.0
  %2350 = vmatmul.mubr.f32.gmra.mrb[0].mxu0 %v1674
  %v2351 = vpop.f32.mrb[0].mxu0
  %v2352 = vadd.f32 0.0, %v2351
  %v2353 = vpop.f32.mrb[0].mxu0
  %v2354 = vadd.f32 0.0, %v2353
  %2355 = vmatprep.mubr.f32.mxu0 0.0
  %2356 = vmatmul.mubr.f32.gmra.mrb[0].mxu0 %v1675
  %v2357 = vpop.f32.mrb[0].mxu0
  %v2358 = vadd.f32 0.0, %v2357
  %v2359 = vpop.f32.mrb[0].mxu0
  %v2360 = vadd.f32 0.0, %v2359
  %2361 = vdwg.mxu0
  %v2362 = vadd.f32 %v992, %v1776
  %v2363 = vadd.f32 %v994, %v1778
  %v2364 = vadd.f32 %v998, %v1782
  %v2365 = vadd.f32 %v1000, %v1784
  %v2366 = vadd.f32 %v1004, %v1788
  %v2367 = vadd.f32 %v1006, %v1790
  %v2368 = vadd.f32 %v1010, %v1794
  %v2369 = vadd.f32 %v1012, %v1796
  %v2370 = vadd.f32 %v1016, %v1800
  %v2371 = vadd.f32 %v1018, %v1802
  %v2372 = vadd.f32 %v1022, %v1806
  %v2373 = vadd.f32 %v1024, %v1808
  %v2374 = vadd.f32 %v1028, %v1812
  %v2375 = vadd.f32 %v1030, %v1814
  %v2376 = vadd.f32 %v1034, %v1818
  %v2377 = vadd.f32 %v1036, %v1820
  %v2378 = vadd.f32 %v1040, %v1824
  %v2379 = vadd.f32 %v1042, %v1826
  %v2380 = vadd.f32 %v1046, %v1830
  %v2381 = vadd.f32 %v1048, %v1832
  %v2382 = vadd.f32 %v1052, %v1836
  %v2383 = vadd.f32 %v1054, %v1838
  %v2384 = vadd.f32 %v1058, %v1842
  %v2385 = vadd.f32 %v1060, %v1844
  %v2386 = vadd.f32 %v1064, %v1848
  %v2387 = vadd.f32 %v1066, %v1850
  %v2388 = vadd.f32 %v1070, %v1854
  %v2389 = vadd.f32 %v1072, %v1856
  %v2390 = vadd.f32 %v1076, %v1860
  %v2391 = vadd.f32 %v1078, %v1862
  %v2392 = vadd.f32 %v1082, %v1866
  %v2393 = vadd.f32 %v1084, %v1868
  %v2394 = vadd.f32 %v1088, %v1872
  %v2395 = vadd.f32 %v1090, %v1874
  %v2396 = vadd.f32 %v1094, %v1878
  %v2397 = vadd.f32 %v1096, %v1880
  %v2398 = vadd.f32 %v1100, %v1884
  %v2399 = vadd.f32 %v1102, %v1886
  %v2400 = vadd.f32 %v1106, %v1890
  %v2401 = vadd.f32 %v1108, %v1892
  %v2402 = vadd.f32 %v1112, %v1896
  %v2403 = vadd.f32 %v1114, %v1898
  %v2404 = vadd.f32 %v1118, %v1902
  %v2405 = vadd.f32 %v1120, %v1904
  %v2406 = vadd.f32 %v1124, %v1908
  %v2407 = vadd.f32 %v1126, %v1910
  %v2408 = vadd.f32 %v1130, %v1914
  %v2409 = vadd.f32 %v1132, %v1916
  %v2410 = vadd.f32 %v1136, %v1920
  %v2411 = vadd.f32 %v1138, %v1922
  %v2412 = vadd.f32 %v1142, %v1926
  %v2413 = vadd.f32 %v1144, %v1928
  %v2414 = vadd.f32 %v1148, %v1932
  %v2415 = vadd.f32 %v1150, %v1934
  %v2416 = vadd.f32 %v1154, %v1938
  %v2417 = vadd.f32 %v1156, %v1940
  %v2418 = vadd.f32 %v1160, %v1944
  %v2419 = vadd.f32 %v1162, %v1946
  %v2420 = vadd.f32 %v1166, %v1950
  %v2421 = vadd.f32 %v1168, %v1952
  %v2422 = vadd.f32 %v1172, %v1956
  %v2423 = vadd.f32 %v1174, %v1958
  %v2424 = vadd.f32 %v1178, %v1962
  %v2425 = vadd.f32 %v1180, %v1964
  %v2426 = vadd.f32 %v1184, %v1968
  %v2427 = vadd.f32 %v1186, %v1970
  %v2428 = vadd.f32 %v1190, %v1974
  %v2429 = vadd.f32 %v1192, %v1976
  %v2430 = vadd.f32 %v1196, %v1980
  %v2431 = vadd.f32 %v1198, %v1982
  %v2432 = vadd.f32 %v1202, %v1986
  %v2433 = vadd.f32 %v1204, %v1988
  %v2434 = vadd.f32 %v1208, %v1992
  %v2435 = vadd.f32 %v1210, %v1994
  %v2436 = vadd.f32 %v1214, %v1998
  %v2437 = vadd.f32 %v1216, %v2000
  %v2438 = vadd.f32 %v1220, %v2004
  %v2439 = vadd.f32 %v1222, %v2006
  %v2440 = vadd.f32 %v1226, %v2010
  %v2441 = vadd.f32 %v1228, %v2012
  %v2442 = vadd.f32 %v1232, %v2016
  %v2443 = vadd.f32 %v1234, %v2018
  %v2444 = vadd.f32 %v1238, %v2022
  %v2445 = vadd.f32 %v1240, %v2024
  %v2446 = vadd.f32 %v1244, %v2028
  %v2447 = vadd.f32 %v1246, %v2030
  %v2448 = vadd.f32 %v1250, %v2034
  %v2449 = vadd.f32 %v1252, %v2036
  %v2450 = vadd.f32 %v1256, %v2040
  %v2451 = vadd.f32 %v1258, %v2042
  %v2452 = vadd.f32 %v1262, %v2046
  %v2453 = vadd.f32 %v1264, %v2048
  %v2454 = vadd.f32 %v1268, %v2052
  %v2455 = vadd.f32 %v1270, %v2054
  %v2456 = vadd.f32 %v1274, %v2058
  %v2457 = vadd.f32 %v1276, %v2060
  %v2458 = vadd.f32 %v1280, %v2064
  %v2459 = vadd.f32 %v1282, %v2066
  %v2460 = vadd.f32 %v1286, %v2070
  %v2461 = vadd.f32 %v1288, %v2072
  %v2462 = vadd.f32 %v1292, %v2076
  %v2463 = vadd.f32 %v1294, %v2078
  %v2464 = vadd.f32 %v1298, %v2082
  %v2465 = vadd.f32 %v1300, %v2084
  %v2466 = vadd.f32 %v1304, %v2088
  %v2467 = vadd.f32 %v1306, %v2090
  %v2468 = vadd.f32 %v1310, %v2094
  %v2469 = vadd.f32 %v1312, %v2096
  %v2470 = vadd.f32 %v1316, %v2100
  %v2471 = vadd.f32 %v1318, %v2102
  %v2472 = vadd.f32 %v1322, %v2106
  %v2473 = vadd.f32 %v1324, %v2108
  %v2474 = vadd.f32 %v1328, %v2112
  %v2475 = vadd.f32 %v1330, %v2114
  %v2476 = vadd.f32 %v1334, %v2118
  %v2477 = vadd.f32 %v1336, %v2120
  %v2478 = vadd.f32 %v1340, %v2124
  %v2479 = vadd.f32 %v1342, %v2126
  %v2480 = vadd.f32 %v1346, %v2130
  %v2481 = vadd.f32 %v1348, %v2132
  %v2482 = vadd.f32 %v1352, %v2136
  %v2483 = vadd.f32 %v1354, %v2138
  %v2484 = vadd.f32 %v1358, %v2142
  %v2485 = vadd.f32 %v1360, %v2144
  %v2486 = vadd.f32 %v1364, %v2148
  %v2487 = vadd.f32 %v1366, %v2150
  %v2488 = vadd.f32 %v1370, %v2154
  %v2489 = vadd.f32 %v1372, %v2156
  %v2490 = vadd.f32 %v1376, %v2160
  %v2491 = vadd.f32 %v1378, %v2162
  %v2492 = vadd.f32 %v1382, %v2166
  %v2493 = vadd.f32 %v1384, %v2168
  %v2494 = vadd.f32 %v1388, %v2172
  %v2495 = vadd.f32 %v1390, %v2174
  %v2496 = vadd.f32 %v1394, %v2178
  %v2497 = vadd.f32 %v1396, %v2180
  %v2498 = vadd.f32 %v1400, %v2184
  %v2499 = vadd.f32 %v1402, %v2186
  %v2500 = vadd.f32 %v1406, %v2190
  %v2501 = vadd.f32 %v1408, %v2192
  %v2502 = vadd.f32 %v1412, %v2196
  %v2503 = vadd.f32 %v1414, %v2198
  %v2504 = vadd.f32 %v1418, %v2202
  %v2505 = vadd.f32 %v1420, %v2204
  %v2506 = vadd.f32 %v1424, %v2208
  %v2507 = vadd.f32 %v1426, %v2210
  %v2508 = vadd.f32 %v1430, %v2214
  %v2509 = vadd.f32 %v1432, %v2216
  %v2510 = vadd.f32 %v1436, %v2220
  %v2511 = vadd.f32 %v1438, %v2222
  %v2512 = vadd.f32 %v1442, %v2226
  %v2513 = vadd.f32 %v1444, %v2228
  %v2514 = vadd.f32 %v1448, %v2232
  %v2515 = vadd.f32 %v1450, %v2234
  %v2516 = vadd.f32 %v1454, %v2238
  %v2517 = vadd.f32 %v1456, %v2240
  %v2518 = vadd.f32 %v1460, %v2244
  %v2519 = vadd.f32 %v1462, %v2246
  %v2520 = vadd.f32 %v1466, %v2250
  %v2521 = vadd.f32 %v1468, %v2252
  %v2522 = vadd.f32 %v1472, %v2256
  %v2523 = vadd.f32 %v1474, %v2258
  %v2524 = vadd.f32 %v1478, %v2262
  %v2525 = vadd.f32 %v1480, %v2264
  %v2526 = vadd.f32 %v1484, %v2268
  %v2527 = vadd.f32 %v1486, %v2270
  %v2528 = vadd.f32 %v1490, %v2274
  %v2529 = vadd.f32 %v1492, %v2276
  %v2530 = vadd.f32 %v1496, %v2280
  %v2531 = vadd.f32 %v1498, %v2282
  %v2532 = vadd.f32 %v1502, %v2286
  %v2533 = vadd.f32 %v1504, %v2288
  %v2534 = vadd.f32 %v1508, %v2292
  %v2535 = vadd.f32 %v1510, %v2294
  %v2536 = vadd.f32 %v1514, %v2298
  %v2537 = vadd.f32 %v1516, %v2300
  %v2538 = vadd.f32 %v1520, %v2304
  %v2539 = vadd.f32 %v1522, %v2306
  %v2540 = vadd.f32 %v1526, %v2310
  %v2541 = vadd.f32 %v1528, %v2312
  %v2542 = vadd.f32 %v1532, %v2316
  %v2543 = vadd.f32 %v1534, %v2318
  %v2544 = vadd.f32 %v1538, %v2322
  %v2545 = vadd.f32 %v1540, %v2324
  %v2546 = vadd.f32 %v1544, %v2328
  %v2547 = vadd.f32 %v1546, %v2330
  %v2548 = vadd.f32 %v1550, %v2334
  %v2549 = vadd.f32 %v1552, %v2336
  %v2550 = vadd.f32 %v1556, %v2340
  %v2551 = vadd.f32 %v1558, %v2342
  %v2552 = vadd.f32 %v1562, %v2346
  %v2553 = vadd.f32 %v1564, %v2348
  %v2554 = vadd.f32 %v1568, %v2352
  %v2555 = vadd.f32 %v1570, %v2354
  %v2556 = vadd.f32 %v1574, %v2358
  %v2557 = vadd.f32 %v1576, %v2360
  %vm2562 = vcmask 1043456
  %v2563 = vrot.slane %v2551, 4
  %v2564 = vrot.slane %v2553, 4
  %v2565 = vsel %vm2562, %v2563, %v2564
  %v2566 = vrot.slane %v2555, 4
  %v2567 = vsel %vm2562, %v2564, %v2566
  %v2568 = vrot.slane %v2557, 4
  %v2569 = vsel %vm2562, %v2566, %v2568
  %v2668 = vrot.slane %v2363, 4
  %v2669 = vrot.slane %v2365, 4
  %v2670 = vsel %vm2562, %v2668, %v2669
  %v2671 = vrot.slane %v2367, 4
  %v2672 = vsel %vm2562, %v2669, %v2671
  %v2673 = vrot.slane %v2369, 4
  %v2674 = vsel %vm2562, %v2671, %v2673
  %v2675 = vrot.slane %v2371, 4
  %v2676 = vsel %vm2562, %v2673, %v2675
  %v2677 = vrot.slane %v2373, 4
  %v2678 = vsel %vm2562, %v2675, %v2677
  %v2679 = vrot.slane %v2375, 4
  %v2680 = vsel %vm2562, %v2677, %v2679
  %v2681 = vrot.slane %v2377, 4
  %v2682 = vsel %vm2562, %v2679, %v2681
  %v2683 = vrot.slane %v2379, 4
  %v2684 = vsel %vm2562, %v2681, %v2683
  %v2685 = vrot.slane %v2381, 4
  %v2686 = vsel %vm2562, %v2683, %v2685
  %v2687 = vrot.slane %v2383, 4
  %v2688 = vsel %vm2562, %v2685, %v2687
  %v2689 = vrot.slane %v2385, 4
  %v2690 = vsel %vm2562, %v2687, %v2689
  %v2691 = vrot.slane %v2387, 4
  %v2692 = vsel %vm2562, %v2689, %v2691
  %v2693 = vrot.slane %v2389, 4
  %v2694 = vsel %vm2562, %v2691, %v2693
  %v2695 = vrot.slane %v2391, 4
  %v2696 = vsel %vm2562, %v2693, %v2695
  %v2697 = vrot.slane %v2393, 4
  %v2698 = vsel %vm2562, %v2695, %v2697
  %v2699 = vrot.slane %v2395, 4
  %v2700 = vsel %vm2562, %v2697, %v2699
  %v2701 = vrot.slane %v2397, 4
  %v2702 = vsel %vm2562, %v2699, %v2701
  %v2703 = vrot.slane %v2399, 4
  %v2704 = vsel %vm2562, %v2701, %v2703
  %v2705 = vrot.slane %v2401, 4
  %v2706 = vsel %vm2562, %v2703, %v2705
  %v2707 = vrot.slane %v2403, 4
  %v2708 = vsel %vm2562, %v2705, %v2707
  %v2709 = vrot.slane %v2405, 4
  %v2710 = vsel %vm2562, %v2707, %v2709
  %v2711 = vrot.slane %v2407, 4
  %v2712 = vsel %vm2562, %v2709, %v2711
  %v2713 = vrot.slane %v2409, 4
  %v2714 = vsel %vm2562, %v2711, %v2713
  %v2715 = vrot.slane %v2411, 4
  %v2716 = vsel %vm2562, %v2713, %v2715
  %v2717 = vrot.slane %v2413, 4
  %v2718 = vsel %vm2562, %v2715, %v2717
  %v2719 = vrot.slane %v2415, 4
  %v2720 = vsel %vm2562, %v2717, %v2719
  %v2721 = vrot.slane %v2417, 4
  %v2722 = vsel %vm2562, %v2719, %v2721
  %v2723 = vrot.slane %v2419, 4
  %v2724 = vsel %vm2562, %v2721, %v2723
  %v2725 = vrot.slane %v2421, 4
  %v2726 = vsel %vm2562, %v2723, %v2725
  %v2727 = vrot.slane %v2423, 4
  %v2728 = vsel %vm2562, %v2725, %v2727
  %v2729 = vrot.slane %v2425, 4
  %v2730 = vsel %vm2562, %v2727, %v2729
  %v2731 = vrot.slane %v2427, 4
  %v2732 = vsel %vm2562, %v2729, %v2731
  %v2733 = vrot.slane %v2429, 4
  %v2734 = vsel %vm2562, %v2731, %v2733
  %v2735 = vrot.slane %v2431, 4
  %v2736 = vsel %vm2562, %v2733, %v2735
  %v2737 = vrot.slane %v2433, 4
  %v2738 = vsel %vm2562, %v2735, %v2737
  %v2739 = vrot.slane %v2435, 4
  %v2740 = vsel %vm2562, %v2737, %v2739
  %v2741 = vrot.slane %v2437, 4
  %v2742 = vsel %vm2562, %v2739, %v2741
  %v2743 = vrot.slane %v2439, 4
  %v2744 = vsel %vm2562, %v2741, %v2743
  %v2745 = vrot.slane %v2441, 4
  %v2746 = vsel %vm2562, %v2743, %v2745
  %v2747 = vrot.slane %v2443, 4
  %v2748 = vsel %vm2562, %v2745, %v2747
  %v2749 = vrot.slane %v2445, 4
  %v2750 = vsel %vm2562, %v2747, %v2749
  %v2751 = vrot.slane %v2447, 4
  %v2752 = vsel %vm2562, %v2749, %v2751
  %v2753 = vrot.slane %v2449, 4
  %v2754 = vsel %vm2562, %v2751, %v2753
  %v2755 = vrot.slane %v2451, 4
  %v2756 = vsel %vm2562, %v2753, %v2755
  %v2757 = vrot.slane %v2453, 4
  %v2758 = vsel %vm2562, %v2755, %v2757
  %v2759 = vrot.slane %v2455, 4
  %v2760 = vsel %vm2562, %v2757, %v2759
  %v2761 = vrot.slane %v2457, 4
  %v2762 = vsel %vm2562, %v2759, %v2761
  %v2763 = vrot.slane %v2459, 4
  %v2764 = vsel %vm2562, %v2761, %v2763
  %v2765 = vrot.slane %v2461, 4
  %v2766 = vsel %vm2562, %v2763, %v2765
  %v2767 = vrot.slane %v2463, 4
  %v2768 = vsel %vm2562, %v2765, %v2767
  %v2769 = vrot.slane %v2465, 4
  %v2770 = vsel %vm2562, %v2767, %v2769
  %v2771 = vrot.slane %v2467, 4
  %v2772 = vsel %vm2562, %v2769, %v2771
  %v2773 = vrot.slane %v2469, 4
  %v2774 = vsel %vm2562, %v2771, %v2773
  %v2775 = vrot.slane %v2471, 4
  %v2776 = vsel %vm2562, %v2773, %v2775
  %v2777 = vrot.slane %v2473, 4
  %v2778 = vsel %vm2562, %v2775, %v2777
  %v2779 = vrot.slane %v2475, 4
  %v2780 = vsel %vm2562, %v2777, %v2779
  %v2781 = vrot.slane %v2477, 4
  %v2782 = vsel %vm2562, %v2779, %v2781
  %v2783 = vrot.slane %v2479, 4
  %v2784 = vsel %vm2562, %v2781, %v2783
  %v2785 = vrot.slane %v2481, 4
  %v2786 = vsel %vm2562, %v2783, %v2785
  %v2787 = vrot.slane %v2483, 4
  %v2788 = vsel %vm2562, %v2785, %v2787
  %v2789 = vrot.slane %v2485, 4
  %v2790 = vsel %vm2562, %v2787, %v2789
  %v2791 = vrot.slane %v2487, 4
  %v2792 = vsel %vm2562, %v2789, %v2791
  %v2793 = vrot.slane %v2489, 4
  %v2794 = vsel %vm2562, %v2791, %v2793
  %v2795 = vrot.slane %v2491, 4
  %v2796 = vsel %vm2562, %v2793, %v2795
  %v2797 = vrot.slane %v2493, 4
  %v2798 = vsel %vm2562, %v2795, %v2797
  %v2799 = vrot.slane %v2495, 4
  %v2800 = vsel %vm2562, %v2797, %v2799
  %v2801 = vrot.slane %v2497, 4
  %v2802 = vsel %vm2562, %v2799, %v2801
  %v2803 = vrot.slane %v2499, 4
  %v2804 = vsel %vm2562, %v2801, %v2803
  %v2805 = vrot.slane %v2501, 4
  %v2806 = vsel %vm2562, %v2803, %v2805
  %v2807 = vrot.slane %v2503, 4
  %v2808 = vsel %vm2562, %v2805, %v2807
  %v2809 = vrot.slane %v2505, 4
  %v2810 = vsel %vm2562, %v2807, %v2809
  %v2811 = vrot.slane %v2507, 4
  %v2812 = vsel %vm2562, %v2809, %v2811
  %v2813 = vrot.slane %v2509, 4
  %v2814 = vsel %vm2562, %v2811, %v2813
  %v2815 = vrot.slane %v2511, 4
  %v2816 = vsel %vm2562, %v2813, %v2815
  %v2817 = vrot.slane %v2513, 4
  %v2818 = vsel %vm2562, %v2815, %v2817
  %v2819 = vrot.slane %v2515, 4
  %v2820 = vsel %vm2562, %v2817, %v2819
  %v2821 = vrot.slane %v2517, 4
  %v2822 = vsel %vm2562, %v2819, %v2821
  %v2823 = vrot.slane %v2519, 4
  %v2824 = vsel %vm2562, %v2821, %v2823
  %v2825 = vrot.slane %v2521, 4
  %v2826 = vsel %vm2562, %v2823, %v2825
  %v2827 = vrot.slane %v2523, 4
  %v2828 = vsel %vm2562, %v2825, %v2827
  %v2829 = vrot.slane %v2525, 4
  %v2830 = vsel %vm2562, %v2827, %v2829
  %v2831 = vrot.slane %v2527, 4
  %v2832 = vsel %vm2562, %v2829, %v2831
  %v2833 = vrot.slane %v2529, 4
  %v2834 = vsel %vm2562, %v2831, %v2833
  %v2835 = vrot.slane %v2531, 4
  %v2836 = vsel %vm2562, %v2833, %v2835
  %v2837 = vrot.slane %v2533, 4
  %v2838 = vsel %vm2562, %v2835, %v2837
  %v2839 = vrot.slane %v2535, 4
  %v2840 = vsel %vm2562, %v2837, %v2839
  %v2841 = vrot.slane %v2537, 4
  %v2842 = vsel %vm2562, %v2839, %v2841
  %v2843 = vrot.slane %v2539, 4
  %v2844 = vsel %vm2562, %v2841, %v2843
  %v2845 = vrot.slane %v2541, 4
  %v2846 = vsel %vm2562, %v2843, %v2845
  %v2847 = vrot.slane %v2543, 4
  %v2848 = vsel %vm2562, %v2845, %v2847
  %v2849 = vrot.slane %v2545, 4
  %v2850 = vsel %vm2562, %v2847, %v2849
  %v2851 = vrot.slane %v2547, 4
  %v2852 = vsel %vm2562, %v2849, %v2851
  %v2853 = vrot.slane %v2549, 4
  %v2854 = vsel %vm2562, %v2851, %v2853
  %v2855 = vsel %vm2562, %v2853, %v2563
  %v2951 = vsel %vm2562, %v2568, %v2668
  %v2952 = vadd.f32 %v2362, %v2565
  %v2953 = vadd.f32 %v2364, %v2567
  %v2954 = vadd.f32 %v2366, %v2569
  %v2955 = vadd.f32 %v2368, %v2951
  %v2956 = vadd.f32 %v2370, %v2670
  %v2957 = vadd.f32 %v2372, %v2672
  %v2958 = vadd.f32 %v2374, %v2674
  %v2959 = vadd.f32 %v2376, %v2676
  %v2960 = vadd.f32 %v2378, %v2678
  %v2961 = vadd.f32 %v2380, %v2680
  %v2962 = vadd.f32 %v2382, %v2682
  %v2963 = vadd.f32 %v2384, %v2684
  %v2964 = vadd.f32 %v2386, %v2686
  %v2965 = vadd.f32 %v2388, %v2688
  %v2966 = vadd.f32 %v2390, %v2690
  %v2967 = vadd.f32 %v2392, %v2692
  %v2968 = vadd.f32 %v2394, %v2694
  %v2969 = vadd.f32 %v2396, %v2696
  %v2970 = vadd.f32 %v2398, %v2698
  %v2971 = vadd.f32 %v2400, %v2700
  %v2972 = vadd.f32 %v2402, %v2702
  %v2973 = vadd.f32 %v2404, %v2704
  %v2974 = vadd.f32 %v2406, %v2706
  %v2975 = vadd.f32 %v2408, %v2708
  %v2976 = vadd.f32 %v2410, %v2710
  %v2977 = vadd.f32 %v2412, %v2712
  %v2978 = vadd.f32 %v2414, %v2714
  %v2979 = vadd.f32 %v2416, %v2716
  %v2980 = vadd.f32 %v2418, %v2718
  %v2981 = vadd.f32 %v2420, %v2720
  %v2982 = vadd.f32 %v2422, %v2722
  %v2983 = vadd.f32 %v2424, %v2724
  %v2984 = vadd.f32 %v2426, %v2726
  %v2985 = vadd.f32 %v2428, %v2728
  %v2986 = vadd.f32 %v2430, %v2730
  %v2987 = vadd.f32 %v2432, %v2732
  %v2988 = vadd.f32 %v2434, %v2734
  %v2989 = vadd.f32 %v2436, %v2736
  %v2990 = vadd.f32 %v2438, %v2738
  %v2991 = vadd.f32 %v2440, %v2740
  %v2992 = vadd.f32 %v2442, %v2742
  %v2993 = vadd.f32 %v2444, %v2744
  %v2994 = vadd.f32 %v2446, %v2746
  %v2995 = vadd.f32 %v2448, %v2748
  %v2996 = vadd.f32 %v2450, %v2750
  %v2997 = vadd.f32 %v2452, %v2752
  %v2998 = vadd.f32 %v2454, %v2754
  %v2999 = vadd.f32 %v2456, %v2756
  %v3000 = vadd.f32 %v2458, %v2758
  %v3001 = vadd.f32 %v2460, %v2760
  %v3002 = vadd.f32 %v2462, %v2762
  %v3003 = vadd.f32 %v2464, %v2764
  %v3004 = vadd.f32 %v2466, %v2766
  %v3005 = vadd.f32 %v2468, %v2768
  %v3006 = vadd.f32 %v2470, %v2770
  %v3007 = vadd.f32 %v2472, %v2772
  %v3008 = vadd.f32 %v2474, %v2774
  %v3009 = vadd.f32 %v2476, %v2776
  %v3010 = vadd.f32 %v2478, %v2778
  %v3011 = vadd.f32 %v2480, %v2780
  %v3012 = vadd.f32 %v2482, %v2782
  %v3013 = vadd.f32 %v2484, %v2784
  %v3014 = vadd.f32 %v2486, %v2786
  %v3015 = vadd.f32 %v2488, %v2788
  %v3016 = vadd.f32 %v2490, %v2790
  %v3017 = vadd.f32 %v2492, %v2792
  %v3018 = vadd.f32 %v2494, %v2794
  %v3019 = vadd.f32 %v2496, %v2796
  %v3020 = vadd.f32 %v2498, %v2798
  %v3021 = vadd.f32 %v2500, %v2800
  %v3022 = vadd.f32 %v2502, %v2802
  %v3023 = vadd.f32 %v2504, %v2804
  %v3024 = vadd.f32 %v2506, %v2806
  %v3025 = vadd.f32 %v2508, %v2808
  %v3026 = vadd.f32 %v2510, %v2810
  %v3027 = vadd.f32 %v2512, %v2812
  %v3028 = vadd.f32 %v2514, %v2814
  %v3029 = vadd.f32 %v2516, %v2816
  %v3030 = vadd.f32 %v2518, %v2818
  %v3031 = vadd.f32 %v2520, %v2820
  %v3032 = vadd.f32 %v2522, %v2822
  %v3033 = vadd.f32 %v2524, %v2824
  %v3034 = vadd.f32 %v2526, %v2826
  %v3035 = vadd.f32 %v2528, %v2828
  %v3036 = vadd.f32 %v2530, %v2830
  %v3037 = vadd.f32 %v2532, %v2832
  %v3038 = vadd.f32 %v2534, %v2834
  %v3039 = vadd.f32 %v2536, %v2836
  %v3040 = vadd.f32 %v2538, %v2838
  %v3041 = vadd.f32 %v2540, %v2840
  %v3042 = vadd.f32 %v2542, %v2842
  %v3043 = vadd.f32 %v2544, %v2844
  %v3044 = vadd.f32 %v2546, %v2846
  %v3045 = vadd.f32 %v2548, %v2848
  %v3046 = vadd.f32 %v2550, %v2850
  %v3047 = vadd.f32 %v2552, %v2852
  %v3048 = vadd.f32 %v2554, %v2854
  %v3049 = vadd.f32 %v2556, %v2855
  %3050 = vst [vmem:[%s2] sm:$0xff] %v2952
  %3051 = vst [vmem:[%s2 + $0x8] sm:$0xff] %v2953
  %3052 = vst [vmem:[%s2 + $0x10] sm:$0xff] %v2954
  %3053 = vst [vmem:[%s2 + $0x18] sm:$0xff] %v2955
  %3054 = vst [vmem:[%s2 + $0x20] sm:$0xff] %v2956
  %3055 = vst [vmem:[%s2 + $0x28] sm:$0xff] %v2957
  %3056 = vst [vmem:[%s2 + $0x30] sm:$0xff] %v2958
  %3057 = vst [vmem:[%s2 + $0x38] sm:$0xff] %v2959
  %3058 = vst [vmem:[%s2 + $0x40] sm:$0xff] %v2960
  %3059 = vst [vmem:[%s2 + $0x48] sm:$0xff] %v2961
  %3060 = vst [vmem:[%s2 + $0x50] sm:$0xff] %v2962
  %3061 = vst [vmem:[%s2 + $0x58] sm:$0xff] %v2963
  %3062 = vst [vmem:[%s2 + $0x60] sm:$0xff] %v2964
  %3063 = vst [vmem:[%s2 + $0x68] sm:$0xff] %v2965
  %3064 = vst [vmem:[%s2 + $0x70] sm:$0xff] %v2966
  %3065 = vst [vmem:[%s2 + $0x78] sm:$0xff] %v2967
  %3066 = vst [vmem:[%s2 + $0x80] sm:$0xff] %v2968
  %3067 = vst [vmem:[%s2 + $0x88] sm:$0xff] %v2969
  %3068 = vst [vmem:[%s2 + $0x90] sm:$0xff] %v2970
  %3069 = vst [vmem:[%s2 + $0x98] sm:$0xff] %v2971
  %3070 = vst [vmem:[%s2 + $0xa0] sm:$0xff] %v2972
  %3071 = vst [vmem:[%s2 + $0xa8] sm:$0xff] %v2973
  %3072 = vst [vmem:[%s2 + $0xb0] sm:$0xff] %v2974
  %3073 = vst [vmem:[%s2 + $0xb8] sm:$0xff] %v2975
  %3074 = vst [vmem:[%s2 + $0xc0] sm:$0xff] %v2976
  %3075 = vst [vmem:[%s2 + $0xc8] sm:$0xff] %v2977
  %3076 = vst [vmem:[%s2 + $0xd0] sm:$0xff] %v2978
  %3077 = vst [vmem:[%s2 + $0xd8] sm:$0xff] %v2979
  %3078 = vst [vmem:[%s2 + $0xe0] sm:$0xff] %v2980
  %3079 = vst [vmem:[%s2 + $0xe8] sm:$0xff] %v2981
  %3080 = vst [vmem:[%s2 + $0xf0] sm:$0xff] %v2982
  %3081 = vst [vmem:[%s2 + $0xf8] sm:$0xff] %v2983
  %3082 = vst [vmem:[%s2 + $0x100] sm:$0xff] %v2984
  %3083 = vst [vmem:[%s2 + $0x108] sm:$0xff] %v2985
  %3084 = vst [vmem:[%s2 + $0x110] sm:$0xff] %v2986
  %3085 = vst [vmem:[%s2 + $0x118] sm:$0xff] %v2987
  %3086 = vst [vmem:[%s2 + $0x120] sm:$0xff] %v2988
  %3087 = vst [vmem:[%s2 + $0x128] sm:$0xff] %v2989
  %3088 = vst [vmem:[%s2 + $0x130] sm:$0xff] %v2990
  %3089 = vst [vmem:[%s2 + $0x138] sm:$0xff] %v2991
  %3090 = vst [vmem:[%s2 + $0x140] sm:$0xff] %v2992
  %3091 = vst [vmem:[%s2 + $0x148] sm:$0xff] %v2993
  %3092 = vst [vmem:[%s2 + $0x150] sm:$0xff] %v2994
  %3093 = vst [vmem:[%s2 + $0x158] sm:$0xff] %v2995
  %3094 = vst [vmem:[%s2 + $0x160] sm:$0xff] %v2996
  %3095 = vst [vmem:[%s2 + $0x168] sm:$0xff] %v2997
  %3096 = vst [vmem:[%s2 + $0x170] sm:$0xff] %v2998
  %3097 = vst [vmem:[%s2 + $0x178] sm:$0xff] %v2999
  %3098 = vst [vmem:[%s2 + $0x180] sm:$0xff] %v3000
  %3099 = vst [vmem:[%s2 + $0x188] sm:$0xff] %v3001
  %3100 = vst [vmem:[%s2 + $0x190] sm:$0xff] %v3002
  %3101 = vst [vmem:[%s2 + $0x198] sm:$0xff] %v3003
  %3102 = vst [vmem:[%s2 + $0x1a0] sm:$0xff] %v3004
  %3103 = vst [vmem:[%s2 + $0x1a8] sm:$0xff] %v3005
  %3104 = vst [vmem:[%s2 + $0x1b0] sm:$0xff] %v3006
  %3105 = vst [vmem:[%s2 + $0x1b8] sm:$0xff] %v3007
  %3106 = vst [vmem:[%s2 + $0x1c0] sm:$0xff] %v3008
  %3107 = vst [vmem:[%s2 + $0x1c8] sm:$0xff] %v3009
  %3108 = vst [vmem:[%s2 + $0x1d0] sm:$0xff] %v3010
  %3109 = vst [vmem:[%s2 + $0x1d8] sm:$0xff] %v3011
  %3110 = vst [vmem:[%s2 + $0x1e0] sm:$0xff] %v3012
  %3111 = vst [vmem:[%s2 + $0x1e8] sm:$0xff] %v3013
  %3112 = vst [vmem:[%s2 + $0x1f0] sm:$0xff] %v3014
  %3113 = vst [vmem:[%s2 + $0x1f8] sm:$0xff] %v3015
  %3114 = vst [vmem:[%s2 + $0x200] sm:$0xff] %v3016
  %3115 = vst [vmem:[%s2 + $0x208] sm:$0xff] %v3017
  %3116 = vst [vmem:[%s2 + $0x210] sm:$0xff] %v3018
  %3117 = vst [vmem:[%s2 + $0x218] sm:$0xff] %v3019
  %3118 = vst [vmem:[%s2 + $0x220] sm:$0xff] %v3020
  %3119 = vst [vmem:[%s2 + $0x228] sm:$0xff] %v3021
  %3120 = vst [vmem:[%s2 + $0x230] sm:$0xff] %v3022
  %3121 = vst [vmem:[%s2 + $0x238] sm:$0xff] %v3023
  %3122 = vst [vmem:[%s2 + $0x240] sm:$0xff] %v3024
  %3123 = vst [vmem:[%s2 + $0x248] sm:$0xff] %v3025
  %3124 = vst [vmem:[%s2 + $0x250] sm:$0xff] %v3026
  %3125 = vst [vmem:[%s2 + $0x258] sm:$0xff] %v3027
  %3126 = vst [vmem:[%s2 + $0x260] sm:$0xff] %v3028
  %3127 = vst [vmem:[%s2 + $0x268] sm:$0xff] %v3029
  %3128 = vst [vmem:[%s2 + $0x270] sm:$0xff] %v3030
  %3129 = vst [vmem:[%s2 + $0x278] sm:$0xff] %v3031
  %3130 = vst [vmem:[%s2 + $0x280] sm:$0xff] %v3032
  %3131 = vst [vmem:[%s2 + $0x288] sm:$0xff] %v3033
  %3132 = vst [vmem:[%s2 + $0x290] sm:$0xff] %v3034
  %3133 = vst [vmem:[%s2 + $0x298] sm:$0xff] %v3035
  %3134 = vst [vmem:[%s2 + $0x2a0] sm:$0xff] %v3036
  %3135 = vst [vmem:[%s2 + $0x2a8] sm:$0xff] %v3037
  %3136 = vst [vmem:[%s2 + $0x2b0] sm:$0xff] %v3038
  %3137 = vst [vmem:[%s2 + $0x2b8] sm:$0xff] %v3039
  %3138 = vst [vmem:[%s2 + $0x2c0] sm:$0xff] %v3040
  %3139 = vst [vmem:[%s2 + $0x2c8] sm:$0xff] %v3041
  %3140 = vst [vmem:[%s2 + $0x2d0] sm:$0xff] %v3042
  %3141 = vst [vmem:[%s2 + $0x2d8] sm:$0xff] %v3043
  %3142 = vst [vmem:[%s2 + $0x2e0] sm:$0xff] %v3044
  %3143 = vst [vmem:[%s2 + $0x2e8] sm:$0xff] %v3045
  %3144 = vst [vmem:[%s2 + $0x2f0] sm:$0xff] %v3046
  %3145 = vst [vmem:[%s2 + $0x2f8] sm:$0xff] %v3047
  %3146 = vst [vmem:[%s2 + $0x300] sm:$0xff] %v3048
  %3147 = vst [vmem:[%s2 + $0x308] sm:$0xff] %v3049
  // Predicated region
  $region10: #{kernel_generated_2_forward.1} parent=0 // pred_check
    _
  $region11: #{kernel_generated_2_forward.1} parent=0 // pred_check_branch
    %3149 = sbr.rel (0) target = $region13
  $region12: #{kernel_generated_2_forward.1} parent=0 // pred_region
    _
  $region13: #{kernel_generated_2_forward.1} parent=0 // pred_fallthru
    _
  // Predicated region
  $region14: #{kernel_generated_2_forward.1} parent=0 // pred_check
    _
  $region15: #{kernel_generated_2_forward.1} parent=0 // pred_check_branch
    %3151 = sbr.rel (0) target = $region17
  $region16: #{kernel_generated_2_forward.1} parent=0 // pred_region
    _
  $region17: #{kernel_generated_2_forward.1} parent=0 // pred_fallthru
    _

</llo_original>
